<compile_context>
chip_gen: v5e
topology: v5e:2x2
jax: 0.10.0
libtpu: 0.0.40
codegen_flags: <defaults>
</compile_context>

<pallas_src>
import functools
import math

import jax
import jax.numpy as jnp
from jax.experimental import pallas as pl
from jax.experimental.pallas import tpu as pltpu

LEAK = 0.2
BN_EPS = 1e-5
BF16 = jnp.bfloat16


def _rup(x, m):
    return (x + m - 1) // m * m


# ---------------------------------------------------------------------------
# Pallas kernel: fused  act((X @ W) * scale + bias [+ res])
# act: "linear" | "leaky" | "relu" | "tanh" (tanh(leaky(x))) | "se"
# ---------------------------------------------------------------------------
def _mm_kernel(x_ref, w_ref, s_ref, b_ref, *rest, act, has_res):
    if has_res:
        r_ref, o_ref, acc_ref = rest
    else:
        o_ref, acc_ref = rest
        r_ref = None

    k = pl.program_id(2)

    @pl.when(k == 0)
    def _():
        acc_ref[...] = jnp.zeros_like(acc_ref)

    acc_ref[...] += jnp.dot(x_ref[...], w_ref[...],
                            preferred_element_type=jnp.float32)

    @pl.when(k == pl.num_programs(2) - 1)
    def _():
        z = acc_ref[...] * s_ref[...] + b_ref[...]
        if act == "leaky":
            y = jnp.where(z >= 0, z, LEAK * z)
        elif act == "relu":
            if has_res:
                z = z + r_ref[...]
            y = jnp.maximum(z, 0.0)
        elif act == "tanh":
            y = jnp.tanh(jnp.where(z >= 0, z, LEAK * z))
        elif act == "se":
            # LeakyReLU(conv) -> t ; out = LeakyReLU(t * sigmoid(t) + selection)
            t = jnp.where(z >= 0, z, LEAK * z)
            u = t * (1.0 / (1.0 + jnp.exp(-t))) + r_ref[...]
            y = jnp.where(u >= 0, u, LEAK * u)
        else:  # linear
            if has_res:
                z = z + r_ref[...]
            y = z
        o_ref[...] = y.astype(o_ref.dtype)


def _pick_tk(K):
    if K <= 8192:                    # single full-K block (no padding needed)
        return K
    for cand in (4096, 3456, 2048, 1024, 512, 256, 128):  # multiples of 128
        if K % cand == 0:
            return cand
    return 2048                      # fallback: caller pads K


def _fused_matmul(x, w, scale, bias, act, res=None):
    # x: (M, K) bf16, w: (K, N) bf16, scale/bias: (N,) f32, res: (M, N) f32/None
    M, K = x.shape
    N = w.shape[1]

    # ---- tile / pad selection -------------------------------------------
    Kp = max(K, 128)
    tk = _pick_tk(Kp)
    if Kp % tk:
        Kp = _rup(Kp, tk)

    Np = N if N >= 64 else 128
    if Np >= 256 and Np % 256 == 0:
        tn = 256
    elif Np >= 128:
        Np = _rup(Np, 128)
        tn = 128
    else:
        tn = Np                      # full minor dim (e.g. 64)

    if M <= 256:
        tm, Mp = M, M
    else:
        tm = 2048
        while tm > 256 and (tm > M or tm * tk * 2 > (4 << 20)
                            or tm * tn * 4 > (2 << 20)):
            tm //= 2
        Mp = _rup(M, tm)

    # ---- operand padding (no-ops for the shapes in this network) --------
    xp = x if (Mp == M and Kp == K) else jnp.pad(x, ((0, Mp - M), (0, Kp - K)))
    wp = w if (Kp == K and Np == N) else jnp.pad(w, ((0, Kp - K), (0, Np - N)))
    sp = (scale if Np == N else jnp.pad(scale, (0, Np - N))).reshape(1, Np)
    bp = (bias if Np == N else jnp.pad(bias, (0, Np - N))).reshape(1, Np)

    ins = [xp, wp, sp, bp]
    in_specs = [
        pl.BlockSpec((tm, tk), lambda i, j, k: (i, k)),
        pl.BlockSpec((tk, tn), lambda i, j, k: (k, j)),
        pl.BlockSpec((1, tn), lambda i, j, k: (0, j)),
        pl.BlockSpec((1, tn), lambda i, j, k: (0, j)),
    ]
    has_res = res is not None
    if has_res:
        rp = res.astype(jnp.float32)
        if Mp != M or Np != N:
            rp = jnp.pad(rp, ((0, Mp - M), (0, Np - N)))
        ins.append(rp)
        in_specs.append(pl.BlockSpec((tm, tn), lambda i, j, k: (i, j)))

    out = pl.pallas_call(
        functools.partial(_mm_kernel, act=act, has_res=has_res),
        out_shape=jax.ShapeDtypeStruct((Mp, Np), jnp.float32),
        grid_spec=pltpu.PrefetchScalarGridSpec(
            num_scalar_prefetch=0,
            grid=(Mp // tm, Np // tn, Kp // tk),
            in_specs=in_specs,
            out_specs=pl.BlockSpec((tm, tn), lambda i, j, k: (i, j)),
            scratch_shapes=[pltpu.VMEM((tm, tn), jnp.float32)],
        ),
        compiler_params=pltpu.CompilerParams(
            dimension_semantics=("parallel", "parallel", "arbitrary"),
            vmem_limit_bytes=40 * 1024 * 1024),
    )(*ins)

    if Mp != M or Np != N:
        out = out[:M, :N]
    return out


# ---------------------------------------------------------------------------
# Conv wrappers (im2col glue in JAX, fused matmul in Pallas)
# ---------------------------------------------------------------------------
@functools.partial(jax.jit, static_argnames=("stride", "padding", "act"))
def conv3d(x, w, scale, bias, res, stride, padding, act):
    # x: (N, D, H, W, Cin) f32;  w: (kd, kh, kw, Cin, Cout) bf16
    N, D, H, W, Cin = x.shape
    kd, kh, kw, _, Cout = w.shape
    xb = x.astype(BF16)
    if padding:
        xb = jnp.pad(xb, ((0, 0), (padding,) * 2, (padding,) * 2,
                          (padding,) * 2, (0, 0)))
    Dp, Hp, Wp = D + 2 * padding, H + 2 * padding, W + 2 * padding
    Do = (Dp - kd) // stride + 1
    Ho = (Hp - kh) // stride + 1
    Wo = (Wp - kw) // stride + 1
    if kd == kh == kw == 1 and stride == 1:
        Xm = xb.reshape(N * Do * Ho * Wo, Cin)
    else:
        cols = []
        for dz in range(kd):
            for dy in range(kh):
                for dx in range(kw):
                    cols.append(xb[:, dz:dz + (Do - 1) * stride + 1:stride,
                                   dy:dy + (Ho - 1) * stride + 1:stride,
                                   dx:dx + (Wo - 1) * stride + 1:stride, :])
        Xm = jnp.concatenate(cols, axis=-1).reshape(N * Do * Ho * Wo,
                                                    kd * kh * kw * Cin)
    Wm = w.reshape(kd * kh * kw * Cin, Cout)
    rm = None if res is None else res.reshape(N * Do * Ho * Wo, Cout)
    out = _fused_matmul(Xm, Wm, scale, bias, act, rm)
    return out.reshape(N, Do, Ho, Wo, Cout)


@jax.jit
def conv_transpose3d(x, phase_w, bias):
    # ConvTranspose3d(kernel=4, stride=2, padding=1) as 8 stride-phase
    # 2x2x2 sub-convolutions on the un-dilated input (no zero math).
    N, D, H, W, Cin = x.shape
    Cout = phase_w[0].shape[1]
    xb = jnp.pad(x.astype(BF16), ((0, 0), (1, 1), (1, 1), (1, 1), (0, 0)))
    ones = jnp.ones((Cout,), jnp.float32)
    out = jnp.zeros((N, 2 * D, 2 * H, 2 * W, Cout), jnp.float32)
    idx = 0
    for pd in (0, 1):
        for ph in (0, 1):
            for pw_ in (0, 1):
                cols = []
                for dd in (0, 1):
                    for dh in (0, 1):
                        for dw in (0, 1):
                            cols.append(xb[:, pd + dd:pd + dd + D,
                                           ph + dh:ph + dh + H,
                                           pw_ + dw:pw_ + dw + W, :])
                Xm = jnp.concatenate(cols, axis=-1).reshape(N * D * H * W,
                                                            8 * Cin)
                y = _fused_matmul(Xm, phase_w[idx], ones, bias, "linear")
                out = out.at[:, pd::2, ph::2, pw_::2, :].set(
                    y.reshape(N, D, H, W, Cout))
                idx += 1
    return out


@jax.jit
def maxpool3d(x):
    # MaxPool3d(kernel=3, stride=2, padding=1).  Pairwise fused max over the
    # 27 taps (review-recommended: no 27x-stacked intermediate in HBM).
    N, D, H, W, C = x.shape
    xp = jnp.pad(x, ((0, 0), (1, 1), (1, 1), (1, 1), (0, 0)),
                 constant_values=-jnp.inf)
    Do, Ho, Wo = (D - 1) // 2 + 1, (H - 1) // 2 + 1, (W - 1) // 2 + 1
    out = None
    for dz in range(3):
        for dy in range(3):
            for dx in range(3):
                s = xp[:, dz:dz + 2 * Do - 1:2, dy:dy + 2 * Ho - 1:2,
                       dx:dx + 2 * Wo - 1:2, :]
                out = s if out is None else jnp.maximum(out, s)
    return out


# ---------------------------------------------------------------------------
# Layer helpers
# ---------------------------------------------------------------------------
def apply_cb(x, p, stride=1, act="leaky", res=None):
    # ConvBlock = Conv3d(bias=False, pad=k//2) + BatchNorm3d + activation
    k = p['w'].shape[0]
    return conv3d(x, p['w'], p['s'], p['b'], res,
                  stride=stride, padding=k // 2, act=act)


def apply_bottleneck(x, p):
    out = apply_cb(x, p['c1'], 1, "relu")
    out = apply_cb(out, p['c2'], p['stride'], "relu")
    if 'ds' in p:
        sc = apply_cb(x, p['ds'], p['stride'], "linear")
    else:
        sc = x
    # conv3 + BN + residual add + ReLU fused into one Pallas epilogue
    return apply_cb(out, p['c3'], 1, "relu", res=sc)


# ---------------------------------------------------------------------------
# Parameters (deterministic synthetic init, weights stored in bf16)
# ---------------------------------------------------------------------------
def build_params(key):
    keys = iter(jax.random.split(key, 4096))

    def nk():
        return next(keys)

    def conv_w(cin, cout, k):
        fan = cin * k * k * k
        return (jax.random.normal(nk(), (k, k, k, cin, cout), BF16)
                * (fan ** -0.5)).astype(BF16)

    bn_scale = float(1.0 / math.sqrt(1.0 + BN_EPS))

    def cb(cin, cout, k):
        return {'w': conv_w(cin, cout, k),
                's': jnp.full((cout,), bn_scale, jnp.float32),
                'b': jnp.zeros((cout,), jnp.float32)}

    def bottleneck_p(cin, planes, stride):
        d = {'c1': cb(cin, planes, 1),
             'c2': cb(planes, planes, 3),
             'c3': cb(planes, planes * 4, 1),
             'stride': stride}
        if stride != 1 or cin != planes * 4:
            d['ds'] = cb(cin, planes * 4, 1)
        return d

    def layer_p(cin, planes, n, stride):
        blocks = [bottleneck_p(cin, planes, stride)]
        for _ in range(n - 1):
            blocks.append(bottleneck_p(planes * 4, planes, 1))
        return blocks

    def convtrans_phase_w(cin, cout):
        # PyTorch-layout ConvTranspose3d weight (Cin, Cout, 4, 4, 4) mapped to
        # 8 stride-phase matmul weights of shape (8*Cin, Cout).
        fan = cin * 64
        wt = (jax.random.normal(nk(), (cin, cout, 4, 4, 4), BF16)
              * (fan ** -0.5))

        def tap(parity, delta):
            return (3 - 2 * delta) if parity == 0 else (2 - 2 * delta)

        phases = []
        for pd in (0, 1):
            for ph in (0, 1):
                for pw_ in (0, 1):
                    mats = []
                    for dd in (0, 1):
                        for dh in (0, 1):
                            for dw in (0, 1):
                                mats.append(wt[:, :, tap(pd, dd),
                                               tap(ph, dh), tap(pw_, dw)])
                    phases.append(
                        jnp.concatenate(mats, axis=0).astype(BF16))
        return tuple(phases)

    def upblock_p(fin, fout, fconcat=None):
        if fconcat is None:
            fconcat = fout * 2
        return {'pw': convtrans_phase_w(fin, fout),
                'tb': jnp.zeros((fout,), jnp.float32),
                'ca': [cb(fout, fout, 3), cb(fout, fout, 3)],
                'c1': cb(fconcat, fout, 3),
                'c2': cb(fout, fout, 3)}

    def se_p(f):
        return {'sel': cb(2 * f, f, 1), 'ref': [cb(f, f, 3), cb(f, f, 3)]}

    P = {}
    P['inp_conv'] = cb(1, 64, 3)         # ConvBlock(1, 64, 3, 1)
    P['input_blocks'] = cb(1, 64, 3)     # ConvBlock(1, 64, 3, 2)
    P['layer1'] = layer_p(64, 64, 3, 1)
    P['layer2'] = layer_p(256, 128, 4, 2)
    P['layer3'] = layer_p(512, 256, 6, 2)
    P['layer4'] = layer_p(1024, 512, 3, 2)
    P['bneck'] = [cb(2048, 2048, 3), cb(2048, 2048, 3)]
    P['up1'] = upblock_p(2048, 1024)
    P['up2'] = upblock_p(1024, 512)
    P['up3'] = upblock_p(512, 256)
    P['up4'] = upblock_p(256, 128, 128 + 64)
    P['up5'] = upblock_p(128, 64, 128)
    P['se'] = [se_p(f) for f in (2048, 1024, 512, 256, 64, 64)]
    P['final'] = cb(64, 1, 1)
    return P


# ---------------------------------------------------------------------------
# Forward pass
# ---------------------------------------------------------------------------
def down_stream(x, P):
    # x: (2, S, S, S, 1) -- both encoder inputs batched into one pass.
    inp_feat = apply_cb(x, P['inp_conv'], 1)
    d1 = apply_cb(x, P['input_blocks'], 2)
    h = d1
    for b in P['layer1']:
        h = apply_bottleneck(h, b)
    d2 = maxpool3d(h)
    h = d2
    for b in P['layer2']:
        h = apply_bottleneck(h, b)
    d3 = h
    for b in P['layer3']:
        h = apply_bottleneck(h, b)
    d4 = h
    for b in P['layer4']:
        h = apply_bottleneck(h, b)
    d5 = apply_cb(h, P['bneck'][0], 1)
    d5 = apply_cb(d5, P['bneck'][1], 1)
    return d5, d4, d3, d2, d1, inp_feat


def se_block(feat, p):
    # feat holds both encoder streams in the batch dim -> channel concat.
    d = jnp.concatenate([feat[0:1], feat[1:2]], axis=-1)
    sel = apply_cb(d, p['sel'], 1)
    ref = apply_cb(sel, p['ref'][0], 1)
    # second refinement conv fused with sigmoid gate + residual + LeakyReLU
    return apply_cb(ref, p['ref'][1], 1, act="se", res=sel)


def upblock(x1, x2, p):
    x1 = conv_transpose3d(x1, p['pw'], p['tb'])
    x1 = apply_cb(x1, p['ca'][0], 1)
    x1 = apply_cb(x1, p['ca'][1], 1)
    ct = jnp.concatenate([x1, x2], axis=-1)
    ct = apply_cb(ct, p['c1'], 1)
    return apply_cb(ct, p['c2'], 1)


def unet3d_forward(inp1_ncdhw, inp2_ncdhw, P):
    inp = jnp.concatenate([inp1_ncdhw, inp2_ncdhw], axis=0)   # batch encoders
    x = jnp.transpose(inp, (0, 2, 3, 4, 1))
    a5, a4, a3, a2, a1, af = down_stream(x, P)
    d5 = se_block(a5, P['se'][0])
    d4 = se_block(a4, P['se'][1])
    d3 = se_block(a3, P['se'][2])
    d2 = se_block(a2, P['se'][3])
    d1 = se_block(a1, P['se'][4])
    df = se_block(af, P['se'][5])
    u1 = upblock(d5, d4, P['up1'])
    u2 = upblock(u1, d3, P['up2'])
    u3 = upblock(u2, d2, P['up3'])
    u4 = upblock(u3, d1, P['up4'])
    u5 = upblock(u4, df, P['up5'])
    out = apply_cb(u5, P['final'], 1, act="tanh")   # ConvBlock(64,1,1,1)+Tanh
    return jnp.transpose(out, (0, 4, 1, 2, 3))


if __name__ == "__main__":
    root = jax.random.PRNGKey(0)
    kp, k1, k2 = jax.random.split(root, 3)
    params = build_params(kp)

    S = 32  # smallest spatial size compatible with 5 levels of /2 downsampling
    inp1 = jax.random.normal(k1, (1, 1, S, S, S), jnp.float32)
    inp2 = jax.random.normal(k2, (1, 1, S, S, S), jnp.float32)

    out = unet3d_forward(inp1, inp2, params)
    out = jax.block_until_ready(out)
    assert out.shape == (1, 1, S, S, S)
    assert bool(jnp.isfinite(out).all())
    print("KERNEL_OK")
</pallas_src>

<mosaic_0001>
module attributes {stable_mosaic.version = 11 : i64} {
  func.func @_mm_kernel(%arg0: i32, %arg1: i32, %arg2: i32, %arg3: memref<2048x128xbf16, #tpu.memory_space<vmem>>, %arg4: memref<128x64xbf16, #tpu.memory_space<vmem>>, %arg5: memref<1x64xf32, #tpu.memory_space<vmem>>, %arg6: memref<1x64xf32, #tpu.memory_space<vmem>>, %arg7: memref<2048x64xf32, #tpu.memory_space<vmem>>, %arg8: memref<2048x64xf32, #tpu.memory_space<vmem>>) attributes {dimension_semantics = [#tpu.dimension_semantics<parallel>, #tpu.dimension_semantics<parallel>, #tpu.dimension_semantics<arbitrary>], iteration_bounds = array<i64: 32, 1, 1>, scalar_prefetch = 0 : i64, scratch_operands = 1 : i64, tpu.core_type = #tpu.core_type<tc>, window_params = [{transform_indices = @transform_0, window_bounds = array<i64: 2048, 128>}, {transform_indices = @transform_1, window_bounds = array<i64: 128, 64>}, {transform_indices = @transform_2, window_bounds = array<i64: 1, 64>}, {transform_indices = @transform_3, window_bounds = array<i64: 1, 64>}, {transform_indices = @transform_4, window_bounds = array<i64: 2048, 64>}]} {
    %c0_i32 = arith.constant 0 : i32
    %0 = arith.cmpi eq, %arg2, %c0_i32 : i32
    %1 = arith.extui %0 : i1 to i32
    %c0_i32_0 = arith.constant 0 : i32
    %2 = arith.cmpi ne, %1, %c0_i32_0 : i32
    scf.if %2 {
      %cst_10 = arith.constant 0.000000e+00 : f32
      %12 = vector.broadcast %cst_10 : f32 to vector<2048x64xf32>
      %c0_11 = arith.constant 0 : index
      %c0_12 = arith.constant 0 : index
      %13 = vector.load %arg8[%c0_11, %c0_12] : memref<2048x64xf32, #tpu.memory_space<vmem>>, vector<2048x64xf32>
      tpu.vector_store %arg8[%c0_11, %c0_12], %12 {strides = array<i32>} : memref<2048x64xf32, #tpu.memory_space<vmem>>, vector<2048x64xf32>,
    } else {
    }
    %c0 = arith.constant 0 : index
    %c0_1 = arith.constant 0 : index
    %3 = vector.load %arg8[%c0, %c0_1] : memref<2048x64xf32, #tpu.memory_space<vmem>>, vector<2048x64xf32>
    %c0_2 = arith.constant 0 : index
    %c0_3 = arith.constant 0 : index
    %4 = vector.load %arg3[%c0_2, %c0_3] : memref<2048x128xbf16, #tpu.memory_space<vmem>>, vector<2048x128xbf16>
    %c0_4 = arith.constant 0 : index
    %c0_5 = arith.constant 0 : index
    %5 = vector.load %arg4[%c0_4, %c0_5] : memref<128x64xbf16, #tpu.memory_space<vmem>>, vector<128x64xbf16>
    %cst = arith.constant dense<0.000000e+00> : vector<2048x64xf32>
    %6 = tpu.matmul %4, %5, %cst {dimension_numbers = #tpu.dot_dimension_numbers<[1], [0], [0], [1], [0, 0, 1, 1], [], []>} : vector<2048x128xbf16>, vector<128x64xbf16>, vector<2048x64xf32> -> vector<2048x64xf32>
    %7 = arith.addf %3, %6 : vector<2048x64xf32>
    %c0_6 = arith.constant 0 : index
    %c0_7 = arith.constant 0 : index
    %8 = vector.load %arg8[%c0_6, %c0_7] : memref<2048x64xf32, #tpu.memory_space<vmem>>, vector<2048x64xf32>
    tpu.vector_store %arg8[%c0_6, %c0_7], %7 {strides = array<i32>} : memref<2048x64xf32, #tpu.memory_space<vmem>>, vector<2048x64xf32>,
    %c0_i32_8 = arith.constant 0 : i32
    %9 = arith.cmpi eq, %arg2, %c0_i32_8 : i32
    %10 = arith.extui %9 : i1 to i32
    %c0_i32_9 = arith.constant 0 : i32
    %11 = arith.cmpi ne, %10, %c0_i32_9 : i32
    scf.if %11 {
      %c0_10 = arith.constant 0 : index
      %c0_11 = arith.constant 0 : index
      %12 = vector.load %arg8[%c0_10, %c0_11] : memref<2048x64xf32, #tpu.memory_space<vmem>>, vector<2048x64xf32>
      %c0_12 = arith.constant 0 : index
      %c0_13 = arith.constant 0 : index
      %13 = vector.load %arg5[%c0_12, %c0_13] : memref<1x64xf32, #tpu.memory_space<vmem>>, vector<1x64xf32>
      %14 = vector.broadcast %13 : vector<1x64xf32> to vector<2048x64xf32>
      %15 = arith.mulf %12, %14 : vector<2048x64xf32>
      %c0_14 = arith.constant 0 : index
      %c0_15 = arith.constant 0 : index
      %16 = vector.load %arg6[%c0_14, %c0_15] : memref<1x64xf32, #tpu.memory_space<vmem>>, vector<1x64xf32>
      %17 = vector.broadcast %16 : vector<1x64xf32> to vector<2048x64xf32>
      %18 = arith.addf %15, %17 : vector<2048x64xf32>
      %cst_16 = arith.constant 0.000000e+00 : f32
      %19 = vector.broadcast %cst_16 : f32 to vector<2048x64xf32>
      %20 = arith.cmpf oge, %18, %19 : vector<2048x64xf32>
      %cst_17 = arith.constant 2.000000e-01 : f32
      %21 = vector.broadcast %cst_17 : f32 to vector<2048x64xf32>
      %22 = arith.mulf %21, %18 : vector<2048x64xf32>
      %23 = arith.select %20, %18, %22 : vector<2048x64xi1>, vector<2048x64xf32>
      %c0_18 = arith.constant 0 : index
      %c0_19 = arith.constant 0 : index
      %24 = vector.load %arg7[%c0_18, %c0_19] : memref<2048x64xf32, #tpu.memory_space<vmem>>, vector<2048x64xf32>
      tpu.vector_store %arg7[%c0_18, %c0_19], %23 {strides = array<i32>} : memref<2048x64xf32, #tpu.memory_space<vmem>>, vector<2048x64xf32>,
    } else {
    }
    return
  }
  func.func @transform_0(%arg0: i32, %arg1: i32, %arg2: i32) -> (i32, i32) {
    %c0_i32 = arith.constant 0 : i32
    return %arg0, %arg2 : i32, i32
  }
  func.func @transform_1(%arg0: i32, %arg1: i32, %arg2: i32) -> (i32, i32) {
    %c0_i32 = arith.constant 0 : i32
    return %arg2, %arg1 : i32, i32
  }
  func.func @transform_2(%arg0: i32, %arg1: i32, %arg2: i32) -> (i32, i32) {
    %c0_i32 = arith.constant 0 : i32
    %c0_i32_0 = arith.constant 0 : i32
    return %c0_i32, %arg1 : i32, i32
  }
  func.func @transform_3(%arg0: i32, %arg1: i32, %arg2: i32) -> (i32, i32) {
    %c0_i32 = arith.constant 0 : i32
    %c0_i32_0 = arith.constant 0 : i32
    return %c0_i32, %arg1 : i32, i32
  }
  func.func @transform_4(%arg0: i32, %arg1: i32, %arg2: i32) -> (i32, i32) {
    %c0_i32 = arith.constant 0 : i32
    return %arg0, %arg1 : i32, i32
  }
}

</mosaic_0001>

<llo_original>
// kernel: conv3d.1
$region0: #{conv3d.1}
  #allocation0 [shape = 'u32[]', space=smem, size = 0x4, offset = 0x4, fixed_abs, tag = 'smem constant byte address 0x4 - core index']
  #allocation1 [shape = 'u32[72,128]{1,0:T(1,128)}', space=vmem, size = 0x9000, scoped, tag = 'internal scratch']
  #allocation2 [shape = 'f32[2048,64]{1,0:T(8,128)}', space=vmem, size = 0x100000, scoped, tag = 'scratch operand']
  %s0 = inlined_call_operand.vmem [shape: bf16[65536,128], index: 0, kind: input, shape index: {}]
  %s1 = inlined_call_operand.vmem [shape: bf16[128,64], index: 1, kind: input, shape index: {}]
  %s2 = inlined_call_operand.vmem [shape: f32[1,64], index: 2, kind: input, shape index: {}]
  %s3 = inlined_call_operand.vmem [shape: f32[1,64], index: 3, kind: input, shape index: {}]
  %s4 = inlined_call_operand.hbm [shape: f32[65536,64], index: 4, kind: output, shape index: {}]
  %s5 = sld [smem:[#allocation0]]
  $region57: #{conv3d.1} parent=0
    _
  %s7 = ssub.s32 1, %s5
  %s8 = scalar_select 0, %s7, %s5
  $region1: #{conv3d.1} parent=0
    #allocation3 [shape = 'u8[2097152]{0}', space=vmem, size = 0x200000, scoped, tag = 'output window, operand 0']
    #allocation4 [shape = 's32[2]{0}', space=sflag, size = 0x8, scoped, tag = 'scoped memory for conv3d.1']
    %9 = vsyncpa [#allocation4], 0
    %s10 = scalar_lea.sflag [#allocation4], 1
    %11 = vsyncpa %s10, 0
    loop: start=0, step=1, limit=34
    $region2: #{conv3d.1} parent=1 // loop_pre_header
      _
    $region3: #{conv3d.1} parent=1 // loop_header
      %s13 = sphi 0, %s17
      %p14 = scmp.ge.s32.totalorder %s13, 34
      %s20 = sphi 0, %s39
      %s21 = sphi 0, %s35
      %s22 = sphi 0, %s31
      %s23 = sphi 0, %s20
      %s24 = sphi 0, %s21
      %s25 = sphi 0, %s22
      %s26 = sphi 0, %s23
      %s27 = sphi 0, %s24
      %s28 = sphi 0, %s25
      %s44 = sphi 0, %s46
      %s47 = sphi 0, %s44
      %s48 = sphi 0, %s47
      %s64 = sphi 0, %s48
      %s72 = sphi 0, %s74
      %s75 = sphi 0, %s72
      %s76 = sphi 0, %s75
      %s92 = sphi 0, %s76
      %s98 = sphi 0, %s100
      %s101 = sphi 0, %s98
      %s102 = sphi 0, %s101
      %s118 = sphi 0, %s102
      %s124 = sphi 0, %s126
      %s127 = sphi 0, %s124
      %s128 = sphi 0, %s127
      %s144 = sphi 0, %s128
      %s152 = sphi 0, %s154
      %s155 = sphi 0, %s152
      %s156 = sphi 0, %s155
      %s172 = sphi 0, %s156
    $region4: #{conv3d.1} parent=1 // loop_header_branch
      %16 = sbr.rel (%p14) target = $region8
    $region5: #{conv3d.1} parent=1 // loop_body
      %s18 = ssub.s32 %s13, 1
      %s19 = ssub.s32 %s13, 2
      %s29 = sadd.s32 1, %s22
      %p30 = scmp.ge.s32.totalorder %s29, 1
      %s31 = scalar_select %p30, 0, %s29
      %s32 = sadd.s32 1, %s21
      %s33 = scalar_select %p30, %s32, %s21
      %p34 = scmp.ge.s32.totalorder %s33, 1
      %s35 = scalar_select %p34, 0, %s33
      %s36 = sadd.s32 1, %s20
      %s37 = scalar_select %p34, %s36, %s20
      %p38 = scmp.ge.s32.totalorder %s37, 32
      %s39 = scalar_select %p38, 0, %s37
      %s40 = ssub.s32 %s20, %s39
      %s41 = ssub.s32 %s22, %s31
      %s42 = sor.u32 %s40, %s41
      %p43 = scmp.eq.s32.totalorder %s42, 0
      %s45 = sadd.s32 %s44, 1
      %s46 = scalar_select %p43, %s44, %s45
      %p49 = pneg %p43
      %p50 = scmp.eq.s32.totalorder %s13, 31
      %p51 = por %p49, %p50
      %p52 = scmp.ne.s32.totalorder %s44, %s47
      %p53 = scmp.eq.s32.totalorder %s13, 0
      %p54 = por %p52, %p53
      %p55 = scmp.ne.s32.totalorder %s44, %s47
      %p56 = scmp.eq.s32.totalorder %s18, 31
      %p57 = por %p55, %p56
      %p58 = scmp.ne.s32.totalorder %s47, %s48
      %p59 = scmp.eq.s32.totalorder %s18, 0
      %p60 = por %p58, %p59
      %p61 = scmp.ne.s32.totalorder %s47, %s48
      %p62 = scmp.eq.s32.totalorder %s19, 31
      %p63 = por %p61, %p62
      %p65 = scmp.ne.s32.totalorder %s48, %s64
      %p66 = scmp.eq.s32.totalorder %s19, 0
      %p67 = por %p65, %p66
      %s68 = ssub.s32 %s22, %s31
      %s69 = ssub.s32 %s21, %s35
      %s70 = sor.u32 %s68, %s69
      %p71 = scmp.eq.s32.totalorder %s70, 0
      %s73 = sadd.s32 %s72, 1
      %s74 = scalar_select %p71, %s72, %s73
      %p77 = pneg %p71
      %p78 = scmp.eq.s32.totalorder %s13, 31
      %p79 = por %p77, %p78
      %p80 = scmp.ne.s32.totalorder %s72, %s75
      %p81 = scmp.eq.s32.totalorder %s13, 0
      %p82 = por %p80, %p81
      %p83 = scmp.ne.s32.totalorder %s72, %s75
      %p84 = scmp.eq.s32.totalorder %s18, 31
      %p85 = por %p83, %p84
      %p86 = scmp.ne.s32.totalorder %s75, %s76
      %p87 = scmp.eq.s32.totalorder %s18, 0
      %p88 = por %p86, %p87
      %p89 = scmp.ne.s32.totalorder %s75, %s76
      %p90 = scmp.eq.s32.totalorder %s19, 31
      %p91 = por %p89, %p90
      %p93 = scmp.ne.s32.totalorder %s76, %s92
      %p94 = scmp.eq.s32.totalorder %s19, 0
      %p95 = por %p93, %p94
      %s96 = ssub.s32 %s21, %s35
      %p97 = scmp.eq.s32.totalorder %s96, 0
      %s99 = sadd.s32 %s98, 1
      %s100 = scalar_select %p97, %s98, %s99
      %p103 = pneg %p97
      %p104 = scmp.eq.s32.totalorder %s13, 31
      %p105 = por %p103, %p104
      %p106 = scmp.ne.s32.totalorder %s98, %s101
      %p107 = scmp.eq.s32.totalorder %s13, 0
      %p108 = por %p106, %p107
      %p109 = scmp.ne.s32.totalorder %s98, %s101
      %p110 = scmp.eq.s32.totalorder %s18, 31
      %p111 = por %p109, %p110
      %p112 = scmp.ne.s32.totalorder %s101, %s102
      %p113 = scmp.eq.s32.totalorder %s18, 0
      %p114 = por %p112, %p113
      %p115 = scmp.ne.s32.totalorder %s101, %s102
      %p116 = scmp.eq.s32.totalorder %s19, 31
      %p117 = por %p115, %p116
      %p119 = scmp.ne.s32.totalorder %s102, %s118
      %p120 = scmp.eq.s32.totalorder %s19, 0
      %p121 = por %p119, %p120
      %s122 = ssub.s32 %s21, %s35
      %p123 = scmp.eq.s32.totalorder %s122, 0
      %s125 = sadd.s32 %s124, 1
      %s126 = scalar_select %p123, %s124, %s125
      %p129 = pneg %p123
      %p130 = scmp.eq.s32.totalorder %s13, 31
      %p131 = por %p129, %p130
      %p132 = scmp.ne.s32.totalorder %s124, %s127
      %p133 = scmp.eq.s32.totalorder %s13, 0
      %p134 = por %p132, %p133
      %p135 = scmp.ne.s32.totalorder %s124, %s127
      %p136 = scmp.eq.s32.totalorder %s18, 31
      %p137 = por %p135, %p136
      %p138 = scmp.ne.s32.totalorder %s127, %s128
      %p139 = scmp.eq.s32.totalorder %s18, 0
      %p140 = por %p138, %p139
      %p141 = scmp.ne.s32.totalorder %s127, %s128
      %p142 = scmp.eq.s32.totalorder %s19, 31
      %p143 = por %p141, %p142
      %p145 = scmp.ne.s32.totalorder %s128, %s144
      %p146 = scmp.eq.s32.totalorder %s19, 0
      %p147 = por %p145, %p146
      %s148 = ssub.s32 %s20, %s39
      %s149 = ssub.s32 %s21, %s35
      %s150 = sor.u32 %s148, %s149
      %p151 = scmp.eq.s32.totalorder %s150, 0
      %s153 = sadd.s32 %s152, 1
      %s154 = scalar_select %p151, %s152, %s153
      %p157 = pneg %p151
      %p158 = scmp.eq.s32.totalorder %s13, 31
      %p159 = por %p157, %p158
      %p160 = scmp.ne.s32.totalorder %s152, %s155
      %p161 = scmp.eq.s32.totalorder %s13, 0
      %p162 = por %p160, %p161
      %p163 = scmp.ne.s32.totalorder %s152, %s155
      %p164 = scmp.eq.s32.totalorder %s18, 31
      %p165 = por %p163, %p164
      %p166 = scmp.ne.s32.totalorder %s155, %s156
      %p167 = scmp.eq.s32.totalorder %s18, 0
      %p168 = por %p166, %p167
      %p169 = scmp.ne.s32.totalorder %s155, %s156
      %p170 = scmp.eq.s32.totalorder %s19, 31
      %p171 = por %p169, %p170
      %p173 = scmp.ne.s32.totalorder %s156, %s172
      %p174 = scmp.eq.s32.totalorder %s19, 0
      %p175 = por %p173, %p174
      %p176 = scmp.le.s32.totalorder 1, %s13
      %p177 = scmp.lt.s32.totalorder %s13, 33
      %p178 = pnand %p176, %p177
      %p179 = pneg %p178
      // Predicated region
      $region9: #{conv3d.1} parent=5 // pred_check
        _
      $region10: #{conv3d.1} parent=5 // pred_check_branch
        %181 = sbr.rel (%p178) target = $region12
      $region11: #{conv3d.1} parent=5 // pred_region
        %s182 = ssub.s32 %s13, 1
        // Predicated region
        $region13: #{conv3d.1} parent=11 // pred_check
          %p183 = pneg %p88
        $region14: #{conv3d.1} parent=11 // pred_check_branch
          %185 = sbr.rel (%p183) target = $region16
        $region15: #{conv3d.1} parent=11 // pred_region
          %s186 = smul.u32 16, %s25
          %p187 = scmp.lt.s32.totalorder %s186, 15
          %s188 = scalar_select %p187, %s186, 15
          %p189 = scmp.lt.s32.totalorder %s24, 0
          %s190 = scalar_select %p189, %s24, 0
          %s191 = sadd.s32 %s190, %s188
          %s192 = smul.addr %s191, 4
          %s193 = scalar_lea.vmem %s1, %s192
          %s194 = smul.u32 16, %s25
        $region16: #{conv3d.1} parent=11 // pred_fallthru
          _
        // Predicated region
        $region17: #{conv3d.1} parent=11 // pred_check
          %p195 = pneg %p114
        $region18: #{conv3d.1} parent=11 // pred_check_branch
          %197 = sbr.rel (%p195) target = $region20
        $region19: #{conv3d.1} parent=11 // pred_region
          %p198 = scmp.lt.s32.totalorder %s24, 0
          %s199 = scalar_select %p198, %s24, 0
          %s200 = scalar_lea.vmem %s2, %s199
        $region20: #{conv3d.1} parent=11 // pred_fallthru
          _
        // Predicated region
        $region21: #{conv3d.1} parent=11 // pred_check
          %p201 = pneg %p140
        $region22: #{conv3d.1} parent=11 // pred_check_branch
          %203 = sbr.rel (%p201) target = $region24
        $region23: #{conv3d.1} parent=11 // pred_region
          %p204 = scmp.lt.s32.totalorder %s24, 0
          %s205 = scalar_select %p204, %s24, 0
          %s206 = scalar_lea.vmem %s3, %s205
        $region24: #{conv3d.1} parent=11 // pred_fallthru
          _
      $region12: #{conv3d.1} parent=5 // pred_fallthru
        _
      %p207 = scmp.lt.s32.totalorder %s13, 32
      // Predicated region
      $region25: #{conv3d.1} parent=5 // pred_check
        %p208 = pneg %p207
      $region26: #{conv3d.1} parent=5 // pred_check_branch
        %210 = sbr.rel (%p208) target = $region28
      $region27: #{conv3d.1} parent=5 // pred_region
        // Predicated region
        $region29: #{conv3d.1} parent=27 // pred_check
          %p211 = pneg %p54
        $region30: #{conv3d.1} parent=27 // pred_check_branch
          %213 = sbr.rel (%p211) target = $region32
        $region31: #{conv3d.1} parent=27 // pred_region
          %s214 = smul.u32 256, %s20
          %p215 = scmp.lt.s32.totalorder %s214, 8191
          %s216 = scalar_select %p215, %s214, 8191
          %p217 = scmp.lt.s32.totalorder %s22, 0
          %s218 = scalar_select %p217, %s22, 0
          %s219 = sadd.s32 %s218, %s216
          %s220 = smul.addr %s219, 4
          %s221 = scalar_lea.vmem %s0, %s220
          %s222 = smul.u32 256, %s20
        $region32: #{conv3d.1} parent=27 // pred_fallthru
          _
      $region28: #{conv3d.1} parent=5 // pred_fallthru
        _
      %p223 = scmp.le.s32.totalorder 1, %s13
      %p224 = scmp.lt.s32.totalorder %s13, 33
      %p225 = pnand %p223, %p224
      %p226 = pneg %p225
      // Predicated region
      $region33: #{conv3d.1} parent=5 // pred_check
        _
      $region34: #{conv3d.1} parent=5 // pred_check_branch
        %228 = sbr.rel (%p225) target = $region36
      $region35: #{conv3d.1} parent=5 // pred_region
        %s229 = ssub.s32 %s13, 1
        %s230 = smul.u32 256, %s23
        %p231 = scmp.lt.s32.totalorder %s230, 8191
        %s232 = scalar_select %p231, %s230, 8191
        %p233 = scmp.lt.s32.totalorder %s25, 0
        %s234 = scalar_select %p233, %s25, 0
        %s235 = sadd.s32 %s234, %s232
        %s236 = smul.addr %s235, 4
        %s237 = scalar_lea.vmem %s0, %s236
        %p238 = pneg %p60
        %p239 = pneg %p57
        %s240 = smul.u32 16, %s25
        %p241 = scmp.lt.s32.totalorder %s240, 15
        %s242 = scalar_select %p241, %s240, 15
        %p243 = scmp.lt.s32.totalorder %s24, 0
        %s244 = scalar_select %p243, %s24, 0
        %s245 = sadd.s32 %s244, %s242
        %s246 = smul.addr %s245, 4
        %s247 = scalar_lea.vmem %s1, %s246
        %p248 = pneg %p88
        %p249 = pneg %p85
        %p250 = scmp.lt.s32.totalorder %s24, 0
        %s251 = scalar_select %p250, %s24, 0
        %s252 = scalar_lea.vmem %s2, %s251
        %p253 = pneg %p114
        %p254 = pneg %p111
        %p255 = scmp.lt.s32.totalorder %s24, 0
        %s256 = scalar_select %p255, %s24, 0
        %s257 = scalar_lea.vmem %s3, %s256
        %p258 = pneg %p140
        %p259 = pneg %p137
        %p260 = pneg %p168
        %p261 = pneg %p165
        %s262 = sand.u32 %s155, 1
        %s263 = scalar_lea.sflag [#allocation4], %s262
        %s264 = sand.u32 %s155, 1
        %s265 = smul.addr %s264, 2048
        %s266 = scalar_lea.vmem [#allocation3], %s265
        %s267 = smul.u32 256, %s23
        %p268 = scmp.lt.s32.totalorder %s267, 8191
        %s269 = scalar_select %p268, %s267, 8191
        %p270 = scmp.lt.s32.totalorder %s25, 0
        %s271 = scalar_select %p270, %s25, 0
        %s272 = sadd.s32 %s271, %s269
        %s273 = smul.addr %s272, 4
        %s274 = scalar_lea.vmem %s0, %s273
        %s275 = smul.u32 256, %s23
        %s276 = smul.u32 16, %s25
        %p277 = scmp.lt.s32.totalorder %s276, 15
        %s278 = scalar_select %p277, %s276, 15
        %p279 = scmp.lt.s32.totalorder %s24, 0
        %s280 = scalar_select %p279, %s24, 0
        %s281 = sadd.s32 %s280, %s278
        %s282 = smul.addr %s281, 4
        %s283 = scalar_lea.vmem %s1, %s282
        %s284 = smul.u32 16, %s25
        %p285 = scmp.lt.s32.totalorder %s24, 0
        %s286 = scalar_select %p285, %s24, 0
        %s287 = scalar_lea.vmem %s2, %s286
        %p288 = scmp.lt.s32.totalorder %s24, 0
        %s289 = scalar_select %p288, %s24, 0
        %s290 = scalar_lea.vmem %s3, %s289
        %s291 = smul.u32 256, %s23
        %p292 = scmp.eq.s32.totalorder %s25, 0
        // Predicated region
        $region37: #{conv3d.1} parent=35 // pred_check
          %p293 = pneg %p292
        $region38: #{conv3d.1} parent=35 // pred_check_branch
          %295 = sbr.rel (%p293) target = $region40
        $region39: #{conv3d.1} parent=35 // pred_region
          %vm296 = vcmask 523264
          %297 = vst.msk [vmem:[#allocation2] sm:$0xff] %vm296, 0.0
          %298 = vst.msk [vmem:[#allocation2 + $0x8] sm:$0xff] %vm296, 0.0
          %299 = vst.msk [vmem:[#allocation2 + $0x10] sm:$0xff] %vm296, 0.0
          %300 = vst.msk [vmem:[#allocation2 + $0x18] sm:$0xff] %vm296, 0.0
          %301 = vst.msk [vmem:[#allocation2 + $0x20] sm:$0xff] %vm296, 0.0
          %302 = vst.msk [vmem:[#allocation2 + $0x28] sm:$0xff] %vm296, 0.0
          %303 = vst.msk [vmem:[#allocation2 + $0x30] sm:$0xff] %vm296, 0.0
          %304 = vst.msk [vmem:[#allocation2 + $0x38] sm:$0xff] %vm296, 0.0
          %305 = vst.msk [vmem:[#allocation2 + $0x40] sm:$0xff] %vm296, 0.0
          %306 = vst.msk [vmem:[#allocation2 + $0x48] sm:$0xff] %vm296, 0.0
          %307 = vst.msk [vmem:[#allocation2 + $0x50] sm:$0xff] %vm296, 0.0
          %308 = vst.msk [vmem:[#allocation2 + $0x58] sm:$0xff] %vm296, 0.0
          %309 = vst.msk [vmem:[#allocation2 + $0x60] sm:$0xff] %vm296, 0.0
          %310 = vst.msk [vmem:[#allocation2 + $0x68] sm:$0xff] %vm296, 0.0
          %311 = vst.msk [vmem:[#allocation2 + $0x70] sm:$0xff] %vm296, 0.0
          %312 = vst.msk [vmem:[#allocation2 + $0x78] sm:$0xff] %vm296, 0.0
          %313 = vst.msk [vmem:[#allocation2 + $0x80] sm:$0xff] %vm296, 0.0
          %314 = vst.msk [vmem:[#allocation2 + $0x88] sm:$0xff] %vm296, 0.0
          %315 = vst.msk [vmem:[#allocation2 + $0x90] sm:$0xff] %vm296, 0.0
          %316 = vst.msk [vmem:[#allocation2 + $0x98] sm:$0xff] %vm296, 0.0
          %317 = vst.msk [vmem:[#allocation2 + $0xa0] sm:$0xff] %vm296, 0.0
          %318 = vst.msk [vmem:[#allocation2 + $0xa8] sm:$0xff] %vm296, 0.0
          %319 = vst.msk [vmem:[#allocation2 + $0xb0] sm:$0xff] %vm296, 0.0
          %320 = vst.msk [vmem:[#allocation2 + $0xb8] sm:$0xff] %vm296, 0.0
          %321 = vst.msk [vmem:[#allocation2 + $0xc0] sm:$0xff] %vm296, 0.0
          %322 = vst.msk [vmem:[#allocation2 + $0xc8] sm:$0xff] %vm296, 0.0
          %323 = vst.msk [vmem:[#allocation2 + $0xd0] sm:$0xff] %vm296, 0.0
          %324 = vst.msk [vmem:[#allocation2 + $0xd8] sm:$0xff] %vm296, 0.0
          %325 = vst.msk [vmem:[#allocation2 + $0xe0] sm:$0xff] %vm296, 0.0
          %326 = vst.msk [vmem:[#allocation2 + $0xe8] sm:$0xff] %vm296, 0.0
          %327 = vst.msk [vmem:[#allocation2 + $0xf0] sm:$0xff] %vm296, 0.0
          %328 = vst.msk [vmem:[#allocation2 + $0xf8] sm:$0xff] %vm296, 0.0
          %329 = vst.msk [vmem:[#allocation2 + $0x100] sm:$0xff] %vm296, 0.0
          %330 = vst.msk [vmem:[#allocation2 + $0x108] sm:$0xff] %vm296, 0.0
          %331 = vst.msk [vmem:[#allocation2 + $0x110] sm:$0xff] %vm296, 0.0
          %332 = vst.msk [vmem:[#allocation2 + $0x118] sm:$0xff] %vm296, 0.0
          %333 = vst.msk [vmem:[#allocation2 + $0x120] sm:$0xff] %vm296, 0.0
          %334 = vst.msk [vmem:[#allocation2 + $0x128] sm:$0xff] %vm296, 0.0
          %335 = vst.msk [vmem:[#allocation2 + $0x130] sm:$0xff] %vm296, 0.0
          %336 = vst.msk [vmem:[#allocation2 + $0x138] sm:$0xff] %vm296, 0.0
          %337 = vst.msk [vmem:[#allocation2 + $0x140] sm:$0xff] %vm296, 0.0
          %338 = vst.msk [vmem:[#allocation2 + $0x148] sm:$0xff] %vm296, 0.0
          %339 = vst.msk [vmem:[#allocation2 + $0x150] sm:$0xff] %vm296, 0.0
          %340 = vst.msk [vmem:[#allocation2 + $0x158] sm:$0xff] %vm296, 0.0
          %341 = vst.msk [vmem:[#allocation2 + $0x160] sm:$0xff] %vm296, 0.0
          %342 = vst.msk [vmem:[#allocation2 + $0x168] sm:$0xff] %vm296, 0.0
          %343 = vst.msk [vmem:[#allocation2 + $0x170] sm:$0xff] %vm296, 0.0
          %344 = vst.msk [vmem:[#allocation2 + $0x178] sm:$0xff] %vm296, 0.0
          %345 = vst.msk [vmem:[#allocation2 + $0x180] sm:$0xff] %vm296, 0.0
          %346 = vst.msk [vmem:[#allocation2 + $0x188] sm:$0xff] %vm296, 0.0
          %347 = vst.msk [vmem:[#allocation2 + $0x190] sm:$0xff] %vm296, 0.0
          %348 = vst.msk [vmem:[#allocation2 + $0x198] sm:$0xff] %vm296, 0.0
          %349 = vst.msk [vmem:[#allocation2 + $0x1a0] sm:$0xff] %vm296, 0.0
          %350 = vst.msk [vmem:[#allocation2 + $0x1a8] sm:$0xff] %vm296, 0.0
          %351 = vst.msk [vmem:[#allocation2 + $0x1b0] sm:$0xff] %vm296, 0.0
          %352 = vst.msk [vmem:[#allocation2 + $0x1b8] sm:$0xff] %vm296, 0.0
          %353 = vst.msk [vmem:[#allocation2 + $0x1c0] sm:$0xff] %vm296, 0.0
          %354 = vst.msk [vmem:[#allocation2 + $0x1c8] sm:$0xff] %vm296, 0.0
          %355 = vst.msk [vmem:[#allocation2 + $0x1d0] sm:$0xff] %vm296, 0.0
          %356 = vst.msk [vmem:[#allocation2 + $0x1d8] sm:$0xff] %vm296, 0.0
          %357 = vst.msk [vmem:[#allocation2 + $0x1e0] sm:$0xff] %vm296, 0.0
          %358 = vst.msk [vmem:[#allocation2 + $0x1e8] sm:$0xff] %vm296, 0.0
          %359 = vst.msk [vmem:[#allocation2 + $0x1f0] sm:$0xff] %vm296, 0.0
          %360 = vst.msk [vmem:[#allocation2 + $0x1f8] sm:$0xff] %vm296, 0.0
          %361 = vst.msk [vmem:[#allocation2 + $0x200] sm:$0xff] %vm296, 0.0
          %362 = vst.msk [vmem:[#allocation2 + $0x208] sm:$0xff] %vm296, 0.0
          %363 = vst.msk [vmem:[#allocation2 + $0x210] sm:$0xff] %vm296, 0.0
          %364 = vst.msk [vmem:[#allocation2 + $0x218] sm:$0xff] %vm296, 0.0
          %365 = vst.msk [vmem:[#allocation2 + $0x220] sm:$0xff] %vm296, 0.0
          %366 = vst.msk [vmem:[#allocation2 + $0x228] sm:$0xff] %vm296, 0.0
          %367 = vst.msk [vmem:[#allocation2 + $0x230] sm:$0xff] %vm296, 0.0
          %368 = vst.msk [vmem:[#allocation2 + $0x238] sm:$0xff] %vm296, 0.0
          %369 = vst.msk [vmem:[#allocation2 + $0x240] sm:$0xff] %vm296, 0.0
          %370 = vst.msk [vmem:[#allocation2 + $0x248] sm:$0xff] %vm296, 0.0
          %371 = vst.msk [vmem:[#allocation2 + $0x250] sm:$0xff] %vm296, 0.0
          %372 = vst.msk [vmem:[#allocation2 + $0x258] sm:$0xff] %vm296, 0.0
          %373 = vst.msk [vmem:[#allocation2 + $0x260] sm:$0xff] %vm296, 0.0
          %374 = vst.msk [vmem:[#allocation2 + $0x268] sm:$0xff] %vm296, 0.0
          %375 = vst.msk [vmem:[#allocation2 + $0x270] sm:$0xff] %vm296, 0.0
          %376 = vst.msk [vmem:[#allocation2 + $0x278] sm:$0xff] %vm296, 0.0
          %377 = vst.msk [vmem:[#allocation2 + $0x280] sm:$0xff] %vm296, 0.0
          %378 = vst.msk [vmem:[#allocation2 + $0x288] sm:$0xff] %vm296, 0.0
          %379 = vst.msk [vmem:[#allocation2 + $0x290] sm:$0xff] %vm296, 0.0
          %380 = vst.msk [vmem:[#allocation2 + $0x298] sm:$0xff] %vm296, 0.0
          %381 = vst.msk [vmem:[#allocation2 + $0x2a0] sm:$0xff] %vm296, 0.0
          %382 = vst.msk [vmem:[#allocation2 + $0x2a8] sm:$0xff] %vm296, 0.0
          %383 = vst.msk [vmem:[#allocation2 + $0x2b0] sm:$0xff] %vm296, 0.0
          %384 = vst.msk [vmem:[#allocation2 + $0x2b8] sm:$0xff] %vm296, 0.0
          %385 = vst.msk [vmem:[#allocation2 + $0x2c0] sm:$0xff] %vm296, 0.0
          %386 = vst.msk [vmem:[#allocation2 + $0x2c8] sm:$0xff] %vm296, 0.0
          %387 = vst.msk [vmem:[#allocation2 + $0x2d0] sm:$0xff] %vm296, 0.0
          %388 = vst.msk [vmem:[#allocation2 + $0x2d8] sm:$0xff] %vm296, 0.0
          %389 = vst.msk [vmem:[#allocation2 + $0x2e0] sm:$0xff] %vm296, 0.0
          %390 = vst.msk [vmem:[#allocation2 + $0x2e8] sm:$0xff] %vm296, 0.0
          %391 = vst.msk [vmem:[#allocation2 + $0x2f0] sm:$0xff] %vm296, 0.0
          %392 = vst.msk [vmem:[#allocation2 + $0x2f8] sm:$0xff] %vm296, 0.0
          %393 = vst.msk [vmem:[#allocation2 + $0x300] sm:$0xff] %vm296, 0.0
          %394 = vst.msk [vmem:[#allocation2 + $0x308] sm:$0xff] %vm296, 0.0
          %395 = vst.msk [vmem:[#allocation2 + $0x310] sm:$0xff] %vm296, 0.0
          %396 = vst.msk [vmem:[#allocation2 + $0x318] sm:$0xff] %vm296, 0.0
          %397 = vst.msk [vmem:[#allocation2 + $0x320] sm:$0xff] %vm296, 0.0
          %398 = vst.msk [vmem:[#allocation2 + $0x328] sm:$0xff] %vm296, 0.0
          %399 = vst.msk [vmem:[#allocation2 + $0x330] sm:$0xff] %vm296, 0.0
          %400 = vst.msk [vmem:[#allocation2 + $0x338] sm:$0xff] %vm296, 0.0
          %401 = vst.msk [vmem:[#allocation2 + $0x340] sm:$0xff] %vm296, 0.0
          %402 = vst.msk [vmem:[#allocation2 + $0x348] sm:$0xff] %vm296, 0.0
          %403 = vst.msk [vmem:[#allocation2 + $0x350] sm:$0xff] %vm296, 0.0
          %404 = vst.msk [vmem:[#allocation2 + $0x358] sm:$0xff] %vm296, 0.0
          %405 = vst.msk [vmem:[#allocation2 + $0x360] sm:$0xff] %vm296, 0.0
          %406 = vst.msk [vmem:[#allocation2 + $0x368] sm:$0xff] %vm296, 0.0
          %407 = vst.msk [vmem:[#allocation2 + $0x370] sm:$0xff] %vm296, 0.0
          %408 = vst.msk [vmem:[#allocation2 + $0x378] sm:$0xff] %vm296, 0.0
          %409 = vst.msk [vmem:[#allocation2 + $0x380] sm:$0xff] %vm296, 0.0
          %410 = vst.msk [vmem:[#allocation2 + $0x388] sm:$0xff] %vm296, 0.0
          %411 = vst.msk [vmem:[#allocation2 + $0x390] sm:$0xff] %vm296, 0.0
          %412 = vst.msk [vmem:[#allocation2 + $0x398] sm:$0xff] %vm296, 0.0
          %413 = vst.msk [vmem:[#allocation2 + $0x3a0] sm:$0xff] %vm296, 0.0
          %414 = vst.msk [vmem:[#allocation2 + $0x3a8] sm:$0xff] %vm296, 0.0
          %415 = vst.msk [vmem:[#allocation2 + $0x3b0] sm:$0xff] %vm296, 0.0
          %416 = vst.msk [vmem:[#allocation2 + $0x3b8] sm:$0xff] %vm296, 0.0
          %417 = vst.msk [vmem:[#allocation2 + $0x3c0] sm:$0xff] %vm296, 0.0
          %418 = vst.msk [vmem:[#allocation2 + $0x3c8] sm:$0xff] %vm296, 0.0
          %419 = vst.msk [vmem:[#allocation2 + $0x3d0] sm:$0xff] %vm296, 0.0
          %420 = vst.msk [vmem:[#allocation2 + $0x3d8] sm:$0xff] %vm296, 0.0
          %421 = vst.msk [vmem:[#allocation2 + $0x3e0] sm:$0xff] %vm296, 0.0
          %422 = vst.msk [vmem:[#allocation2 + $0x3e8] sm:$0xff] %vm296, 0.0
          %423 = vst.msk [vmem:[#allocation2 + $0x3f0] sm:$0xff] %vm296, 0.0
          %424 = vst.msk [vmem:[#allocation2 + $0x3f8] sm:$0xff] %vm296, 0.0
          %425 = vst.msk [vmem:[#allocation2 + $0x400] sm:$0xff] %vm296, 0.0
          %426 = vst.msk [vmem:[#allocation2 + $0x408] sm:$0xff] %vm296, 0.0
          %427 = vst.msk [vmem:[#allocation2 + $0x410] sm:$0xff] %vm296, 0.0
          %428 = vst.msk [vmem:[#allocation2 + $0x418] sm:$0xff] %vm296, 0.0
          %429 = vst.msk [vmem:[#allocation2 + $0x420] sm:$0xff] %vm296, 0.0
          %430 = vst.msk [vmem:[#allocation2 + $0x428] sm:$0xff] %vm296, 0.0
          %431 = vst.msk [vmem:[#allocation2 + $0x430] sm:$0xff] %vm296, 0.0
          %432 = vst.msk [vmem:[#allocation2 + $0x438] sm:$0xff] %vm296, 0.0
          %433 = vst.msk [vmem:[#allocation2 + $0x440] sm:$0xff] %vm296, 0.0
          %434 = vst.msk [vmem:[#allocation2 + $0x448] sm:$0xff] %vm296, 0.0
          %435 = vst.msk [vmem:[#allocation2 + $0x450] sm:$0xff] %vm296, 0.0
          %436 = vst.msk [vmem:[#allocation2 + $0x458] sm:$0xff] %vm296, 0.0
          %437 = vst.msk [vmem:[#allocation2 + $0x460] sm:$0xff] %vm296, 0.0
          %438 = vst.msk [vmem:[#allocation2 + $0x468] sm:$0xff] %vm296, 0.0
          %439 = vst.msk [vmem:[#allocation2 + $0x470] sm:$0xff] %vm296, 0.0
          %440 = vst.msk [vmem:[#allocation2 + $0x478] sm:$0xff] %vm296, 0.0
          %441 = vst.msk [vmem:[#allocation2 + $0x480] sm:$0xff] %vm296, 0.0
          %442 = vst.msk [vmem:[#allocation2 + $0x488] sm:$0xff] %vm296, 0.0
          %443 = vst.msk [vmem:[#allocation2 + $0x490] sm:$0xff] %vm296, 0.0
          %444 = vst.msk [vmem:[#allocation2 + $0x498] sm:$0xff] %vm296, 0.0
          %445 = vst.msk [vmem:[#allocation2 + $0x4a0] sm:$0xff] %vm296, 0.0
          %446 = vst.msk [vmem:[#allocation2 + $0x4a8] sm:$0xff] %vm296, 0.0
          %447 = vst.msk [vmem:[#allocation2 + $0x4b0] sm:$0xff] %vm296, 0.0
          %448 = vst.msk [vmem:[#allocation2 + $0x4b8] sm:$0xff] %vm296, 0.0
          %449 = vst.msk [vmem:[#allocation2 + $0x4c0] sm:$0xff] %vm296, 0.0
          %450 = vst.msk [vmem:[#allocation2 + $0x4c8] sm:$0xff] %vm296, 0.0
          %451 = vst.msk [vmem:[#allocation2 + $0x4d0] sm:$0xff] %vm296, 0.0
          %452 = vst.msk [vmem:[#allocation2 + $0x4d8] sm:$0xff] %vm296, 0.0
          %453 = vst.msk [vmem:[#allocation2 + $0x4e0] sm:$0xff] %vm296, 0.0
          %454 = vst.msk [vmem:[#allocation2 + $0x4e8] sm:$0xff] %vm296, 0.0
          %455 = vst.msk [vmem:[#allocation2 + $0x4f0] sm:$0xff] %vm296, 0.0
          %456 = vst.msk [vmem:[#allocation2 + $0x4f8] sm:$0xff] %vm296, 0.0
          %457 = vst.msk [vmem:[#allocation2 + $0x500] sm:$0xff] %vm296, 0.0
          %458 = vst.msk [vmem:[#allocation2 + $0x508] sm:$0xff] %vm296, 0.0
          %459 = vst.msk [vmem:[#allocation2 + $0x510] sm:$0xff] %vm296, 0.0
          %460 = vst.msk [vmem:[#allocation2 + $0x518] sm:$0xff] %vm296, 0.0
          %461 = vst.msk [vmem:[#allocation2 + $0x520] sm:$0xff] %vm296, 0.0
          %462 = vst.msk [vmem:[#allocation2 + $0x528] sm:$0xff] %vm296, 0.0
          %463 = vst.msk [vmem:[#allocation2 + $0x530] sm:$0xff] %vm296, 0.0
          %464 = vst.msk [vmem:[#allocation2 + $0x538] sm:$0xff] %vm296, 0.0
          %465 = vst.msk [vmem:[#allocation2 + $0x540] sm:$0xff] %vm296, 0.0
          %466 = vst.msk [vmem:[#allocation2 + $0x548] sm:$0xff] %vm296, 0.0
          %467 = vst.msk [vmem:[#allocation2 + $0x550] sm:$0xff] %vm296, 0.0
          %468 = vst.msk [vmem:[#allocation2 + $0x558] sm:$0xff] %vm296, 0.0
          %469 = vst.msk [vmem:[#allocation2 + $0x560] sm:$0xff] %vm296, 0.0
          %470 = vst.msk [vmem:[#allocation2 + $0x568] sm:$0xff] %vm296, 0.0
          %471 = vst.msk [vmem:[#allocation2 + $0x570] sm:$0xff] %vm296, 0.0
          %472 = vst.msk [vmem:[#allocation2 + $0x578] sm:$0xff] %vm296, 0.0
          %473 = vst.msk [vmem:[#allocation2 + $0x580] sm:$0xff] %vm296, 0.0
          %474 = vst.msk [vmem:[#allocation2 + $0x588] sm:$0xff] %vm296, 0.0
          %475 = vst.msk [vmem:[#allocation2 + $0x590] sm:$0xff] %vm296, 0.0
          %476 = vst.msk [vmem:[#allocation2 + $0x598] sm:$0xff] %vm296, 0.0
          %477 = vst.msk [vmem:[#allocation2 + $0x5a0] sm:$0xff] %vm296, 0.0
          %478 = vst.msk [vmem:[#allocation2 + $0x5a8] sm:$0xff] %vm296, 0.0
          %479 = vst.msk [vmem:[#allocation2 + $0x5b0] sm:$0xff] %vm296, 0.0
          %480 = vst.msk [vmem:[#allocation2 + $0x5b8] sm:$0xff] %vm296, 0.0
          %481 = vst.msk [vmem:[#allocation2 + $0x5c0] sm:$0xff] %vm296, 0.0
          %482 = vst.msk [vmem:[#allocation2 + $0x5c8] sm:$0xff] %vm296, 0.0
          %483 = vst.msk [vmem:[#allocation2 + $0x5d0] sm:$0xff] %vm296, 0.0
          %484 = vst.msk [vmem:[#allocation2 + $0x5d8] sm:$0xff] %vm296, 0.0
          %485 = vst.msk [vmem:[#allocation2 + $0x5e0] sm:$0xff] %vm296, 0.0
          %486 = vst.msk [vmem:[#allocation2 + $0x5e8] sm:$0xff] %vm296, 0.0
          %487 = vst.msk [vmem:[#allocation2 + $0x5f0] sm:$0xff] %vm296, 0.0
          %488 = vst.msk [vmem:[#allocation2 + $0x5f8] sm:$0xff] %vm296, 0.0
          %489 = vst.msk [vmem:[#allocation2 + $0x600] sm:$0xff] %vm296, 0.0
          %490 = vst.msk [vmem:[#allocation2 + $0x608] sm:$0xff] %vm296, 0.0
          %491 = vst.msk [vmem:[#allocation2 + $0x610] sm:$0xff] %vm296, 0.0
          %492 = vst.msk [vmem:[#allocation2 + $0x618] sm:$0xff] %vm296, 0.0
          %493 = vst.msk [vmem:[#allocation2 + $0x620] sm:$0xff] %vm296, 0.0
          %494 = vst.msk [vmem:[#allocation2 + $0x628] sm:$0xff] %vm296, 0.0
          %495 = vst.msk [vmem:[#allocation2 + $0x630] sm:$0xff] %vm296, 0.0
          %496 = vst.msk [vmem:[#allocation2 + $0x638] sm:$0xff] %vm296, 0.0
          %497 = vst.msk [vmem:[#allocation2 + $0x640] sm:$0xff] %vm296, 0.0
          %498 = vst.msk [vmem:[#allocation2 + $0x648] sm:$0xff] %vm296, 0.0
          %499 = vst.msk [vmem:[#allocation2 + $0x650] sm:$0xff] %vm296, 0.0
          %500 = vst.msk [vmem:[#allocation2 + $0x658] sm:$0xff] %vm296, 0.0
          %501 = vst.msk [vmem:[#allocation2 + $0x660] sm:$0xff] %vm296, 0.0
          %502 = vst.msk [vmem:[#allocation2 + $0x668] sm:$0xff] %vm296, 0.0
          %503 = vst.msk [vmem:[#allocation2 + $0x670] sm:$0xff] %vm296, 0.0
          %504 = vst.msk [vmem:[#allocation2 + $0x678] sm:$0xff] %vm296, 0.0
          %505 = vst.msk [vmem:[#allocation2 + $0x680] sm:$0xff] %vm296, 0.0
          %506 = vst.msk [vmem:[#allocation2 + $0x688] sm:$0xff] %vm296, 0.0
          %507 = vst.msk [vmem:[#allocation2 + $0x690] sm:$0xff] %vm296, 0.0
          %508 = vst.msk [vmem:[#allocation2 + $0x698] sm:$0xff] %vm296, 0.0
          %509 = vst.msk [vmem:[#allocation2 + $0x6a0] sm:$0xff] %vm296, 0.0
          %510 = vst.msk [vmem:[#allocation2 + $0x6a8] sm:$0xff] %vm296, 0.0
          %511 = vst.msk [vmem:[#allocation2 + $0x6b0] sm:$0xff] %vm296, 0.0
          %512 = vst.msk [vmem:[#allocation2 + $0x6b8] sm:$0xff] %vm296, 0.0
          %513 = vst.msk [vmem:[#allocation2 + $0x6c0] sm:$0xff] %vm296, 0.0
          %514 = vst.msk [vmem:[#allocation2 + $0x6c8] sm:$0xff] %vm296, 0.0
          %515 = vst.msk [vmem:[#allocation2 + $0x6d0] sm:$0xff] %vm296, 0.0
          %516 = vst.msk [vmem:[#allocation2 + $0x6d8] sm:$0xff] %vm296, 0.0
          %517 = vst.msk [vmem:[#allocation2 + $0x6e0] sm:$0xff] %vm296, 0.0
          %518 = vst.msk [vmem:[#allocation2 + $0x6e8] sm:$0xff] %vm296, 0.0
          %519 = vst.msk [vmem:[#allocation2 + $0x6f0] sm:$0xff] %vm296, 0.0
          %520 = vst.msk [vmem:[#allocation2 + $0x6f8] sm:$0xff] %vm296, 0.0
          %521 = vst.msk [vmem:[#allocation2 + $0x700] sm:$0xff] %vm296, 0.0
          %522 = vst.msk [vmem:[#allocation2 + $0x708] sm:$0xff] %vm296, 0.0
          %523 = vst.msk [vmem:[#allocation2 + $0x710] sm:$0xff] %vm296, 0.0
          %524 = vst.msk [vmem:[#allocation2 + $0x718] sm:$0xff] %vm296, 0.0
          %525 = vst.msk [vmem:[#allocation2 + $0x720] sm:$0xff] %vm296, 0.0
          %526 = vst.msk [vmem:[#allocation2 + $0x728] sm:$0xff] %vm296, 0.0
          %527 = vst.msk [vmem:[#allocation2 + $0x730] sm:$0xff] %vm296, 0.0
          %528 = vst.msk [vmem:[#allocation2 + $0x738] sm:$0xff] %vm296, 0.0
          %529 = vst.msk [vmem:[#allocation2 + $0x740] sm:$0xff] %vm296, 0.0
          %530 = vst.msk [vmem:[#allocation2 + $0x748] sm:$0xff] %vm296, 0.0
          %531 = vst.msk [vmem:[#allocation2 + $0x750] sm:$0xff] %vm296, 0.0
          %532 = vst.msk [vmem:[#allocation2 + $0x758] sm:$0xff] %vm296, 0.0
          %533 = vst.msk [vmem:[#allocation2 + $0x760] sm:$0xff] %vm296, 0.0
          %534 = vst.msk [vmem:[#allocation2 + $0x768] sm:$0xff] %vm296, 0.0
          %535 = vst.msk [vmem:[#allocation2 + $0x770] sm:$0xff] %vm296, 0.0
          %536 = vst.msk [vmem:[#allocation2 + $0x778] sm:$0xff] %vm296, 0.0
          %537 = vst.msk [vmem:[#allocation2 + $0x780] sm:$0xff] %vm296, 0.0
          %538 = vst.msk [vmem:[#allocation2 + $0x788] sm:$0xff] %vm296, 0.0
          %539 = vst.msk [vmem:[#allocation2 + $0x790] sm:$0xff] %vm296, 0.0
          %540 = vst.msk [vmem:[#allocation2 + $0x798] sm:$0xff] %vm296, 0.0
          %541 = vst.msk [vmem:[#allocation2 + $0x7a0] sm:$0xff] %vm296, 0.0
          %542 = vst.msk [vmem:[#allocation2 + $0x7a8] sm:$0xff] %vm296, 0.0
          %543 = vst.msk [vmem:[#allocation2 + $0x7b0] sm:$0xff] %vm296, 0.0
          %544 = vst.msk [vmem:[#allocation2 + $0x7b8] sm:$0xff] %vm296, 0.0
          %545 = vst.msk [vmem:[#allocation2 + $0x7c0] sm:$0xff] %vm296, 0.0
          %546 = vst.msk [vmem:[#allocation2 + $0x7c8] sm:$0xff] %vm296, 0.0
          %547 = vst.msk [vmem:[#allocation2 + $0x7d0] sm:$0xff] %vm296, 0.0
          %548 = vst.msk [vmem:[#allocation2 + $0x7d8] sm:$0xff] %vm296, 0.0
          %549 = vst.msk [vmem:[#allocation2 + $0x7e0] sm:$0xff] %vm296, 0.0
          %550 = vst.msk [vmem:[#allocation2 + $0x7e8] sm:$0xff] %vm296, 0.0
          %551 = vst.msk [vmem:[#allocation2 + $0x7f0] sm:$0xff] %vm296, 0.0
          %552 = vst.msk [vmem:[#allocation2 + $0x7f8] sm:$0xff] %vm296, 0.0
        $region40: #{conv3d.1} parent=35 // pred_fallthru
          _
        %v553 = vld [vmem:[#allocation2] sm:$0xff]
        %v554 = vld [vmem:[#allocation2 + $0x8] sm:$0xff]
        %v555 = vld [vmem:[#allocation2 + $0x10] sm:$0xff]
        %v556 = vld [vmem:[#allocation2 + $0x18] sm:$0xff]
        %v557 = vld [vmem:[#allocation2 + $0x20] sm:$0xff]
        %v558 = vld [vmem:[#allocation2 + $0x28] sm:$0xff]
        %v559 = vld [vmem:[#allocation2 + $0x30] sm:$0xff]
        %v560 = vld [vmem:[#allocation2 + $0x38] sm:$0xff]
        %v561 = vld [vmem:[#allocation2 + $0x40] sm:$0xff]
        %v562 = vld [vmem:[#allocation2 + $0x48] sm:$0xff]
        %v563 = vld [vmem:[#allocation2 + $0x50] sm:$0xff]
        %v564 = vld [vmem:[#allocation2 + $0x58] sm:$0xff]
        %v565 = vld [vmem:[#allocation2 + $0x60] sm:$0xff]
        %v566 = vld [vmem:[#allocation2 + $0x68] sm:$0xff]
        %v567 = vld [vmem:[#allocation2 + $0x70] sm:$0xff]
        %v568 = vld [vmem:[#allocation2 + $0x78] sm:$0xff]
        %v569 = vld [vmem:[#allocation2 + $0x80] sm:$0xff]
        %v570 = vld [vmem:[#allocation2 + $0x88] sm:$0xff]
        %v571 = vld [vmem:[#allocation2 + $0x90] sm:$0xff]
        %v572 = vld [vmem:[#allocation2 + $0x98] sm:$0xff]
        %v573 = vld [vmem:[#allocation2 + $0xa0] sm:$0xff]
        %v574 = vld [vmem:[#allocation2 + $0xa8] sm:$0xff]
        %v575 = vld [vmem:[#allocation2 + $0xb0] sm:$0xff]
        %v576 = vld [vmem:[#allocation2 + $0xb8] sm:$0xff]
        %v577 = vld [vmem:[#allocation2 + $0xc0] sm:$0xff]
        %v578 = vld [vmem:[#allocation2 + $0xc8] sm:$0xff]
        %v579 = vld [vmem:[#allocation2 + $0xd0] sm:$0xff]
        %v580 = vld [vmem:[#allocation2 + $0xd8] sm:$0xff]
        %v581 = vld [vmem:[#allocation2 + $0xe0] sm:$0xff]
        %v582 = vld [vmem:[#allocation2 + $0xe8] sm:$0xff]
        %v583 = vld [vmem:[#allocation2 + $0xf0] sm:$0xff]
        %v584 = vld [vmem:[#allocation2 + $0xf8] sm:$0xff]
        %v585 = vld [vmem:[#allocation2 + $0x100] sm:$0xff]
        %v586 = vld [vmem:[#allocation2 + $0x108] sm:$0xff]
        %v587 = vld [vmem:[#allocation2 + $0x110] sm:$0xff]
        %v588 = vld [vmem:[#allocation2 + $0x118] sm:$0xff]
        %v589 = vld [vmem:[#allocation2 + $0x120] sm:$0xff]
        %v590 = vld [vmem:[#allocation2 + $0x128] sm:$0xff]
        %v591 = vld [vmem:[#allocation2 + $0x130] sm:$0xff]
        %v592 = vld [vmem:[#allocation2 + $0x138] sm:$0xff]
        %v593 = vld [vmem:[#allocation2 + $0x140] sm:$0xff]
        %v594 = vld [vmem:[#allocation2 + $0x148] sm:$0xff]
        %v595 = vld [vmem:[#allocation2 + $0x150] sm:$0xff]
        %v596 = vld [vmem:[#allocation2 + $0x158] sm:$0xff]
        %v597 = vld [vmem:[#allocation2 + $0x160] sm:$0xff]
        %v598 = vld [vmem:[#allocation2 + $0x168] sm:$0xff]
        %v599 = vld [vmem:[#allocation2 + $0x170] sm:$0xff]
        %v600 = vld [vmem:[#allocation2 + $0x178] sm:$0xff]
        %v601 = vld [vmem:[#allocation2 + $0x180] sm:$0xff]
        %v602 = vld [vmem:[#allocation2 + $0x188] sm:$0xff]
        %v603 = vld [vmem:[#allocation2 + $0x190] sm:$0xff]
        %v604 = vld [vmem:[#allocation2 + $0x198] sm:$0xff]
        %v605 = vld [vmem:[#allocation2 + $0x1a0] sm:$0xff]
        %v606 = vld [vmem:[#allocation2 + $0x1a8] sm:$0xff]
        %v607 = vld [vmem:[#allocation2 + $0x1b0] sm:$0xff]
        %v608 = vld [vmem:[#allocation2 + $0x1b8] sm:$0xff]
        %v609 = vld [vmem:[#allocation2 + $0x1c0] sm:$0xff]
        %v610 = vld [vmem:[#allocation2 + $0x1c8] sm:$0xff]
        %v611 = vld [vmem:[#allocation2 + $0x1d0] sm:$0xff]
        %v612 = vld [vmem:[#allocation2 + $0x1d8] sm:$0xff]
        %v613 = vld [vmem:[#allocation2 + $0x1e0] sm:$0xff]
        %v614 = vld [vmem:[#allocation2 + $0x1e8] sm:$0xff]
        %v615 = vld [vmem:[#allocation2 + $0x1f0] sm:$0xff]
        %v616 = vld [vmem:[#allocation2 + $0x1f8] sm:$0xff]
        %v617 = vld [vmem:[#allocation2 + $0x200] sm:$0xff]
        %v618 = vld [vmem:[#allocation2 + $0x208] sm:$0xff]
        %v619 = vld [vmem:[#allocation2 + $0x210] sm:$0xff]
        %v620 = vld [vmem:[#allocation2 + $0x218] sm:$0xff]
        %v621 = vld [vmem:[#allocation2 + $0x220] sm:$0xff]
        %v622 = vld [vmem:[#allocation2 + $0x228] sm:$0xff]
        %v623 = vld [vmem:[#allocation2 + $0x230] sm:$0xff]
        %v624 = vld [vmem:[#allocation2 + $0x238] sm:$0xff]
        %v625 = vld [vmem:[#allocation2 + $0x240] sm:$0xff]
        %v626 = vld [vmem:[#allocation2 + $0x248] sm:$0xff]
        %v627 = vld [vmem:[#allocation2 + $0x250] sm:$0xff]
        %v628 = vld [vmem:[#allocation2 + $0x258] sm:$0xff]
        %v629 = vld [vmem:[#allocation2 + $0x260] sm:$0xff]
        %v630 = vld [vmem:[#allocation2 + $0x268] sm:$0xff]
        %v631 = vld [vmem:[#allocation2 + $0x270] sm:$0xff]
        %v632 = vld [vmem:[#allocation2 + $0x278] sm:$0xff]
        %v633 = vld [vmem:[#allocation2 + $0x280] sm:$0xff]
        %v634 = vld [vmem:[#allocation2 + $0x288] sm:$0xff]
        %v635 = vld [vmem:[#allocation2 + $0x290] sm:$0xff]
        %v636 = vld [vmem:[#allocation2 + $0x298] sm:$0xff]
        %v637 = vld [vmem:[#allocation2 + $0x2a0] sm:$0xff]
        %v638 = vld [vmem:[#allocation2 + $0x2a8] sm:$0xff]
        %v639 = vld [vmem:[#allocation2 + $0x2b0] sm:$0xff]
        %v640 = vld [vmem:[#allocation2 + $0x2b8] sm:$0xff]
        %v641 = vld [vmem:[#allocation2 + $0x2c0] sm:$0xff]
        %v642 = vld [vmem:[#allocation2 + $0x2c8] sm:$0xff]
        %v643 = vld [vmem:[#allocation2 + $0x2d0] sm:$0xff]
        %v644 = vld [vmem:[#allocation2 + $0x2d8] sm:$0xff]
        %v645 = vld [vmem:[#allocation2 + $0x2e0] sm:$0xff]
        %v646 = vld [vmem:[#allocation2 + $0x2e8] sm:$0xff]
        %v647 = vld [vmem:[#allocation2 + $0x2f0] sm:$0xff]
        %v648 = vld [vmem:[#allocation2 + $0x2f8] sm:$0xff]
        %v649 = vld [vmem:[#allocation2 + $0x300] sm:$0xff]
        %v650 = vld [vmem:[#allocation2 + $0x308] sm:$0xff]
        %v651 = vld [vmem:[#allocation2 + $0x310] sm:$0xff]
        %v652 = vld [vmem:[#allocation2 + $0x318] sm:$0xff]
        %v653 = vld [vmem:[#allocation2 + $0x320] sm:$0xff]
        %v654 = vld [vmem:[#allocation2 + $0x328] sm:$0xff]
        %v655 = vld [vmem:[#allocation2 + $0x330] sm:$0xff]
        %v656 = vld [vmem:[#allocation2 + $0x338] sm:$0xff]
        %v657 = vld [vmem:[#allocation2 + $0x340] sm:$0xff]
        %v658 = vld [vmem:[#allocation2 + $0x348] sm:$0xff]
        %v659 = vld [vmem:[#allocation2 + $0x350] sm:$0xff]
        %v660 = vld [vmem:[#allocation2 + $0x358] sm:$0xff]
        %v661 = vld [vmem:[#allocation2 + $0x360] sm:$0xff]
        %v662 = vld [vmem:[#allocation2 + $0x368] sm:$0xff]
        %v663 = vld [vmem:[#allocation2 + $0x370] sm:$0xff]
        %v664 = vld [vmem:[#allocation2 + $0x378] sm:$0xff]
        %v665 = vld [vmem:[#allocation2 + $0x380] sm:$0xff]
        %v666 = vld [vmem:[#allocation2 + $0x388] sm:$0xff]
        %v667 = vld [vmem:[#allocation2 + $0x390] sm:$0xff]
        %v668 = vld [vmem:[#allocation2 + $0x398] sm:$0xff]
        %v669 = vld [vmem:[#allocation2 + $0x3a0] sm:$0xff]
        %v670 = vld [vmem:[#allocation2 + $0x3a8] sm:$0xff]
        %v671 = vld [vmem:[#allocation2 + $0x3b0] sm:$0xff]
        %v672 = vld [vmem:[#allocation2 + $0x3b8] sm:$0xff]
        %v673 = vld [vmem:[#allocation2 + $0x3c0] sm:$0xff]
        %v674 = vld [vmem:[#allocation2 + $0x3c8] sm:$0xff]
        %v675 = vld [vmem:[#allocation2 + $0x3d0] sm:$0xff]
        %v676 = vld [vmem:[#allocation2 + $0x3d8] sm:$0xff]
        %v677 = vld [vmem:[#allocation2 + $0x3e0] sm:$0xff]
        %v678 = vld [vmem:[#allocation2 + $0x3e8] sm:$0xff]
        %v679 = vld [vmem:[#allocation2 + $0x3f0] sm:$0xff]
        %v680 = vld [vmem:[#allocation2 + $0x3f8] sm:$0xff]
        %v681 = vld [vmem:[#allocation2 + $0x400] sm:$0xff]
        %v682 = vld [vmem:[#allocation2 + $0x408] sm:$0xff]
        %v683 = vld [vmem:[#allocation2 + $0x410] sm:$0xff]
        %v684 = vld [vmem:[#allocation2 + $0x418] sm:$0xff]
        %v685 = vld [vmem:[#allocation2 + $0x420] sm:$0xff]
        %v686 = vld [vmem:[#allocation2 + $0x428] sm:$0xff]
        %v687 = vld [vmem:[#allocation2 + $0x430] sm:$0xff]
        %v688 = vld [vmem:[#allocation2 + $0x438] sm:$0xff]
        %v689 = vld [vmem:[#allocation2 + $0x440] sm:$0xff]
        %v690 = vld [vmem:[#allocation2 + $0x448] sm:$0xff]
        %v691 = vld [vmem:[#allocation2 + $0x450] sm:$0xff]
        %v692 = vld [vmem:[#allocation2 + $0x458] sm:$0xff]
        %v693 = vld [vmem:[#allocation2 + $0x460] sm:$0xff]
        %v694 = vld [vmem:[#allocation2 + $0x468] sm:$0xff]
        %v695 = vld [vmem:[#allocation2 + $0x470] sm:$0xff]
        %v696 = vld [vmem:[#allocation2 + $0x478] sm:$0xff]
        %v697 = vld [vmem:[#allocation2 + $0x480] sm:$0xff]
        %v698 = vld [vmem:[#allocation2 + $0x488] sm:$0xff]
        %v699 = vld [vmem:[#allocation2 + $0x490] sm:$0xff]
        %v700 = vld [vmem:[#allocation2 + $0x498] sm:$0xff]
        %v701 = vld [vmem:[#allocation2 + $0x4a0] sm:$0xff]
        %v702 = vld [vmem:[#allocation2 + $0x4a8] sm:$0xff]
        %v703 = vld [vmem:[#allocation2 + $0x4b0] sm:$0xff]
        %v704 = vld [vmem:[#allocation2 + $0x4b8] sm:$0xff]
        %v705 = vld [vmem:[#allocation2 + $0x4c0] sm:$0xff]
        %v706 = vld [vmem:[#allocation2 + $0x4c8] sm:$0xff]
        %v707 = vld [vmem:[#allocation2 + $0x4d0] sm:$0xff]
        %v708 = vld [vmem:[#allocation2 + $0x4d8] sm:$0xff]
        %v709 = vld [vmem:[#allocation2 + $0x4e0] sm:$0xff]
        %v710 = vld [vmem:[#allocation2 + $0x4e8] sm:$0xff]
        %v711 = vld [vmem:[#allocation2 + $0x4f0] sm:$0xff]
        %v712 = vld [vmem:[#allocation2 + $0x4f8] sm:$0xff]
        %v713 = vld [vmem:[#allocation2 + $0x500] sm:$0xff]
        %v714 = vld [vmem:[#allocation2 + $0x508] sm:$0xff]
        %v715 = vld [vmem:[#allocation2 + $0x510] sm:$0xff]
        %v716 = vld [vmem:[#allocation2 + $0x518] sm:$0xff]
        %v717 = vld [vmem:[#allocation2 + $0x520] sm:$0xff]
        %v718 = vld [vmem:[#allocation2 + $0x528] sm:$0xff]
        %v719 = vld [vmem:[#allocation2 + $0x530] sm:$0xff]
        %v720 = vld [vmem:[#allocation2 + $0x538] sm:$0xff]
        %v721 = vld [vmem:[#allocation2 + $0x540] sm:$0xff]
        %v722 = vld [vmem:[#allocation2 + $0x548] sm:$0xff]
        %v723 = vld [vmem:[#allocation2 + $0x550] sm:$0xff]
        %v724 = vld [vmem:[#allocation2 + $0x558] sm:$0xff]
        %v725 = vld [vmem:[#allocation2 + $0x560] sm:$0xff]
        %v726 = vld [vmem:[#allocation2 + $0x568] sm:$0xff]
        %v727 = vld [vmem:[#allocation2 + $0x570] sm:$0xff]
        %v728 = vld [vmem:[#allocation2 + $0x578] sm:$0xff]
        %v729 = vld [vmem:[#allocation2 + $0x580] sm:$0xff]
        %v730 = vld [vmem:[#allocation2 + $0x588] sm:$0xff]
        %v731 = vld [vmem:[#allocation2 + $0x590] sm:$0xff]
        %v732 = vld [vmem:[#allocation2 + $0x598] sm:$0xff]
        %v733 = vld [vmem:[#allocation2 + $0x5a0] sm:$0xff]
        %v734 = vld [vmem:[#allocation2 + $0x5a8] sm:$0xff]
        %v735 = vld [vmem:[#allocation2 + $0x5b0] sm:$0xff]
        %v736 = vld [vmem:[#allocation2 + $0x5b8] sm:$0xff]
        %v737 = vld [vmem:[#allocation2 + $0x5c0] sm:$0xff]
        %v738 = vld [vmem:[#allocation2 + $0x5c8] sm:$0xff]
        %v739 = vld [vmem:[#allocation2 + $0x5d0] sm:$0xff]
        %v740 = vld [vmem:[#allocation2 + $0x5d8] sm:$0xff]
        %v741 = vld [vmem:[#allocation2 + $0x5e0] sm:$0xff]
        %v742 = vld [vmem:[#allocation2 + $0x5e8] sm:$0xff]
        %v743 = vld [vmem:[#allocation2 + $0x5f0] sm:$0xff]
        %v744 = vld [vmem:[#allocation2 + $0x5f8] sm:$0xff]
        %v745 = vld [vmem:[#allocation2 + $0x600] sm:$0xff]
        %v746 = vld [vmem:[#allocation2 + $0x608] sm:$0xff]
        %v747 = vld [vmem:[#allocation2 + $0x610] sm:$0xff]
        %v748 = vld [vmem:[#allocation2 + $0x618] sm:$0xff]
        %v749 = vld [vmem:[#allocation2 + $0x620] sm:$0xff]
        %v750 = vld [vmem:[#allocation2 + $0x628] sm:$0xff]
        %v751 = vld [vmem:[#allocation2 + $0x630] sm:$0xff]
        %v752 = vld [vmem:[#allocation2 + $0x638] sm:$0xff]
        %v753 = vld [vmem:[#allocation2 + $0x640] sm:$0xff]
        %v754 = vld [vmem:[#allocation2 + $0x648] sm:$0xff]
        %v755 = vld [vmem:[#allocation2 + $0x650] sm:$0xff]
        %v756 = vld [vmem:[#allocation2 + $0x658] sm:$0xff]
        %v757 = vld [vmem:[#allocation2 + $0x660] sm:$0xff]
        %v758 = vld [vmem:[#allocation2 + $0x668] sm:$0xff]
        %v759 = vld [vmem:[#allocation2 + $0x670] sm:$0xff]
        %v760 = vld [vmem:[#allocation2 + $0x678] sm:$0xff]
        %v761 = vld [vmem:[#allocation2 + $0x680] sm:$0xff]
        %v762 = vld [vmem:[#allocation2 + $0x688] sm:$0xff]
        %v763 = vld [vmem:[#allocation2 + $0x690] sm:$0xff]
        %v764 = vld [vmem:[#allocation2 + $0x698] sm:$0xff]
        %v765 = vld [vmem:[#allocation2 + $0x6a0] sm:$0xff]
        %v766 = vld [vmem:[#allocation2 + $0x6a8] sm:$0xff]
        %v767 = vld [vmem:[#allocation2 + $0x6b0] sm:$0xff]
        %v768 = vld [vmem:[#allocation2 + $0x6b8] sm:$0xff]
        %v769 = vld [vmem:[#allocation2 + $0x6c0] sm:$0xff]
        %v770 = vld [vmem:[#allocation2 + $0x6c8] sm:$0xff]
        %v771 = vld [vmem:[#allocation2 + $0x6d0] sm:$0xff]
        %v772 = vld [vmem:[#allocation2 + $0x6d8] sm:$0xff]
        %v773 = vld [vmem:[#allocation2 + $0x6e0] sm:$0xff]
        %v774 = vld [vmem:[#allocation2 + $0x6e8] sm:$0xff]
        %v775 = vld [vmem:[#allocation2 + $0x6f0] sm:$0xff]
        %v776 = vld [vmem:[#allocation2 + $0x6f8] sm:$0xff]
        %v777 = vld [vmem:[#allocation2 + $0x700] sm:$0xff]
        %v778 = vld [vmem:[#allocation2 + $0x708] sm:$0xff]
        %v779 = vld [vmem:[#allocation2 + $0x710] sm:$0xff]
        %v780 = vld [vmem:[#allocation2 + $0x718] sm:$0xff]
        %v781 = vld [vmem:[#allocation2 + $0x720] sm:$0xff]
        %v782 = vld [vmem:[#allocation2 + $0x728] sm:$0xff]
        %v783 = vld [vmem:[#allocation2 + $0x730] sm:$0xff]
        %v784 = vld [vmem:[#allocation2 + $0x738] sm:$0xff]
        %v785 = vld [vmem:[#allocation2 + $0x740] sm:$0xff]
        %v786 = vld [vmem:[#allocation2 + $0x748] sm:$0xff]
        %v787 = vld [vmem:[#allocation2 + $0x750] sm:$0xff]
        %v788 = vld [vmem:[#allocation2 + $0x758] sm:$0xff]
        %v789 = vld [vmem:[#allocation2 + $0x760] sm:$0xff]
        %v790 = vld [vmem:[#allocation2 + $0x768] sm:$0xff]
        %v791 = vld [vmem:[#allocation2 + $0x770] sm:$0xff]
        %v792 = vld [vmem:[#allocation2 + $0x778] sm:$0xff]
        %v793 = vld [vmem:[#allocation2 + $0x780] sm:$0xff]
        %v794 = vld [vmem:[#allocation2 + $0x788] sm:$0xff]
        %v795 = vld [vmem:[#allocation2 + $0x790] sm:$0xff]
        %v796 = vld [vmem:[#allocation2 + $0x798] sm:$0xff]
        %v797 = vld [vmem:[#allocation2 + $0x7a0] sm:$0xff]
        %v798 = vld [vmem:[#allocation2 + $0x7a8] sm:$0xff]
        %v799 = vld [vmem:[#allocation2 + $0x7b0] sm:$0xff]
        %v800 = vld [vmem:[#allocation2 + $0x7b8] sm:$0xff]
        %v801 = vld [vmem:[#allocation2 + $0x7c0] sm:$0xff]
        %v802 = vld [vmem:[#allocation2 + $0x7c8] sm:$0xff]
        %v803 = vld [vmem:[#allocation2 + $0x7d0] sm:$0xff]
        %v804 = vld [vmem:[#allocation2 + $0x7d8] sm:$0xff]
        %v805 = vld [vmem:[#allocation2 + $0x7e0] sm:$0xff]
        %v806 = vld [vmem:[#allocation2 + $0x7e8] sm:$0xff]
        %v807 = vld [vmem:[#allocation2 + $0x7f0] sm:$0xff]
        %v808 = vld [vmem:[#allocation2 + $0x7f8] sm:$0xff]
        %v809 = vld [vmem:[%s274] sm:$0xf]
        %v810 = vld [vmem:[%s274 + $0x4] sm:$0xf]
        %v811 = vld [vmem:[%s274 + $0x8] sm:$0xf]
        %v812 = vld [vmem:[%s274 + $0xc] sm:$0xf]
        %v813 = vld [vmem:[%s274 + $0x10] sm:$0xf]
        %v814 = vld [vmem:[%s274 + $0x14] sm:$0xf]
        %v815 = vld [vmem:[%s274 + $0x18] sm:$0xf]
        %v816 = vld [vmem:[%s274 + $0x1c] sm:$0xf]
        %v817 = vld [vmem:[%s274 + $0x20] sm:$0xf]
        %v818 = vld [vmem:[%s274 + $0x24] sm:$0xf]
        %v819 = vld [vmem:[%s274 + $0x28] sm:$0xf]
        %v820 = vld [vmem:[%s274 + $0x2c] sm:$0xf]
        %v821 = vld [vmem:[%s274 + $0x30] sm:$0xf]
        %v822 = vld [vmem:[%s274 + $0x34] sm:$0xf]
        %v823 = vld [vmem:[%s274 + $0x38] sm:$0xf]
        %v824 = vld [vmem:[%s274 + $0x3c] sm:$0xf]
        %v825 = vld [vmem:[%s274 + $0x40] sm:$0xf]
        %v826 = vld [vmem:[%s274 + $0x44] sm:$0xf]
        %v827 = vld [vmem:[%s274 + $0x48] sm:$0xf]
        %v828 = vld [vmem:[%s274 + $0x4c] sm:$0xf]
        %v829 = vld [vmem:[%s274 + $0x50] sm:$0xf]
        %v830 = vld [vmem:[%s274 + $0x54] sm:$0xf]
        %v831 = vld [vmem:[%s274 + $0x58] sm:$0xf]
        %v832 = vld [vmem:[%s274 + $0x5c] sm:$0xf]
        %v833 = vld [vmem:[%s274 + $0x60] sm:$0xf]
        %v834 = vld [vmem:[%s274 + $0x64] sm:$0xf]
        %v835 = vld [vmem:[%s274 + $0x68] sm:$0xf]
        %v836 = vld [vmem:[%s274 + $0x6c] sm:$0xf]
        %v837 = vld [vmem:[%s274 + $0x70] sm:$0xf]
        %v838 = vld [vmem:[%s274 + $0x74] sm:$0xf]
        %v839 = vld [vmem:[%s274 + $0x78] sm:$0xf]
        %v840 = vld [vmem:[%s274 + $0x7c] sm:$0xf]
        %v841 = vld [vmem:[%s274 + $0x80] sm:$0xf]
        %v842 = vld [vmem:[%s274 + $0x84] sm:$0xf]
        %v843 = vld [vmem:[%s274 + $0x88] sm:$0xf]
        %v844 = vld [vmem:[%s274 + $0x8c] sm:$0xf]
        %v845 = vld [vmem:[%s274 + $0x90] sm:$0xf]
        %v846 = vld [vmem:[%s274 + $0x94] sm:$0xf]
        %v847 = vld [vmem:[%s274 + $0x98] sm:$0xf]
        %v848 = vld [vmem:[%s274 + $0x9c] sm:$0xf]
        %v849 = vld [vmem:[%s274 + $0xa0] sm:$0xf]
        %v850 = vld [vmem:[%s274 + $0xa4] sm:$0xf]
        %v851 = vld [vmem:[%s274 + $0xa8] sm:$0xf]
        %v852 = vld [vmem:[%s274 + $0xac] sm:$0xf]
        %v853 = vld [vmem:[%s274 + $0xb0] sm:$0xf]
        %v854 = vld [vmem:[%s274 + $0xb4] sm:$0xf]
        %v855 = vld [vmem:[%s274 + $0xb8] sm:$0xf]
        %v856 = vld [vmem:[%s274 + $0xbc] sm:$0xf]
        %v857 = vld [vmem:[%s274 + $0xc0] sm:$0xf]
        %v858 = vld [vmem:[%s274 + $0xc4] sm:$0xf]
        %v859 = vld [vmem:[%s274 + $0xc8] sm:$0xf]
        %v860 = vld [vmem:[%s274 + $0xcc] sm:$0xf]
        %v861 = vld [vmem:[%s274 + $0xd0] sm:$0xf]
        %v862 = vld [vmem:[%s274 + $0xd4] sm:$0xf]
        %v863 = vld [vmem:[%s274 + $0xd8] sm:$0xf]
        %v864 = vld [vmem:[%s274 + $0xdc] sm:$0xf]
        %v865 = vld [vmem:[%s274 + $0xe0] sm:$0xf]
        %v866 = vld [vmem:[%s274 + $0xe4] sm:$0xf]
        %v867 = vld [vmem:[%s274 + $0xe8] sm:$0xf]
        %v868 = vld [vmem:[%s274 + $0xec] sm:$0xf]
        %v869 = vld [vmem:[%s274 + $0xf0] sm:$0xf]
        %v870 = vld [vmem:[%s274 + $0xf4] sm:$0xf]
        %v871 = vld [vmem:[%s274 + $0xf8] sm:$0xf]
        %v872 = vld [vmem:[%s274 + $0xfc] sm:$0xf]
        %v873 = vld [vmem:[%s274 + $0x100] sm:$0xf]
        %v874 = vld [vmem:[%s274 + $0x104] sm:$0xf]
        %v875 = vld [vmem:[%s274 + $0x108] sm:$0xf]
        %v876 = vld [vmem:[%s274 + $0x10c] sm:$0xf]
        %v877 = vld [vmem:[%s274 + $0x110] sm:$0xf]
        %v878 = vld [vmem:[%s274 + $0x114] sm:$0xf]
        %v879 = vld [vmem:[%s274 + $0x118] sm:$0xf]
        %v880 = vld [vmem:[%s274 + $0x11c] sm:$0xf]
        %v881 = vld [vmem:[%s274 + $0x120] sm:$0xf]
        %v882 = vld [vmem:[%s274 + $0x124] sm:$0xf]
        %v883 = vld [vmem:[%s274 + $0x128] sm:$0xf]
        %v884 = vld [vmem:[%s274 + $0x12c] sm:$0xf]
        %v885 = vld [vmem:[%s274 + $0x130] sm:$0xf]
        %v886 = vld [vmem:[%s274 + $0x134] sm:$0xf]
        %v887 = vld [vmem:[%s274 + $0x138] sm:$0xf]
        %v888 = vld [vmem:[%s274 + $0x13c] sm:$0xf]
        %v889 = vld [vmem:[%s274 + $0x140] sm:$0xf]
        %v890 = vld [vmem:[%s274 + $0x144] sm:$0xf]
        %v891 = vld [vmem:[%s274 + $0x148] sm:$0xf]
        %v892 = vld [vmem:[%s274 + $0x14c] sm:$0xf]
        %v893 = vld [vmem:[%s274 + $0x150] sm:$0xf]
        %v894 = vld [vmem:[%s274 + $0x154] sm:$0xf]
        %v895 = vld [vmem:[%s274 + $0x158] sm:$0xf]
        %v896 = vld [vmem:[%s274 + $0x15c] sm:$0xf]
        %v897 = vld [vmem:[%s274 + $0x160] sm:$0xf]
        %v898 = vld [vmem:[%s274 + $0x164] sm:$0xf]
        %v899 = vld [vmem:[%s274 + $0x168] sm:$0xf]
        %v900 = vld [vmem:[%s274 + $0x16c] sm:$0xf]
        %v901 = vld [vmem:[%s274 + $0x170] sm:$0xf]
        %v902 = vld [vmem:[%s274 + $0x174] sm:$0xf]
        %v903 = vld [vmem:[%s274 + $0x178] sm:$0xf]
        %v904 = vld [vmem:[%s274 + $0x17c] sm:$0xf]
        %v905 = vld [vmem:[%s274 + $0x180] sm:$0xf]
        %v906 = vld [vmem:[%s274 + $0x184] sm:$0xf]
        %v907 = vld [vmem:[%s274 + $0x188] sm:$0xf]
        %v908 = vld [vmem:[%s274 + $0x18c] sm:$0xf]
        %v909 = vld [vmem:[%s274 + $0x190] sm:$0xf]
        %v910 = vld [vmem:[%s274 + $0x194] sm:$0xf]
        %v911 = vld [vmem:[%s274 + $0x198] sm:$0xf]
        %v912 = vld [vmem:[%s274 + $0x19c] sm:$0xf]
        %v913 = vld [vmem:[%s274 + $0x1a0] sm:$0xf]
        %v914 = vld [vmem:[%s274 + $0x1a4] sm:$0xf]
        %v915 = vld [vmem:[%s274 + $0x1a8] sm:$0xf]
        %v916 = vld [vmem:[%s274 + $0x1ac] sm:$0xf]
        %v917 = vld [vmem:[%s274 + $0x1b0] sm:$0xf]
        %v918 = vld [vmem:[%s274 + $0x1b4] sm:$0xf]
        %v919 = vld [vmem:[%s274 + $0x1b8] sm:$0xf]
        %v920 = vld [vmem:[%s274 + $0x1bc] sm:$0xf]
        %v921 = vld [vmem:[%s274 + $0x1c0] sm:$0xf]
        %v922 = vld [vmem:[%s274 + $0x1c4] sm:$0xf]
        %v923 = vld [vmem:[%s274 + $0x1c8] sm:$0xf]
        %v924 = vld [vmem:[%s274 + $0x1cc] sm:$0xf]
        %v925 = vld [vmem:[%s274 + $0x1d0] sm:$0xf]
        %v926 = vld [vmem:[%s274 + $0x1d4] sm:$0xf]
        %v927 = vld [vmem:[%s274 + $0x1d8] sm:$0xf]
        %v928 = vld [vmem:[%s274 + $0x1dc] sm:$0xf]
        %v929 = vld [vmem:[%s274 + $0x1e0] sm:$0xf]
        %v930 = vld [vmem:[%s274 + $0x1e4] sm:$0xf]
        %v931 = vld [vmem:[%s274 + $0x1e8] sm:$0xf]
        %v932 = vld [vmem:[%s274 + $0x1ec] sm:$0xf]
        %v933 = vld [vmem:[%s274 + $0x1f0] sm:$0xf]
        %v934 = vld [vmem:[%s274 + $0x1f4] sm:$0xf]
        %v935 = vld [vmem:[%s274 + $0x1f8] sm:$0xf]
        %v936 = vld [vmem:[%s274 + $0x1fc] sm:$0xf]
        %v937 = vld [vmem:[%s274 + $0x200] sm:$0xf]
        %v938 = vld [vmem:[%s274 + $0x204] sm:$0xf]
        %v939 = vld [vmem:[%s274 + $0x208] sm:$0xf]
        %v940 = vld [vmem:[%s274 + $0x20c] sm:$0xf]
        %v941 = vld [vmem:[%s274 + $0x210] sm:$0xf]
        %v942 = vld [vmem:[%s274 + $0x214] sm:$0xf]
        %v943 = vld [vmem:[%s274 + $0x218] sm:$0xf]
        %v944 = vld [vmem:[%s274 + $0x21c] sm:$0xf]
        %v945 = vld [vmem:[%s274 + $0x220] sm:$0xf]
        %v946 = vld [vmem:[%s274 + $0x224] sm:$0xf]
        %v947 = vld [vmem:[%s274 + $0x228] sm:$0xf]
        %v948 = vld [vmem:[%s274 + $0x22c] sm:$0xf]
        %v949 = vld [vmem:[%s274 + $0x230] sm:$0xf]
        %v950 = vld [vmem:[%s274 + $0x234] sm:$0xf]
        %v951 = vld [vmem:[%s274 + $0x238] sm:$0xf]
        %v952 = vld [vmem:[%s274 + $0x23c] sm:$0xf]
        %v953 = vld [vmem:[%s274 + $0x240] sm:$0xf]
        %v954 = vld [vmem:[%s274 + $0x244] sm:$0xf]
        %v955 = vld [vmem:[%s274 + $0x248] sm:$0xf]
        %v956 = vld [vmem:[%s274 + $0x24c] sm:$0xf]
        %v957 = vld [vmem:[%s274 + $0x250] sm:$0xf]
        %v958 = vld [vmem:[%s274 + $0x254] sm:$0xf]
        %v959 = vld [vmem:[%s274 + $0x258] sm:$0xf]
        %v960 = vld [vmem:[%s274 + $0x25c] sm:$0xf]
        %v961 = vld [vmem:[%s274 + $0x260] sm:$0xf]
        %v962 = vld [vmem:[%s274 + $0x264] sm:$0xf]
        %v963 = vld [vmem:[%s274 + $0x268] sm:$0xf]
        %v964 = vld [vmem:[%s274 + $0x26c] sm:$0xf]
        %v965 = vld [vmem:[%s274 + $0x270] sm:$0xf]
        %v966 = vld [vmem:[%s274 + $0x274] sm:$0xf]
        %v967 = vld [vmem:[%s274 + $0x278] sm:$0xf]
        %v968 = vld [vmem:[%s274 + $0x27c] sm:$0xf]
        %v969 = vld [vmem:[%s274 + $0x280] sm:$0xf]
        %v970 = vld [vmem:[%s274 + $0x284] sm:$0xf]
        %v971 = vld [vmem:[%s274 + $0x288] sm:$0xf]
        %v972 = vld [vmem:[%s274 + $0x28c] sm:$0xf]
        %v973 = vld [vmem:[%s274 + $0x290] sm:$0xf]
        %v974 = vld [vmem:[%s274 + $0x294] sm:$0xf]
        %v975 = vld [vmem:[%s274 + $0x298] sm:$0xf]
        %v976 = vld [vmem:[%s274 + $0x29c] sm:$0xf]
        %v977 = vld [vmem:[%s274 + $0x2a0] sm:$0xf]
        %v978 = vld [vmem:[%s274 + $0x2a4] sm:$0xf]
        %v979 = vld [vmem:[%s274 + $0x2a8] sm:$0xf]
        %v980 = vld [vmem:[%s274 + $0x2ac] sm:$0xf]
        %v981 = vld [vmem:[%s274 + $0x2b0] sm:$0xf]
        %v982 = vld [vmem:[%s274 + $0x2b4] sm:$0xf]
        %v983 = vld [vmem:[%s274 + $0x2b8] sm:$0xf]
        %v984 = vld [vmem:[%s274 + $0x2bc] sm:$0xf]
        %v985 = vld [vmem:[%s274 + $0x2c0] sm:$0xf]
        %v986 = vld [vmem:[%s274 + $0x2c4] sm:$0xf]
        %v987 = vld [vmem:[%s274 + $0x2c8] sm:$0xf]
        %v988 = vld [vmem:[%s274 + $0x2cc] sm:$0xf]
        %v989 = vld [vmem:[%s274 + $0x2d0] sm:$0xf]
        %v990 = vld [vmem:[%s274 + $0x2d4] sm:$0xf]
        %v991 = vld [vmem:[%s274 + $0x2d8] sm:$0xf]
        %v992 = vld [vmem:[%s274 + $0x2dc] sm:$0xf]
        %v993 = vld [vmem:[%s274 + $0x2e0] sm:$0xf]
        %v994 = vld [vmem:[%s274 + $0x2e4] sm:$0xf]
        %v995 = vld [vmem:[%s274 + $0x2e8] sm:$0xf]
        %v996 = vld [vmem:[%s274 + $0x2ec] sm:$0xf]
        %v997 = vld [vmem:[%s274 + $0x2f0] sm:$0xf]
        %v998 = vld [vmem:[%s274 + $0x2f4] sm:$0xf]
        %v999 = vld [vmem:[%s274 + $0x2f8] sm:$0xf]
        %v1000 = vld [vmem:[%s274 + $0x2fc] sm:$0xf]
        %v1001 = vld [vmem:[%s274 + $0x300] sm:$0xf]
        %v1002 = vld [vmem:[%s274 + $0x304] sm:$0xf]
        %v1003 = vld [vmem:[%s274 + $0x308] sm:$0xf]
        %v1004 = vld [vmem:[%s274 + $0x30c] sm:$0xf]
        %v1005 = vld [vmem:[%s274 + $0x310] sm:$0xf]
        %v1006 = vld [vmem:[%s274 + $0x314] sm:$0xf]
        %v1007 = vld [vmem:[%s274 + $0x318] sm:$0xf]
        %v1008 = vld [vmem:[%s274 + $0x31c] sm:$0xf]
        %v1009 = vld [vmem:[%s274 + $0x320] sm:$0xf]
        %v1010 = vld [vmem:[%s274 + $0x324] sm:$0xf]
        %v1011 = vld [vmem:[%s274 + $0x328] sm:$0xf]
        %v1012 = vld [vmem:[%s274 + $0x32c] sm:$0xf]
        %v1013 = vld [vmem:[%s274 + $0x330] sm:$0xf]
        %v1014 = vld [vmem:[%s274 + $0x334] sm:$0xf]
        %v1015 = vld [vmem:[%s274 + $0x338] sm:$0xf]
        %v1016 = vld [vmem:[%s274 + $0x33c] sm:$0xf]
        %v1017 = vld [vmem:[%s274 + $0x340] sm:$0xf]
        %v1018 = vld [vmem:[%s274 + $0x344] sm:$0xf]
        %v1019 = vld [vmem:[%s274 + $0x348] sm:$0xf]
        %v1020 = vld [vmem:[%s274 + $0x34c] sm:$0xf]
        %v1021 = vld [vmem:[%s274 + $0x350] sm:$0xf]
        %v1022 = vld [vmem:[%s274 + $0x354] sm:$0xf]
        %v1023 = vld [vmem:[%s274 + $0x358] sm:$0xf]
        %v1024 = vld [vmem:[%s274 + $0x35c] sm:$0xf]
        %v1025 = vld [vmem:[%s274 + $0x360] sm:$0xf]
        %v1026 = vld [vmem:[%s274 + $0x364] sm:$0xf]
        %v1027 = vld [vmem:[%s274 + $0x368] sm:$0xf]
        %v1028 = vld [vmem:[%s274 + $0x36c] sm:$0xf]
        %v1029 = vld [vmem:[%s274 + $0x370] sm:$0xf]
        %v1030 = vld [vmem:[%s274 + $0x374] sm:$0xf]
        %v1031 = vld [vmem:[%s274 + $0x378] sm:$0xf]
        %v1032 = vld [vmem:[%s274 + $0x37c] sm:$0xf]
        %v1033 = vld [vmem:[%s274 + $0x380] sm:$0xf]
        %v1034 = vld [vmem:[%s274 + $0x384] sm:$0xf]
        %v1035 = vld [vmem:[%s274 + $0x388] sm:$0xf]
        %v1036 = vld [vmem:[%s274 + $0x38c] sm:$0xf]
        %v1037 = vld [vmem:[%s274 + $0x390] sm:$0xf]
        %v1038 = vld [vmem:[%s274 + $0x394] sm:$0xf]
        %v1039 = vld [vmem:[%s274 + $0x398] sm:$0xf]
        %v1040 = vld [vmem:[%s274 + $0x39c] sm:$0xf]
        %v1041 = vld [vmem:[%s274 + $0x3a0] sm:$0xf]
        %v1042 = vld [vmem:[%s274 + $0x3a4] sm:$0xf]
        %v1043 = vld [vmem:[%s274 + $0x3a8] sm:$0xf]
        %v1044 = vld [vmem:[%s274 + $0x3ac] sm:$0xf]
        %v1045 = vld [vmem:[%s274 + $0x3b0] sm:$0xf]
        %v1046 = vld [vmem:[%s274 + $0x3b4] sm:$0xf]
        %v1047 = vld [vmem:[%s274 + $0x3b8] sm:$0xf]
        %v1048 = vld [vmem:[%s274 + $0x3bc] sm:$0xf]
        %v1049 = vld [vmem:[%s274 + $0x3c0] sm:$0xf]
        %v1050 = vld [vmem:[%s274 + $0x3c4] sm:$0xf]
        %v1051 = vld [vmem:[%s274 + $0x3c8] sm:$0xf]
        %v1052 = vld [vmem:[%s274 + $0x3cc] sm:$0xf]
        %v1053 = vld [vmem:[%s274 + $0x3d0] sm:$0xf]
        %v1054 = vld [vmem:[%s274 + $0x3d4] sm:$0xf]
        %v1055 = vld [vmem:[%s274 + $0x3d8] sm:$0xf]
        %v1056 = vld [vmem:[%s274 + $0x3dc] sm:$0xf]
        %v1057 = vld [vmem:[%s274 + $0x3e0] sm:$0xf]
        %v1058 = vld [vmem:[%s274 + $0x3e4] sm:$0xf]
        %v1059 = vld [vmem:[%s274 + $0x3e8] sm:$0xf]
        %v1060 = vld [vmem:[%s274 + $0x3ec] sm:$0xf]
        %v1061 = vld [vmem:[%s274 + $0x3f0] sm:$0xf]
        %v1062 = vld [vmem:[%s274 + $0x3f4] sm:$0xf]
        %v1063 = vld [vmem:[%s274 + $0x3f8] sm:$0xf]
        %v1064 = vld [vmem:[%s274 + $0x3fc] sm:$0xf]
        %v1065 = vld [vmem:[%s283] sm:$0xf]
        %v1066 = vld [vmem:[%s283 + $0x4] sm:$0xf]
        %v1067 = vld [vmem:[%s283 + $0x8] sm:$0xf]
        %v1068 = vld [vmem:[%s283 + $0xc] sm:$0xf]
        %v1069 = vld [vmem:[%s283 + $0x10] sm:$0xf]
        %v1070 = vld [vmem:[%s283 + $0x14] sm:$0xf]
        %v1071 = vld [vmem:[%s283 + $0x18] sm:$0xf]
        %v1072 = vld [vmem:[%s283 + $0x1c] sm:$0xf]
        %v1073 = vld [vmem:[%s283 + $0x20] sm:$0xf]
        %v1074 = vld [vmem:[%s283 + $0x24] sm:$0xf]
        %v1075 = vld [vmem:[%s283 + $0x28] sm:$0xf]
        %v1076 = vld [vmem:[%s283 + $0x2c] sm:$0xf]
        %v1077 = vld [vmem:[%s283 + $0x30] sm:$0xf]
        %v1078 = vld [vmem:[%s283 + $0x34] sm:$0xf]
        %v1079 = vld [vmem:[%s283 + $0x38] sm:$0xf]
        %v1080 = vld [vmem:[%s283 + $0x3c] sm:$0xf]
        %v1337 = vunpack.c.l.b16 %v809
        %v1338 = vunpack.c.l.b16 %v810
        %v1339 = vunpack.c.l.b16 %v811
        %v1340 = vunpack.c.l.b16 %v812
        %v1341 = vunpack.c.l.b16 %v813
        %v1342 = vunpack.c.l.b16 %v814
        %v1343 = vunpack.c.l.b16 %v815
        %v1344 = vunpack.c.l.b16 %v816
        %v1345 = vunpack.c.l.b16 %v817
        %v1346 = vunpack.c.l.b16 %v818
        %v1347 = vunpack.c.l.b16 %v819
        %v1348 = vunpack.c.l.b16 %v820
        %v1349 = vunpack.c.l.b16 %v821
        %v1350 = vunpack.c.l.b16 %v822
        %v1351 = vunpack.c.l.b16 %v823
        %v1352 = vunpack.c.l.b16 %v824
        %v1353 = vunpack.c.l.b16 %v825
        %v1354 = vunpack.c.l.b16 %v826
        %v1355 = vunpack.c.l.b16 %v827
        %v1356 = vunpack.c.l.b16 %v828
        %v1357 = vunpack.c.l.b16 %v829
        %v1358 = vunpack.c.l.b16 %v830
        %v1359 = vunpack.c.l.b16 %v831
        %v1360 = vunpack.c.l.b16 %v832
        %v1361 = vunpack.c.l.b16 %v833
        %v1362 = vunpack.c.l.b16 %v834
        %v1363 = vunpack.c.l.b16 %v835
        %v1364 = vunpack.c.l.b16 %v836
        %v1365 = vunpack.c.l.b16 %v837
        %v1366 = vunpack.c.l.b16 %v838
        %v1367 = vunpack.c.l.b16 %v839
        %v1368 = vunpack.c.l.b16 %v840
        %v1369 = vunpack.c.l.b16 %v841
        %v1370 = vunpack.c.l.b16 %v842
        %v1371 = vunpack.c.l.b16 %v843
        %v1372 = vunpack.c.l.b16 %v844
        %v1373 = vunpack.c.l.b16 %v845
        %v1374 = vunpack.c.l.b16 %v846
        %v1375 = vunpack.c.l.b16 %v847
        %v1376 = vunpack.c.l.b16 %v848
        %v1377 = vunpack.c.l.b16 %v849
        %v1378 = vunpack.c.l.b16 %v850
        %v1379 = vunpack.c.l.b16 %v851
        %v1380 = vunpack.c.l.b16 %v852
        %v1381 = vunpack.c.l.b16 %v853
        %v1382 = vunpack.c.l.b16 %v854
        %v1383 = vunpack.c.l.b16 %v855
        %v1384 = vunpack.c.l.b16 %v856
        %v1385 = vunpack.c.l.b16 %v857
        %v1386 = vunpack.c.l.b16 %v858
        %v1387 = vunpack.c.l.b16 %v859
        %v1388 = vunpack.c.l.b16 %v860
        %v1389 = vunpack.c.l.b16 %v861
        %v1390 = vunpack.c.l.b16 %v862
        %v1391 = vunpack.c.l.b16 %v863
        %v1392 = vunpack.c.l.b16 %v864
        %v1393 = vunpack.c.l.b16 %v865
        %v1394 = vunpack.c.l.b16 %v866
        %v1395 = vunpack.c.l.b16 %v867
        %v1396 = vunpack.c.l.b16 %v868
        %v1397 = vunpack.c.l.b16 %v869
        %v1398 = vunpack.c.l.b16 %v870
        %v1399 = vunpack.c.l.b16 %v871
        %v1400 = vunpack.c.l.b16 %v872
        %v1401 = vunpack.c.l.b16 %v873
        %v1402 = vunpack.c.l.b16 %v874
        %v1403 = vunpack.c.l.b16 %v875
        %v1404 = vunpack.c.l.b16 %v876
        %v1405 = vunpack.c.l.b16 %v877
        %v1406 = vunpack.c.l.b16 %v878
        %v1407 = vunpack.c.l.b16 %v879
        %v1408 = vunpack.c.l.b16 %v880
        %v1409 = vunpack.c.l.b16 %v881
        %v1410 = vunpack.c.l.b16 %v882
        %v1411 = vunpack.c.l.b16 %v883
        %v1412 = vunpack.c.l.b16 %v884
        %v1413 = vunpack.c.l.b16 %v885
        %v1414 = vunpack.c.l.b16 %v886
        %v1415 = vunpack.c.l.b16 %v887
        %v1416 = vunpack.c.l.b16 %v888
        %v1417 = vunpack.c.l.b16 %v889
        %v1418 = vunpack.c.l.b16 %v890
        %v1419 = vunpack.c.l.b16 %v891
        %v1420 = vunpack.c.l.b16 %v892
        %v1421 = vunpack.c.l.b16 %v893
        %v1422 = vunpack.c.l.b16 %v894
        %v1423 = vunpack.c.l.b16 %v895
        %v1424 = vunpack.c.l.b16 %v896
        %v1425 = vunpack.c.l.b16 %v897
        %v1426 = vunpack.c.l.b16 %v898
        %v1427 = vunpack.c.l.b16 %v899
        %v1428 = vunpack.c.l.b16 %v900
        %v1429 = vunpack.c.l.b16 %v901
        %v1430 = vunpack.c.l.b16 %v902
        %v1431 = vunpack.c.l.b16 %v903
        %v1432 = vunpack.c.l.b16 %v904
        %v1433 = vunpack.c.l.b16 %v905
        %v1434 = vunpack.c.l.b16 %v906
        %v1435 = vunpack.c.l.b16 %v907
        %v1436 = vunpack.c.l.b16 %v908
        %v1437 = vunpack.c.l.b16 %v909
        %v1438 = vunpack.c.l.b16 %v910
        %v1439 = vunpack.c.l.b16 %v911
        %v1440 = vunpack.c.l.b16 %v912
        %v1441 = vunpack.c.l.b16 %v913
        %v1442 = vunpack.c.l.b16 %v914
        %v1443 = vunpack.c.l.b16 %v915
        %v1444 = vunpack.c.l.b16 %v916
        %v1445 = vunpack.c.l.b16 %v917
        %v1446 = vunpack.c.l.b16 %v918
        %v1447 = vunpack.c.l.b16 %v919
        %v1448 = vunpack.c.l.b16 %v920
        %v1449 = vunpack.c.l.b16 %v921
        %v1450 = vunpack.c.l.b16 %v922
        %v1451 = vunpack.c.l.b16 %v923
        %v1452 = vunpack.c.l.b16 %v924
        %v1453 = vunpack.c.l.b16 %v925
        %v1454 = vunpack.c.l.b16 %v926
        %v1455 = vunpack.c.l.b16 %v927
        %v1456 = vunpack.c.l.b16 %v928
        %v1457 = vunpack.c.l.b16 %v929
        %v1458 = vunpack.c.l.b16 %v930
        %v1459 = vunpack.c.l.b16 %v931
        %v1460 = vunpack.c.l.b16 %v932
        %v1461 = vunpack.c.l.b16 %v933
        %v1462 = vunpack.c.l.b16 %v934
        %v1463 = vunpack.c.l.b16 %v935
        %v1464 = vunpack.c.l.b16 %v936
        %v1465 = vunpack.c.l.b16 %v937
        %v1466 = vunpack.c.l.b16 %v938
        %v1467 = vunpack.c.l.b16 %v939
        %v1468 = vunpack.c.l.b16 %v940
        %v1469 = vunpack.c.l.b16 %v941
        %v1470 = vunpack.c.l.b16 %v942
        %v1471 = vunpack.c.l.b16 %v943
        %v1472 = vunpack.c.l.b16 %v944
        %v1473 = vunpack.c.l.b16 %v945
        %v1474 = vunpack.c.l.b16 %v946
        %v1475 = vunpack.c.l.b16 %v947
        %v1476 = vunpack.c.l.b16 %v948
        %v1477 = vunpack.c.l.b16 %v949
        %v1478 = vunpack.c.l.b16 %v950
        %v1479 = vunpack.c.l.b16 %v951
        %v1480 = vunpack.c.l.b16 %v952
        %v1481 = vunpack.c.l.b16 %v953
        %v1482 = vunpack.c.l.b16 %v954
        %v1483 = vunpack.c.l.b16 %v955
        %v1484 = vunpack.c.l.b16 %v956
        %v1485 = vunpack.c.l.b16 %v957
        %v1486 = vunpack.c.l.b16 %v958
        %v1487 = vunpack.c.l.b16 %v959
        %v1488 = vunpack.c.l.b16 %v960
        %v1489 = vunpack.c.l.b16 %v961
        %v1490 = vunpack.c.l.b16 %v962
        %v1491 = vunpack.c.l.b16 %v963
        %v1492 = vunpack.c.l.b16 %v964
        %v1493 = vunpack.c.l.b16 %v965
        %v1494 = vunpack.c.l.b16 %v966
        %v1495 = vunpack.c.l.b16 %v967
        %v1496 = vunpack.c.l.b16 %v968
        %v1497 = vunpack.c.l.b16 %v969
        %v1498 = vunpack.c.l.b16 %v970
        %v1499 = vunpack.c.l.b16 %v971
        %v1500 = vunpack.c.l.b16 %v972
        %v1501 = vunpack.c.l.b16 %v973
        %v1502 = vunpack.c.l.b16 %v974
        %v1503 = vunpack.c.l.b16 %v975
        %v1504 = vunpack.c.l.b16 %v976
        %v1505 = vunpack.c.l.b16 %v977
        %v1506 = vunpack.c.l.b16 %v978
        %v1507 = vunpack.c.l.b16 %v979
        %v1508 = vunpack.c.l.b16 %v980
        %v1509 = vunpack.c.l.b16 %v981
        %v1510 = vunpack.c.l.b16 %v982
        %v1511 = vunpack.c.l.b16 %v983
        %v1512 = vunpack.c.l.b16 %v984
        %v1513 = vunpack.c.l.b16 %v985
        %v1514 = vunpack.c.l.b16 %v986
        %v1515 = vunpack.c.l.b16 %v987
        %v1516 = vunpack.c.l.b16 %v988
        %v1517 = vunpack.c.l.b16 %v989
        %v1518 = vunpack.c.l.b16 %v990
        %v1519 = vunpack.c.l.b16 %v991
        %v1520 = vunpack.c.l.b16 %v992
        %v1521 = vunpack.c.l.b16 %v993
        %v1522 = vunpack.c.l.b16 %v994
        %v1523 = vunpack.c.l.b16 %v995
        %v1524 = vunpack.c.l.b16 %v996
        %v1525 = vunpack.c.l.b16 %v997
        %v1526 = vunpack.c.l.b16 %v998
        %v1527 = vunpack.c.l.b16 %v999
        %v1528 = vunpack.c.l.b16 %v1000
        %v1529 = vunpack.c.l.b16 %v1001
        %v1530 = vunpack.c.l.b16 %v1002
        %v1531 = vunpack.c.l.b16 %v1003
        %v1532 = vunpack.c.l.b16 %v1004
        %v1533 = vunpack.c.l.b16 %v1005
        %v1534 = vunpack.c.l.b16 %v1006
        %v1535 = vunpack.c.l.b16 %v1007
        %v1536 = vunpack.c.l.b16 %v1008
        %v1537 = vunpack.c.l.b16 %v1009
        %v1538 = vunpack.c.l.b16 %v1010
        %v1539 = vunpack.c.l.b16 %v1011
        %v1540 = vunpack.c.l.b16 %v1012
        %v1541 = vunpack.c.l.b16 %v1013
        %v1542 = vunpack.c.l.b16 %v1014
        %v1543 = vunpack.c.l.b16 %v1015
        %v1544 = vunpack.c.l.b16 %v1016
        %v1545 = vunpack.c.l.b16 %v1017
        %v1546 = vunpack.c.l.b16 %v1018
        %v1547 = vunpack.c.l.b16 %v1019
        %v1548 = vunpack.c.l.b16 %v1020
        %v1549 = vunpack.c.l.b16 %v1021
        %v1550 = vunpack.c.l.b16 %v1022
        %v1551 = vunpack.c.l.b16 %v1023
        %v1552 = vunpack.c.l.b16 %v1024
        %v1553 = vunpack.c.l.b16 %v1025
        %v1554 = vunpack.c.l.b16 %v1026
        %v1555 = vunpack.c.l.b16 %v1027
        %v1556 = vunpack.c.l.b16 %v1028
        %v1557 = vunpack.c.l.b16 %v1029
        %v1558 = vunpack.c.l.b16 %v1030
        %v1559 = vunpack.c.l.b16 %v1031
        %v1560 = vunpack.c.l.b16 %v1032
        %v1561 = vunpack.c.l.b16 %v1033
        %v1562 = vunpack.c.l.b16 %v1034
        %v1563 = vunpack.c.l.b16 %v1035
        %v1564 = vunpack.c.l.b16 %v1036
        %v1565 = vunpack.c.l.b16 %v1037
        %v1566 = vunpack.c.l.b16 %v1038
        %v1567 = vunpack.c.l.b16 %v1039
        %v1568 = vunpack.c.l.b16 %v1040
        %v1569 = vunpack.c.l.b16 %v1041
        %v1570 = vunpack.c.l.b16 %v1042
        %v1571 = vunpack.c.l.b16 %v1043
        %v1572 = vunpack.c.l.b16 %v1044
        %v1573 = vunpack.c.l.b16 %v1045
        %v1574 = vunpack.c.l.b16 %v1046
        %v1575 = vunpack.c.l.b16 %v1047
        %v1576 = vunpack.c.l.b16 %v1048
        %v1577 = vunpack.c.l.b16 %v1049
        %v1578 = vunpack.c.l.b16 %v1050
        %v1579 = vunpack.c.l.b16 %v1051
        %v1580 = vunpack.c.l.b16 %v1052
        %v1581 = vunpack.c.l.b16 %v1053
        %v1582 = vunpack.c.l.b16 %v1054
        %v1583 = vunpack.c.l.b16 %v1055
        %v1584 = vunpack.c.l.b16 %v1056
        %v1585 = vunpack.c.l.b16 %v1057
        %v1586 = vunpack.c.l.b16 %v1058
        %v1587 = vunpack.c.l.b16 %v1059
        %v1588 = vunpack.c.l.b16 %v1060
        %v1589 = vunpack.c.l.b16 %v1061
        %v1590 = vunpack.c.l.b16 %v1062
        %v1591 = vunpack.c.l.b16 %v1063
        %v1592 = vunpack.c.l.b16 %v1064
        %v1593 = vpack.c.b16 %v1338, %v1337
        %v1594 = vpack.c.b16 %v1340, %v1339
        %v1595 = vpack.c.b16 %v1342, %v1341
        %v1596 = vpack.c.b16 %v1344, %v1343
        %v1597 = vpack.c.b16 %v1346, %v1345
        %v1598 = vpack.c.b16 %v1348, %v1347
        %v1599 = vpack.c.b16 %v1350, %v1349
        %v1600 = vpack.c.b16 %v1352, %v1351
        %v1601 = vpack.c.b16 %v1354, %v1353
        %v1602 = vpack.c.b16 %v1356, %v1355
        %v1603 = vpack.c.b16 %v1358, %v1357
        %v1604 = vpack.c.b16 %v1360, %v1359
        %v1605 = vpack.c.b16 %v1362, %v1361
        %v1606 = vpack.c.b16 %v1364, %v1363
        %v1607 = vpack.c.b16 %v1366, %v1365
        %v1608 = vpack.c.b16 %v1368, %v1367
        %v1609 = vpack.c.b16 %v1370, %v1369
        %v1610 = vpack.c.b16 %v1372, %v1371
        %v1611 = vpack.c.b16 %v1374, %v1373
        %v1612 = vpack.c.b16 %v1376, %v1375
        %v1613 = vpack.c.b16 %v1378, %v1377
        %v1614 = vpack.c.b16 %v1380, %v1379
        %v1615 = vpack.c.b16 %v1382, %v1381
        %v1616 = vpack.c.b16 %v1384, %v1383
        %v1617 = vpack.c.b16 %v1386, %v1385
        %v1618 = vpack.c.b16 %v1388, %v1387
        %v1619 = vpack.c.b16 %v1390, %v1389
        %v1620 = vpack.c.b16 %v1392, %v1391
        %v1621 = vpack.c.b16 %v1394, %v1393
        %v1622 = vpack.c.b16 %v1396, %v1395
        %v1623 = vpack.c.b16 %v1398, %v1397
        %v1624 = vpack.c.b16 %v1400, %v1399
        %v1625 = vpack.c.b16 %v1402, %v1401
        %v1626 = vpack.c.b16 %v1404, %v1403
        %v1627 = vpack.c.b16 %v1406, %v1405
        %v1628 = vpack.c.b16 %v1408, %v1407
        %v1629 = vpack.c.b16 %v1410, %v1409
        %v1630 = vpack.c.b16 %v1412, %v1411
        %v1631 = vpack.c.b16 %v1414, %v1413
        %v1632 = vpack.c.b16 %v1416, %v1415
        %v1633 = vpack.c.b16 %v1418, %v1417
        %v1634 = vpack.c.b16 %v1420, %v1419
        %v1635 = vpack.c.b16 %v1422, %v1421
        %v1636 = vpack.c.b16 %v1424, %v1423
        %v1637 = vpack.c.b16 %v1426, %v1425
        %v1638 = vpack.c.b16 %v1428, %v1427
        %v1639 = vpack.c.b16 %v1430, %v1429
        %v1640 = vpack.c.b16 %v1432, %v1431
        %v1641 = vpack.c.b16 %v1434, %v1433
        %v1642 = vpack.c.b16 %v1436, %v1435
        %v1643 = vpack.c.b16 %v1438, %v1437
        %v1644 = vpack.c.b16 %v1440, %v1439
        %v1645 = vpack.c.b16 %v1442, %v1441
        %v1646 = vpack.c.b16 %v1444, %v1443
        %v1647 = vpack.c.b16 %v1446, %v1445
        %v1648 = vpack.c.b16 %v1448, %v1447
        %v1649 = vpack.c.b16 %v1450, %v1449
        %v1650 = vpack.c.b16 %v1452, %v1451
        %v1651 = vpack.c.b16 %v1454, %v1453
        %v1652 = vpack.c.b16 %v1456, %v1455
        %v1653 = vpack.c.b16 %v1458, %v1457
        %v1654 = vpack.c.b16 %v1460, %v1459
        %v1655 = vpack.c.b16 %v1462, %v1461
        %v1656 = vpack.c.b16 %v1464, %v1463
        %v1657 = vpack.c.b16 %v1466, %v1465
        %v1658 = vpack.c.b16 %v1468, %v1467
        %v1659 = vpack.c.b16 %v1470, %v1469
        %v1660 = vpack.c.b16 %v1472, %v1471
        %v1661 = vpack.c.b16 %v1474, %v1473
        %v1662 = vpack.c.b16 %v1476, %v1475
        %v1663 = vpack.c.b16 %v1478, %v1477
        %v1664 = vpack.c.b16 %v1480, %v1479
        %v1665 = vpack.c.b16 %v1482, %v1481
        %v1666 = vpack.c.b16 %v1484, %v1483
        %v1667 = vpack.c.b16 %v1486, %v1485
        %v1668 = vpack.c.b16 %v1488, %v1487
        %v1669 = vpack.c.b16 %v1490, %v1489
        %v1670 = vpack.c.b16 %v1492, %v1491
        %v1671 = vpack.c.b16 %v1494, %v1493
        %v1672 = vpack.c.b16 %v1496, %v1495
        %v1673 = vpack.c.b16 %v1498, %v1497
        %v1674 = vpack.c.b16 %v1500, %v1499
        %v1675 = vpack.c.b16 %v1502, %v1501
        %v1676 = vpack.c.b16 %v1504, %v1503
        %v1677 = vpack.c.b16 %v1506, %v1505
        %v1678 = vpack.c.b16 %v1508, %v1507
        %v1679 = vpack.c.b16 %v1510, %v1509
        %v1680 = vpack.c.b16 %v1512, %v1511
        %v1681 = vpack.c.b16 %v1514, %v1513
        %v1682 = vpack.c.b16 %v1516, %v1515
        %v1683 = vpack.c.b16 %v1518, %v1517
        %v1684 = vpack.c.b16 %v1520, %v1519
        %v1685 = vpack.c.b16 %v1522, %v1521
        %v1686 = vpack.c.b16 %v1524, %v1523
        %v1687 = vpack.c.b16 %v1526, %v1525
        %v1688 = vpack.c.b16 %v1528, %v1527
        %v1689 = vpack.c.b16 %v1530, %v1529
        %v1690 = vpack.c.b16 %v1532, %v1531
        %v1691 = vpack.c.b16 %v1534, %v1533
        %v1692 = vpack.c.b16 %v1536, %v1535
        %v1693 = vpack.c.b16 %v1538, %v1537
        %v1694 = vpack.c.b16 %v1540, %v1539
        %v1695 = vpack.c.b16 %v1542, %v1541
        %v1696 = vpack.c.b16 %v1544, %v1543
        %v1697 = vpack.c.b16 %v1546, %v1545
        %v1698 = vpack.c.b16 %v1548, %v1547
        %v1699 = vpack.c.b16 %v1550, %v1549
        %v1700 = vpack.c.b16 %v1552, %v1551
        %v1701 = vpack.c.b16 %v1554, %v1553
        %v1702 = vpack.c.b16 %v1556, %v1555
        %v1703 = vpack.c.b16 %v1558, %v1557
        %v1704 = vpack.c.b16 %v1560, %v1559
        %v1705 = vpack.c.b16 %v1562, %v1561
        %v1706 = vpack.c.b16 %v1564, %v1563
        %v1707 = vpack.c.b16 %v1566, %v1565
        %v1708 = vpack.c.b16 %v1568, %v1567
        %v1709 = vpack.c.b16 %v1570, %v1569
        %v1710 = vpack.c.b16 %v1572, %v1571
        %v1711 = vpack.c.b16 %v1574, %v1573
        %v1712 = vpack.c.b16 %v1576, %v1575
        %v1713 = vpack.c.b16 %v1578, %v1577
        %v1714 = vpack.c.b16 %v1580, %v1579
        %v1715 = vpack.c.b16 %v1582, %v1581
        %v1716 = vpack.c.b16 %v1584, %v1583
        %v1717 = vpack.c.b16 %v1586, %v1585
        %v1718 = vpack.c.b16 %v1588, %v1587
        %v1719 = vpack.c.b16 %v1590, %v1589
        %v1720 = vpack.c.b16 %v1592, %v1591
        %v1865 = vunpack.c.l.b16 %v1065
        %v1866 = vunpack.c.l.b16 %v1066
        %v1867 = vunpack.c.l.b16 %v1067
        %v1868 = vunpack.c.l.b16 %v1068
        %v1869 = vunpack.c.l.b16 %v1069
        %v1870 = vunpack.c.l.b16 %v1070
        %v1871 = vunpack.c.l.b16 %v1071
        %v1872 = vunpack.c.l.b16 %v1072
        %v1873 = vunpack.c.l.b16 %v1073
        %v1874 = vunpack.c.l.b16 %v1074
        %v1875 = vunpack.c.l.b16 %v1075
        %v1876 = vunpack.c.l.b16 %v1076
        %v1877 = vunpack.c.l.b16 %v1077
        %v1878 = vunpack.c.l.b16 %v1078
        %v1879 = vunpack.c.l.b16 %v1079
        %v1880 = vunpack.c.l.b16 %v1080
        %v1881 = vpack.c.b16 %v1866, %v1865
        %v1882 = vpack.c.b16 %v1868, %v1867
        %v1883 = vpack.c.b16 %v1870, %v1869
        %v1884 = vpack.c.b16 %v1872, %v1871
        %v1885 = vpack.c.b16 %v1874, %v1873
        %v1886 = vpack.c.b16 %v1876, %v1875
        %v1887 = vpack.c.b16 %v1878, %v1877
        %v1888 = vpack.c.b16 %v1880, %v1879
        %1897 = vmatpush.bf16.msra.mxu0 %v1888
        %1898 = vmatpush.bf16.msra.mxu0 %v1887
        %1899 = vmatpush.bf16.msra.mxu0 %v1886
        %1900 = vmatpush.bf16.msra.mxu0 %v1885
        %1901 = vmatpush.bf16.msra.mxu0 %v1884
        %1902 = vmatpush.bf16.msra.mxu0 %v1883
        %1903 = vmatpush.bf16.msra.mxu0 %v1882
        %1904 = vmatpush.bf16.msra.mxu0 %v1881
        %1905 = vmatmul.bf16.gmra.mxu0 %v1593
        %v1906 = vpop.f32.mrf.mxu0
        %v1907 = vadd.f32 0.0, %v1906
        %v1908 = vpop.f32.mrf.mxu0
        %v1909 = vadd.f32 0.0, %v1908
        %1910 = vmatmul.bf16.gmra.mxu0 %v1594
        %v1911 = vpop.f32.mrf.mxu0
        %v1912 = vadd.f32 0.0, %v1911
        %v1913 = vpop.f32.mrf.mxu0
        %v1914 = vadd.f32 0.0, %v1913
        %1915 = vmatmul.bf16.gmra.mxu0 %v1595
        %v1916 = vpop.f32.mrf.mxu0
        %v1917 = vadd.f32 0.0, %v1916
        %v1918 = vpop.f32.mrf.mxu0
        %v1919 = vadd.f32 0.0, %v1918
        %1920 = vmatmul.bf16.gmra.mxu0 %v1596
        %v1921 = vpop.f32.mrf.mxu0
        %v1922 = vadd.f32 0.0, %v1921
        %v1923 = vpop.f32.mrf.mxu0
        %v1924 = vadd.f32 0.0, %v1923
        %1925 = vmatmul.bf16.gmra.mxu0 %v1597
        %v1926 = vpop.f32.mrf.mxu0
        %v1927 = vadd.f32 0.0, %v1926
        %v1928 = vpop.f32.mrf.mxu0
        %v1929 = vadd.f32 0.0, %v1928
        %1930 = vmatmul.bf16.gmra.mxu0 %v1598
        %v1931 = vpop.f32.mrf.mxu0
        %v1932 = vadd.f32 0.0, %v1931
        %v1933 = vpop.f32.mrf.mxu0
        %v1934 = vadd.f32 0.0, %v1933
        %1935 = vmatmul.bf16.gmra.mxu0 %v1599
        %v1936 = vpop.f32.mrf.mxu0
        %v1937 = vadd.f32 0.0, %v1936
        %v1938 = vpop.f32.mrf.mxu0
        %v1939 = vadd.f32 0.0, %v1938
        %1940 = vmatmul.bf16.gmra.mxu0 %v1600
        %v1941 = vpop.f32.mrf.mxu0
        %v1942 = vadd.f32 0.0, %v1941
        %v1943 = vpop.f32.mrf.mxu0
        %v1944 = vadd.f32 0.0, %v1943
        %1945 = vmatmul.bf16.gmra.mxu0 %v1601
        %v1946 = vpop.f32.mrf.mxu0
        %v1947 = vadd.f32 0.0, %v1946
        %v1948 = vpop.f32.mrf.mxu0
        %v1949 = vadd.f32 0.0, %v1948
        %1950 = vmatmul.bf16.gmra.mxu0 %v1602
        %v1951 = vpop.f32.mrf.mxu0
        %v1952 = vadd.f32 0.0, %v1951
        %v1953 = vpop.f32.mrf.mxu0
        %v1954 = vadd.f32 0.0, %v1953
        %1955 = vmatmul.bf16.gmra.mxu0 %v1603
        %v1956 = vpop.f32.mrf.mxu0
        %v1957 = vadd.f32 0.0, %v1956
        %v1958 = vpop.f32.mrf.mxu0
        %v1959 = vadd.f32 0.0, %v1958
        %1960 = vmatmul.bf16.gmra.mxu0 %v1604
        %v1961 = vpop.f32.mrf.mxu0
        %v1962 = vadd.f32 0.0, %v1961
        %v1963 = vpop.f32.mrf.mxu0
        %v1964 = vadd.f32 0.0, %v1963
        %1965 = vmatmul.bf16.gmra.mxu0 %v1605
        %v1966 = vpop.f32.mrf.mxu0
        %v1967 = vadd.f32 0.0, %v1966
        %v1968 = vpop.f32.mrf.mxu0
        %v1969 = vadd.f32 0.0, %v1968
        %1970 = vmatmul.bf16.gmra.mxu0 %v1606
        %v1971 = vpop.f32.mrf.mxu0
        %v1972 = vadd.f32 0.0, %v1971
        %v1973 = vpop.f32.mrf.mxu0
        %v1974 = vadd.f32 0.0, %v1973
        %1975 = vmatmul.bf16.gmra.mxu0 %v1607
        %v1976 = vpop.f32.mrf.mxu0
        %v1977 = vadd.f32 0.0, %v1976
        %v1978 = vpop.f32.mrf.mxu0
        %v1979 = vadd.f32 0.0, %v1978
        %1980 = vmatmul.bf16.gmra.mxu0 %v1608
        %v1981 = vpop.f32.mrf.mxu0
        %v1982 = vadd.f32 0.0, %v1981
        %v1983 = vpop.f32.mrf.mxu0
        %v1984 = vadd.f32 0.0, %v1983
        %1985 = vmatmul.bf16.gmra.mxu0 %v1609
        %v1986 = vpop.f32.mrf.mxu0
        %v1987 = vadd.f32 0.0, %v1986
        %v1988 = vpop.f32.mrf.mxu0
        %v1989 = vadd.f32 0.0, %v1988
        %1990 = vmatmul.bf16.gmra.mxu0 %v1610
        %v1991 = vpop.f32.mrf.mxu0
        %v1992 = vadd.f32 0.0, %v1991
        %v1993 = vpop.f32.mrf.mxu0
        %v1994 = vadd.f32 0.0, %v1993
        %1995 = vmatmul.bf16.gmra.mxu0 %v1611
        %v1996 = vpop.f32.mrf.mxu0
        %v1997 = vadd.f32 0.0, %v1996
        %v1998 = vpop.f32.mrf.mxu0
        %v1999 = vadd.f32 0.0, %v1998
        %2000 = vmatmul.bf16.gmra.mxu0 %v1612
        %v2001 = vpop.f32.mrf.mxu0
        %v2002 = vadd.f32 0.0, %v2001
        %v2003 = vpop.f32.mrf.mxu0
        %v2004 = vadd.f32 0.0, %v2003
        %2005 = vmatmul.bf16.gmra.mxu0 %v1613
        %v2006 = vpop.f32.mrf.mxu0
        %v2007 = vadd.f32 0.0, %v2006
        %v2008 = vpop.f32.mrf.mxu0
        %v2009 = vadd.f32 0.0, %v2008
        %2010 = vmatmul.bf16.gmra.mxu0 %v1614
        %v2011 = vpop.f32.mrf.mxu0
        %v2012 = vadd.f32 0.0, %v2011
        %v2013 = vpop.f32.mrf.mxu0
        %v2014 = vadd.f32 0.0, %v2013
        %2015 = vmatmul.bf16.gmra.mxu0 %v1615
        %v2016 = vpop.f32.mrf.mxu0
        %v2017 = vadd.f32 0.0, %v2016
        %v2018 = vpop.f32.mrf.mxu0
        %v2019 = vadd.f32 0.0, %v2018
        %2020 = vmatmul.bf16.gmra.mxu0 %v1616
        %v2021 = vpop.f32.mrf.mxu0
        %v2022 = vadd.f32 0.0, %v2021
        %v2023 = vpop.f32.mrf.mxu0
        %v2024 = vadd.f32 0.0, %v2023
        %2025 = vmatmul.bf16.gmra.mxu0 %v1617
        %v2026 = vpop.f32.mrf.mxu0
        %v2027 = vadd.f32 0.0, %v2026
        %v2028 = vpop.f32.mrf.mxu0
        %v2029 = vadd.f32 0.0, %v2028
        %2030 = vmatmul.bf16.gmra.mxu0 %v1618
        %v2031 = vpop.f32.mrf.mxu0
        %v2032 = vadd.f32 0.0, %v2031
        %v2033 = vpop.f32.mrf.mxu0
        %v2034 = vadd.f32 0.0, %v2033
        %2035 = vmatmul.bf16.gmra.mxu0 %v1619
        %v2036 = vpop.f32.mrf.mxu0
        %v2037 = vadd.f32 0.0, %v2036
        %v2038 = vpop.f32.mrf.mxu0
        %v2039 = vadd.f32 0.0, %v2038
        %2040 = vmatmul.bf16.gmra.mxu0 %v1620
        %v2041 = vpop.f32.mrf.mxu0
        %v2042 = vadd.f32 0.0, %v2041
        %v2043 = vpop.f32.mrf.mxu0
        %v2044 = vadd.f32 0.0, %v2043
        %2045 = vmatmul.bf16.gmra.mxu0 %v1621
        %v2046 = vpop.f32.mrf.mxu0
        %v2047 = vadd.f32 0.0, %v2046
        %v2048 = vpop.f32.mrf.mxu0
        %v2049 = vadd.f32 0.0, %v2048
        %2050 = vmatmul.bf16.gmra.mxu0 %v1622
        %v2051 = vpop.f32.mrf.mxu0
        %v2052 = vadd.f32 0.0, %v2051
        %v2053 = vpop.f32.mrf.mxu0
        %v2054 = vadd.f32 0.0, %v2053
        %2055 = vmatmul.bf16.gmra.mxu0 %v1623
        %v2056 = vpop.f32.mrf.mxu0
        %v2057 = vadd.f32 0.0, %v2056
        %v2058 = vpop.f32.mrf.mxu0
        %v2059 = vadd.f32 0.0, %v2058
        %2060 = vmatmul.bf16.gmra.mxu0 %v1624
        %v2061 = vpop.f32.mrf.mxu0
        %v2062 = vadd.f32 0.0, %v2061
        %v2063 = vpop.f32.mrf.mxu0
        %v2064 = vadd.f32 0.0, %v2063
        %2065 = vmatmul.bf16.gmra.mxu0 %v1625
        %v2066 = vpop.f32.mrf.mxu0
        %v2067 = vadd.f32 0.0, %v2066
        %v2068 = vpop.f32.mrf.mxu0
        %v2069 = vadd.f32 0.0, %v2068
        %2070 = vmatmul.bf16.gmra.mxu0 %v1626
        %v2071 = vpop.f32.mrf.mxu0
        %v2072 = vadd.f32 0.0, %v2071
        %v2073 = vpop.f32.mrf.mxu0
        %v2074 = vadd.f32 0.0, %v2073
        %2075 = vmatmul.bf16.gmra.mxu0 %v1627
        %v2076 = vpop.f32.mrf.mxu0
        %v2077 = vadd.f32 0.0, %v2076
        %v2078 = vpop.f32.mrf.mxu0
        %v2079 = vadd.f32 0.0, %v2078
        %2080 = vmatmul.bf16.gmra.mxu0 %v1628
        %v2081 = vpop.f32.mrf.mxu0
        %v2082 = vadd.f32 0.0, %v2081
        %v2083 = vpop.f32.mrf.mxu0
        %v2084 = vadd.f32 0.0, %v2083
        %2085 = vmatmul.bf16.gmra.mxu0 %v1629
        %v2086 = vpop.f32.mrf.mxu0
        %v2087 = vadd.f32 0.0, %v2086
        %v2088 = vpop.f32.mrf.mxu0
        %v2089 = vadd.f32 0.0, %v2088
        %2090 = vmatmul.bf16.gmra.mxu0 %v1630
        %v2091 = vpop.f32.mrf.mxu0
        %v2092 = vadd.f32 0.0, %v2091
        %v2093 = vpop.f32.mrf.mxu0
        %v2094 = vadd.f32 0.0, %v2093
        %2095 = vmatmul.bf16.gmra.mxu0 %v1631
        %v2096 = vpop.f32.mrf.mxu0
        %v2097 = vadd.f32 0.0, %v2096
        %v2098 = vpop.f32.mrf.mxu0
        %v2099 = vadd.f32 0.0, %v2098
        %2100 = vmatmul.bf16.gmra.mxu0 %v1632
        %v2101 = vpop.f32.mrf.mxu0
        %v2102 = vadd.f32 0.0, %v2101
        %v2103 = vpop.f32.mrf.mxu0
        %v2104 = vadd.f32 0.0, %v2103
        %2105 = vmatmul.bf16.gmra.mxu0 %v1633
        %v2106 = vpop.f32.mrf.mxu0
        %v2107 = vadd.f32 0.0, %v2106
        %v2108 = vpop.f32.mrf.mxu0
        %v2109 = vadd.f32 0.0, %v2108
        %2110 = vmatmul.bf16.gmra.mxu0 %v1634
        %v2111 = vpop.f32.mrf.mxu0
        %v2112 = vadd.f32 0.0, %v2111
        %v2113 = vpop.f32.mrf.mxu0
        %v2114 = vadd.f32 0.0, %v2113
        %2115 = vmatmul.bf16.gmra.mxu0 %v1635
        %v2116 = vpop.f32.mrf.mxu0
        %v2117 = vadd.f32 0.0, %v2116
        %v2118 = vpop.f32.mrf.mxu0
        %v2119 = vadd.f32 0.0, %v2118
        %2120 = vmatmul.bf16.gmra.mxu0 %v1636
        %v2121 = vpop.f32.mrf.mxu0
        %v2122 = vadd.f32 0.0, %v2121
        %v2123 = vpop.f32.mrf.mxu0
        %v2124 = vadd.f32 0.0, %v2123
        %2125 = vmatmul.bf16.gmra.mxu0 %v1637
        %v2126 = vpop.f32.mrf.mxu0
        %v2127 = vadd.f32 0.0, %v2126
        %v2128 = vpop.f32.mrf.mxu0
        %v2129 = vadd.f32 0.0, %v2128
        %2130 = vmatmul.bf16.gmra.mxu0 %v1638
        %v2131 = vpop.f32.mrf.mxu0
        %v2132 = vadd.f32 0.0, %v2131
        %v2133 = vpop.f32.mrf.mxu0
        %v2134 = vadd.f32 0.0, %v2133
        %2135 = vmatmul.bf16.gmra.mxu0 %v1639
        %v2136 = vpop.f32.mrf.mxu0
        %v2137 = vadd.f32 0.0, %v2136
        %v2138 = vpop.f32.mrf.mxu0
        %v2139 = vadd.f32 0.0, %v2138
        %2140 = vmatmul.bf16.gmra.mxu0 %v1640
        %v2141 = vpop.f32.mrf.mxu0
        %v2142 = vadd.f32 0.0, %v2141
        %v2143 = vpop.f32.mrf.mxu0
        %v2144 = vadd.f32 0.0, %v2143
        %2145 = vmatmul.bf16.gmra.mxu0 %v1641
        %v2146 = vpop.f32.mrf.mxu0
        %v2147 = vadd.f32 0.0, %v2146
        %v2148 = vpop.f32.mrf.mxu0
        %v2149 = vadd.f32 0.0, %v2148
        %2150 = vmatmul.bf16.gmra.mxu0 %v1642
        %v2151 = vpop.f32.mrf.mxu0
        %v2152 = vadd.f32 0.0, %v2151
        %v2153 = vpop.f32.mrf.mxu0
        %v2154 = vadd.f32 0.0, %v2153
        %2155 = vmatmul.bf16.gmra.mxu0 %v1643
        %v2156 = vpop.f32.mrf.mxu0
        %v2157 = vadd.f32 0.0, %v2156
        %v2158 = vpop.f32.mrf.mxu0
        %v2159 = vadd.f32 0.0, %v2158
        %2160 = vmatmul.bf16.gmra.mxu0 %v1644
        %v2161 = vpop.f32.mrf.mxu0
        %v2162 = vadd.f32 0.0, %v2161
        %v2163 = vpop.f32.mrf.mxu0
        %v2164 = vadd.f32 0.0, %v2163
        %2165 = vmatmul.bf16.gmra.mxu0 %v1645
        %v2166 = vpop.f32.mrf.mxu0
        %v2167 = vadd.f32 0.0, %v2166
        %v2168 = vpop.f32.mrf.mxu0
        %v2169 = vadd.f32 0.0, %v2168
        %2170 = vmatmul.bf16.gmra.mxu0 %v1646
        %v2171 = vpop.f32.mrf.mxu0
        %v2172 = vadd.f32 0.0, %v2171
        %v2173 = vpop.f32.mrf.mxu0
        %v2174 = vadd.f32 0.0, %v2173
        %2175 = vmatmul.bf16.gmra.mxu0 %v1647
        %v2176 = vpop.f32.mrf.mxu0
        %v2177 = vadd.f32 0.0, %v2176
        %v2178 = vpop.f32.mrf.mxu0
        %v2179 = vadd.f32 0.0, %v2178
        %2180 = vmatmul.bf16.gmra.mxu0 %v1648
        %v2181 = vpop.f32.mrf.mxu0
        %v2182 = vadd.f32 0.0, %v2181
        %v2183 = vpop.f32.mrf.mxu0
        %v2184 = vadd.f32 0.0, %v2183
        %2185 = vmatmul.bf16.gmra.mxu0 %v1649
        %v2186 = vpop.f32.mrf.mxu0
        %v2187 = vadd.f32 0.0, %v2186
        %v2188 = vpop.f32.mrf.mxu0
        %v2189 = vadd.f32 0.0, %v2188
        %2190 = vmatmul.bf16.gmra.mxu0 %v1650
        %v2191 = vpop.f32.mrf.mxu0
        %v2192 = vadd.f32 0.0, %v2191
        %v2193 = vpop.f32.mrf.mxu0
        %v2194 = vadd.f32 0.0, %v2193
        %2195 = vmatmul.bf16.gmra.mxu0 %v1651
        %v2196 = vpop.f32.mrf.mxu0
        %v2197 = vadd.f32 0.0, %v2196
        %v2198 = vpop.f32.mrf.mxu0
        %v2199 = vadd.f32 0.0, %v2198
        %2200 = vmatmul.bf16.gmra.mxu0 %v1652
        %v2201 = vpop.f32.mrf.mxu0
        %v2202 = vadd.f32 0.0, %v2201
        %v2203 = vpop.f32.mrf.mxu0
        %v2204 = vadd.f32 0.0, %v2203
        %2205 = vmatmul.bf16.gmra.mxu0 %v1653
        %v2206 = vpop.f32.mrf.mxu0
        %v2207 = vadd.f32 0.0, %v2206
        %v2208 = vpop.f32.mrf.mxu0
        %v2209 = vadd.f32 0.0, %v2208
        %2210 = vmatmul.bf16.gmra.mxu0 %v1654
        %v2211 = vpop.f32.mrf.mxu0
        %v2212 = vadd.f32 0.0, %v2211
        %v2213 = vpop.f32.mrf.mxu0
        %v2214 = vadd.f32 0.0, %v2213
        %2215 = vmatmul.bf16.gmra.mxu0 %v1655
        %v2216 = vpop.f32.mrf.mxu0
        %v2217 = vadd.f32 0.0, %v2216
        %v2218 = vpop.f32.mrf.mxu0
        %v2219 = vadd.f32 0.0, %v2218
        %2220 = vmatmul.bf16.gmra.mxu0 %v1656
        %v2221 = vpop.f32.mrf.mxu0
        %v2222 = vadd.f32 0.0, %v2221
        %v2223 = vpop.f32.mrf.mxu0
        %v2224 = vadd.f32 0.0, %v2223
        %2225 = vmatmul.bf16.gmra.mxu0 %v1657
        %v2226 = vpop.f32.mrf.mxu0
        %v2227 = vadd.f32 0.0, %v2226
        %v2228 = vpop.f32.mrf.mxu0
        %v2229 = vadd.f32 0.0, %v2228
        %2230 = vmatmul.bf16.gmra.mxu0 %v1658
        %v2231 = vpop.f32.mrf.mxu0
        %v2232 = vadd.f32 0.0, %v2231
        %v2233 = vpop.f32.mrf.mxu0
        %v2234 = vadd.f32 0.0, %v2233
        %2235 = vmatmul.bf16.gmra.mxu0 %v1659
        %v2236 = vpop.f32.mrf.mxu0
        %v2237 = vadd.f32 0.0, %v2236
        %v2238 = vpop.f32.mrf.mxu0
        %v2239 = vadd.f32 0.0, %v2238
        %2240 = vmatmul.bf16.gmra.mxu0 %v1660
        %v2241 = vpop.f32.mrf.mxu0
        %v2242 = vadd.f32 0.0, %v2241
        %v2243 = vpop.f32.mrf.mxu0
        %v2244 = vadd.f32 0.0, %v2243
        %2245 = vmatmul.bf16.gmra.mxu0 %v1661
        %v2246 = vpop.f32.mrf.mxu0
        %v2247 = vadd.f32 0.0, %v2246
        %v2248 = vpop.f32.mrf.mxu0
        %v2249 = vadd.f32 0.0, %v2248
        %2250 = vmatmul.bf16.gmra.mxu0 %v1662
        %v2251 = vpop.f32.mrf.mxu0
        %v2252 = vadd.f32 0.0, %v2251
        %v2253 = vpop.f32.mrf.mxu0
        %v2254 = vadd.f32 0.0, %v2253
        %2255 = vmatmul.bf16.gmra.mxu0 %v1663
        %v2256 = vpop.f32.mrf.mxu0
        %v2257 = vadd.f32 0.0, %v2256
        %v2258 = vpop.f32.mrf.mxu0
        %v2259 = vadd.f32 0.0, %v2258
        %2260 = vmatmul.bf16.gmra.mxu0 %v1664
        %v2261 = vpop.f32.mrf.mxu0
        %v2262 = vadd.f32 0.0, %v2261
        %v2263 = vpop.f32.mrf.mxu0
        %v2264 = vadd.f32 0.0, %v2263
        %2265 = vmatmul.bf16.gmra.mxu0 %v1665
        %v2266 = vpop.f32.mrf.mxu0
        %v2267 = vadd.f32 0.0, %v2266
        %v2268 = vpop.f32.mrf.mxu0
        %v2269 = vadd.f32 0.0, %v2268
        %2270 = vmatmul.bf16.gmra.mxu0 %v1666
        %v2271 = vpop.f32.mrf.mxu0
        %v2272 = vadd.f32 0.0, %v2271
        %v2273 = vpop.f32.mrf.mxu0
        %v2274 = vadd.f32 0.0, %v2273
        %2275 = vmatmul.bf16.gmra.mxu0 %v1667
        %v2276 = vpop.f32.mrf.mxu0
        %v2277 = vadd.f32 0.0, %v2276
        %v2278 = vpop.f32.mrf.mxu0
        %v2279 = vadd.f32 0.0, %v2278
        %2280 = vmatmul.bf16.gmra.mxu0 %v1668
        %v2281 = vpop.f32.mrf.mxu0
        %v2282 = vadd.f32 0.0, %v2281
        %v2283 = vpop.f32.mrf.mxu0
        %v2284 = vadd.f32 0.0, %v2283
        %2285 = vmatmul.bf16.gmra.mxu0 %v1669
        %v2286 = vpop.f32.mrf.mxu0
        %v2287 = vadd.f32 0.0, %v2286
        %v2288 = vpop.f32.mrf.mxu0
        %v2289 = vadd.f32 0.0, %v2288
        %2290 = vmatmul.bf16.gmra.mxu0 %v1670
        %v2291 = vpop.f32.mrf.mxu0
        %v2292 = vadd.f32 0.0, %v2291
        %v2293 = vpop.f32.mrf.mxu0
        %v2294 = vadd.f32 0.0, %v2293
        %2295 = vmatmul.bf16.gmra.mxu0 %v1671
        %v2296 = vpop.f32.mrf.mxu0
        %v2297 = vadd.f32 0.0, %v2296
        %v2298 = vpop.f32.mrf.mxu0
        %v2299 = vadd.f32 0.0, %v2298
        %2300 = vmatmul.bf16.gmra.mxu0 %v1672
        %v2301 = vpop.f32.mrf.mxu0
        %v2302 = vadd.f32 0.0, %v2301
        %v2303 = vpop.f32.mrf.mxu0
        %v2304 = vadd.f32 0.0, %v2303
        %2305 = vmatmul.bf16.gmra.mxu0 %v1673
        %v2306 = vpop.f32.mrf.mxu0
        %v2307 = vadd.f32 0.0, %v2306
        %v2308 = vpop.f32.mrf.mxu0
        %v2309 = vadd.f32 0.0, %v2308
        %2310 = vmatmul.bf16.gmra.mxu0 %v1674
        %v2311 = vpop.f32.mrf.mxu0
        %v2312 = vadd.f32 0.0, %v2311
        %v2313 = vpop.f32.mrf.mxu0
        %v2314 = vadd.f32 0.0, %v2313
        %2315 = vmatmul.bf16.gmra.mxu0 %v1675
        %v2316 = vpop.f32.mrf.mxu0
        %v2317 = vadd.f32 0.0, %v2316
        %v2318 = vpop.f32.mrf.mxu0
        %v2319 = vadd.f32 0.0, %v2318
        %2320 = vmatmul.bf16.gmra.mxu0 %v1676
        %v2321 = vpop.f32.mrf.mxu0
        %v2322 = vadd.f32 0.0, %v2321
        %v2323 = vpop.f32.mrf.mxu0
        %v2324 = vadd.f32 0.0, %v2323
        %2325 = vmatmul.bf16.gmra.mxu0 %v1677
        %v2326 = vpop.f32.mrf.mxu0
        %v2327 = vadd.f32 0.0, %v2326
        %v2328 = vpop.f32.mrf.mxu0
        %v2329 = vadd.f32 0.0, %v2328
        %2330 = vmatmul.bf16.gmra.mxu0 %v1678
        %v2331 = vpop.f32.mrf.mxu0
        %v2332 = vadd.f32 0.0, %v2331
        %v2333 = vpop.f32.mrf.mxu0
        %v2334 = vadd.f32 0.0, %v2333
        %2335 = vmatmul.bf16.gmra.mxu0 %v1679
        %v2336 = vpop.f32.mrf.mxu0
        %v2337 = vadd.f32 0.0, %v2336
        %v2338 = vpop.f32.mrf.mxu0
        %v2339 = vadd.f32 0.0, %v2338
        %2340 = vmatmul.bf16.gmra.mxu0 %v1680
        %v2341 = vpop.f32.mrf.mxu0
        %v2342 = vadd.f32 0.0, %v2341
        %v2343 = vpop.f32.mrf.mxu0
        %v2344 = vadd.f32 0.0, %v2343
        %2345 = vmatmul.bf16.gmra.mxu0 %v1681
        %v2346 = vpop.f32.mrf.mxu0
        %v2347 = vadd.f32 0.0, %v2346
        %v2348 = vpop.f32.mrf.mxu0
        %v2349 = vadd.f32 0.0, %v2348
        %2350 = vmatmul.bf16.gmra.mxu0 %v1682
        %v2351 = vpop.f32.mrf.mxu0
        %v2352 = vadd.f32 0.0, %v2351
        %v2353 = vpop.f32.mrf.mxu0
        %v2354 = vadd.f32 0.0, %v2353
        %2355 = vmatmul.bf16.gmra.mxu0 %v1683
        %v2356 = vpop.f32.mrf.mxu0
        %v2357 = vadd.f32 0.0, %v2356
        %v2358 = vpop.f32.mrf.mxu0
        %v2359 = vadd.f32 0.0, %v2358
        %2360 = vmatmul.bf16.gmra.mxu0 %v1684
        %v2361 = vpop.f32.mrf.mxu0
        %v2362 = vadd.f32 0.0, %v2361
        %v2363 = vpop.f32.mrf.mxu0
        %v2364 = vadd.f32 0.0, %v2363
        %2365 = vmatmul.bf16.gmra.mxu0 %v1685
        %v2366 = vpop.f32.mrf.mxu0
        %v2367 = vadd.f32 0.0, %v2366
        %v2368 = vpop.f32.mrf.mxu0
        %v2369 = vadd.f32 0.0, %v2368
        %2370 = vmatmul.bf16.gmra.mxu0 %v1686
        %v2371 = vpop.f32.mrf.mxu0
        %v2372 = vadd.f32 0.0, %v2371
        %v2373 = vpop.f32.mrf.mxu0
        %v2374 = vadd.f32 0.0, %v2373
        %2375 = vmatmul.bf16.gmra.mxu0 %v1687
        %v2376 = vpop.f32.mrf.mxu0
        %v2377 = vadd.f32 0.0, %v2376
        %v2378 = vpop.f32.mrf.mxu0
        %v2379 = vadd.f32 0.0, %v2378
        %2380 = vmatmul.bf16.gmra.mxu0 %v1688
        %v2381 = vpop.f32.mrf.mxu0
        %v2382 = vadd.f32 0.0, %v2381
        %v2383 = vpop.f32.mrf.mxu0
        %v2384 = vadd.f32 0.0, %v2383
        %2385 = vmatmul.bf16.gmra.mxu0 %v1689
        %v2386 = vpop.f32.mrf.mxu0
        %v2387 = vadd.f32 0.0, %v2386
        %v2388 = vpop.f32.mrf.mxu0
        %v2389 = vadd.f32 0.0, %v2388
        %2390 = vmatmul.bf16.gmra.mxu0 %v1690
        %v2391 = vpop.f32.mrf.mxu0
        %v2392 = vadd.f32 0.0, %v2391
        %v2393 = vpop.f32.mrf.mxu0
        %v2394 = vadd.f32 0.0, %v2393
        %2395 = vmatmul.bf16.gmra.mxu0 %v1691
        %v2396 = vpop.f32.mrf.mxu0
        %v2397 = vadd.f32 0.0, %v2396
        %v2398 = vpop.f32.mrf.mxu0
        %v2399 = vadd.f32 0.0, %v2398
        %2400 = vmatmul.bf16.gmra.mxu0 %v1692
        %v2401 = vpop.f32.mrf.mxu0
        %v2402 = vadd.f32 0.0, %v2401
        %v2403 = vpop.f32.mrf.mxu0
        %v2404 = vadd.f32 0.0, %v2403
        %2405 = vmatmul.bf16.gmra.mxu0 %v1693
        %v2406 = vpop.f32.mrf.mxu0
        %v2407 = vadd.f32 0.0, %v2406
        %v2408 = vpop.f32.mrf.mxu0
        %v2409 = vadd.f32 0.0, %v2408
        %2410 = vmatmul.bf16.gmra.mxu0 %v1694
        %v2411 = vpop.f32.mrf.mxu0
        %v2412 = vadd.f32 0.0, %v2411
        %v2413 = vpop.f32.mrf.mxu0
        %v2414 = vadd.f32 0.0, %v2413
        %2415 = vmatmul.bf16.gmra.mxu0 %v1695
        %v2416 = vpop.f32.mrf.mxu0
        %v2417 = vadd.f32 0.0, %v2416
        %v2418 = vpop.f32.mrf.mxu0
        %v2419 = vadd.f32 0.0, %v2418
        %2420 = vmatmul.bf16.gmra.mxu0 %v1696
        %v2421 = vpop.f32.mrf.mxu0
        %v2422 = vadd.f32 0.0, %v2421
        %v2423 = vpop.f32.mrf.mxu0
        %v2424 = vadd.f32 0.0, %v2423
        %2425 = vmatmul.bf16.gmra.mxu0 %v1697
        %v2426 = vpop.f32.mrf.mxu0
        %v2427 = vadd.f32 0.0, %v2426
        %v2428 = vpop.f32.mrf.mxu0
        %v2429 = vadd.f32 0.0, %v2428
        %2430 = vmatmul.bf16.gmra.mxu0 %v1698
        %v2431 = vpop.f32.mrf.mxu0
        %v2432 = vadd.f32 0.0, %v2431
        %v2433 = vpop.f32.mrf.mxu0
        %v2434 = vadd.f32 0.0, %v2433
        %2435 = vmatmul.bf16.gmra.mxu0 %v1699
        %v2436 = vpop.f32.mrf.mxu0
        %v2437 = vadd.f32 0.0, %v2436
        %v2438 = vpop.f32.mrf.mxu0
        %v2439 = vadd.f32 0.0, %v2438
        %2440 = vmatmul.bf16.gmra.mxu0 %v1700
        %v2441 = vpop.f32.mrf.mxu0
        %v2442 = vadd.f32 0.0, %v2441
        %v2443 = vpop.f32.mrf.mxu0
        %v2444 = vadd.f32 0.0, %v2443
        %2445 = vmatmul.bf16.gmra.mxu0 %v1701
        %v2446 = vpop.f32.mrf.mxu0
        %v2447 = vadd.f32 0.0, %v2446
        %v2448 = vpop.f32.mrf.mxu0
        %v2449 = vadd.f32 0.0, %v2448
        %2450 = vmatmul.bf16.gmra.mxu0 %v1702
        %v2451 = vpop.f32.mrf.mxu0
        %v2452 = vadd.f32 0.0, %v2451
        %v2453 = vpop.f32.mrf.mxu0
        %v2454 = vadd.f32 0.0, %v2453
        %2455 = vmatmul.bf16.gmra.mxu0 %v1703
        %v2456 = vpop.f32.mrf.mxu0
        %v2457 = vadd.f32 0.0, %v2456
        %v2458 = vpop.f32.mrf.mxu0
        %v2459 = vadd.f32 0.0, %v2458
        %2460 = vmatmul.bf16.gmra.mxu0 %v1704
        %v2461 = vpop.f32.mrf.mxu0
        %v2462 = vadd.f32 0.0, %v2461
        %v2463 = vpop.f32.mrf.mxu0
        %v2464 = vadd.f32 0.0, %v2463
        %2465 = vmatmul.bf16.gmra.mxu0 %v1705
        %v2466 = vpop.f32.mrf.mxu0
        %v2467 = vadd.f32 0.0, %v2466
        %v2468 = vpop.f32.mrf.mxu0
        %v2469 = vadd.f32 0.0, %v2468
        %2470 = vmatmul.bf16.gmra.mxu0 %v1706
        %v2471 = vpop.f32.mrf.mxu0
        %v2472 = vadd.f32 0.0, %v2471
        %v2473 = vpop.f32.mrf.mxu0
        %v2474 = vadd.f32 0.0, %v2473
        %2475 = vmatmul.bf16.gmra.mxu0 %v1707
        %v2476 = vpop.f32.mrf.mxu0
        %v2477 = vadd.f32 0.0, %v2476
        %v2478 = vpop.f32.mrf.mxu0
        %v2479 = vadd.f32 0.0, %v2478
        %2480 = vmatmul.bf16.gmra.mxu0 %v1708
        %v2481 = vpop.f32.mrf.mxu0
        %v2482 = vadd.f32 0.0, %v2481
        %v2483 = vpop.f32.mrf.mxu0
        %v2484 = vadd.f32 0.0, %v2483
        %2485 = vmatmul.bf16.gmra.mxu0 %v1709
        %v2486 = vpop.f32.mrf.mxu0
        %v2487 = vadd.f32 0.0, %v2486
        %v2488 = vpop.f32.mrf.mxu0
        %v2489 = vadd.f32 0.0, %v2488
        %2490 = vmatmul.bf16.gmra.mxu0 %v1710
        %v2491 = vpop.f32.mrf.mxu0
        %v2492 = vadd.f32 0.0, %v2491
        %v2493 = vpop.f32.mrf.mxu0
        %v2494 = vadd.f32 0.0, %v2493
        %2495 = vmatmul.bf16.gmra.mxu0 %v1711
        %v2496 = vpop.f32.mrf.mxu0
        %v2497 = vadd.f32 0.0, %v2496
        %v2498 = vpop.f32.mrf.mxu0
        %v2499 = vadd.f32 0.0, %v2498
        %2500 = vmatmul.bf16.gmra.mxu0 %v1712
        %v2501 = vpop.f32.mrf.mxu0
        %v2502 = vadd.f32 0.0, %v2501
        %v2503 = vpop.f32.mrf.mxu0
        %v2504 = vadd.f32 0.0, %v2503
        %2505 = vmatmul.bf16.gmra.mxu0 %v1713
        %v2506 = vpop.f32.mrf.mxu0
        %v2507 = vadd.f32 0.0, %v2506
        %v2508 = vpop.f32.mrf.mxu0
        %v2509 = vadd.f32 0.0, %v2508
        %2510 = vmatmul.bf16.gmra.mxu0 %v1714
        %v2511 = vpop.f32.mrf.mxu0
        %v2512 = vadd.f32 0.0, %v2511
        %v2513 = vpop.f32.mrf.mxu0
        %v2514 = vadd.f32 0.0, %v2513
        %2515 = vmatmul.bf16.gmra.mxu0 %v1715
        %v2516 = vpop.f32.mrf.mxu0
        %v2517 = vadd.f32 0.0, %v2516
        %v2518 = vpop.f32.mrf.mxu0
        %v2519 = vadd.f32 0.0, %v2518
        %2520 = vmatmul.bf16.gmra.mxu0 %v1716
        %v2521 = vpop.f32.mrf.mxu0
        %v2522 = vadd.f32 0.0, %v2521
        %v2523 = vpop.f32.mrf.mxu0
        %v2524 = vadd.f32 0.0, %v2523
        %2525 = vmatmul.bf16.gmra.mxu0 %v1717
        %v2526 = vpop.f32.mrf.mxu0
        %v2527 = vadd.f32 0.0, %v2526
        %v2528 = vpop.f32.mrf.mxu0
        %v2529 = vadd.f32 0.0, %v2528
        %2530 = vmatmul.bf16.gmra.mxu0 %v1718
        %v2531 = vpop.f32.mrf.mxu0
        %v2532 = vadd.f32 0.0, %v2531
        %v2533 = vpop.f32.mrf.mxu0
        %v2534 = vadd.f32 0.0, %v2533
        %2535 = vmatmul.bf16.gmra.mxu0 %v1719
        %v2536 = vpop.f32.mrf.mxu0
        %v2537 = vadd.f32 0.0, %v2536
        %v2538 = vpop.f32.mrf.mxu0
        %v2539 = vadd.f32 0.0, %v2538
        %2540 = vmatmul.bf16.gmra.mxu0 %v1720
        %v2541 = vpop.f32.mrf.mxu0
        %v2542 = vadd.f32 0.0, %v2541
        %v2543 = vpop.f32.mrf.mxu0
        %v2544 = vadd.f32 0.0, %v2543
        %2545 = vdwg.mxu0
        %v2546 = vadd.f32 %v553, %v1907
        %v2547 = vadd.f32 %v554, %v1909
        %v2548 = vadd.f32 %v555, %v1912
        %v2549 = vadd.f32 %v556, %v1914
        %v2550 = vadd.f32 %v557, %v1917
        %v2551 = vadd.f32 %v558, %v1919
        %v2552 = vadd.f32 %v559, %v1922
        %v2553 = vadd.f32 %v560, %v1924
        %v2554 = vadd.f32 %v561, %v1927
        %v2555 = vadd.f32 %v562, %v1929
        %v2556 = vadd.f32 %v563, %v1932
        %v2557 = vadd.f32 %v564, %v1934
        %v2558 = vadd.f32 %v565, %v1937
        %v2559 = vadd.f32 %v566, %v1939
        %v2560 = vadd.f32 %v567, %v1942
        %v2561 = vadd.f32 %v568, %v1944
        %v2562 = vadd.f32 %v569, %v1947
        %v2563 = vadd.f32 %v570, %v1949
        %v2564 = vadd.f32 %v571, %v1952
        %v2565 = vadd.f32 %v572, %v1954
        %v2566 = vadd.f32 %v573, %v1957
        %v2567 = vadd.f32 %v574, %v1959
        %v2568 = vadd.f32 %v575, %v1962
        %v2569 = vadd.f32 %v576, %v1964
        %v2570 = vadd.f32 %v577, %v1967
        %v2571 = vadd.f32 %v578, %v1969
        %v2572 = vadd.f32 %v579, %v1972
        %v2573 = vadd.f32 %v580, %v1974
        %v2574 = vadd.f32 %v581, %v1977
        %v2575 = vadd.f32 %v582, %v1979
        %v2576 = vadd.f32 %v583, %v1982
        %v2577 = vadd.f32 %v584, %v1984
        %v2578 = vadd.f32 %v585, %v1987
        %v2579 = vadd.f32 %v586, %v1989
        %v2580 = vadd.f32 %v587, %v1992
        %v2581 = vadd.f32 %v588, %v1994
        %v2582 = vadd.f32 %v589, %v1997
        %v2583 = vadd.f32 %v590, %v1999
        %v2584 = vadd.f32 %v591, %v2002
        %v2585 = vadd.f32 %v592, %v2004
        %v2586 = vadd.f32 %v593, %v2007
        %v2587 = vadd.f32 %v594, %v2009
        %v2588 = vadd.f32 %v595, %v2012
        %v2589 = vadd.f32 %v596, %v2014
        %v2590 = vadd.f32 %v597, %v2017
        %v2591 = vadd.f32 %v598, %v2019
        %v2592 = vadd.f32 %v599, %v2022
        %v2593 = vadd.f32 %v600, %v2024
        %v2594 = vadd.f32 %v601, %v2027
        %v2595 = vadd.f32 %v602, %v2029
        %v2596 = vadd.f32 %v603, %v2032
        %v2597 = vadd.f32 %v604, %v2034
        %v2598 = vadd.f32 %v605, %v2037
        %v2599 = vadd.f32 %v606, %v2039
        %v2600 = vadd.f32 %v607, %v2042
        %v2601 = vadd.f32 %v608, %v2044
        %v2602 = vadd.f32 %v609, %v2047
        %v2603 = vadd.f32 %v610, %v2049
        %v2604 = vadd.f32 %v611, %v2052
        %v2605 = vadd.f32 %v612, %v2054
        %v2606 = vadd.f32 %v613, %v2057
        %v2607 = vadd.f32 %v614, %v2059
        %v2608 = vadd.f32 %v615, %v2062
        %v2609 = vadd.f32 %v616, %v2064
        %v2610 = vadd.f32 %v617, %v2067
        %v2611 = vadd.f32 %v618, %v2069
        %v2612 = vadd.f32 %v619, %v2072
        %v2613 = vadd.f32 %v620, %v2074
        %v2614 = vadd.f32 %v621, %v2077
        %v2615 = vadd.f32 %v622, %v2079
        %v2616 = vadd.f32 %v623, %v2082
        %v2617 = vadd.f32 %v624, %v2084
        %v2618 = vadd.f32 %v625, %v2087
        %v2619 = vadd.f32 %v626, %v2089
        %v2620 = vadd.f32 %v627, %v2092
        %v2621 = vadd.f32 %v628, %v2094
        %v2622 = vadd.f32 %v629, %v2097
        %v2623 = vadd.f32 %v630, %v2099
        %v2624 = vadd.f32 %v631, %v2102
        %v2625 = vadd.f32 %v632, %v2104
        %v2626 = vadd.f32 %v633, %v2107
        %v2627 = vadd.f32 %v634, %v2109
        %v2628 = vadd.f32 %v635, %v2112
        %v2629 = vadd.f32 %v636, %v2114
        %v2630 = vadd.f32 %v637, %v2117
        %v2631 = vadd.f32 %v638, %v2119
        %v2632 = vadd.f32 %v639, %v2122
        %v2633 = vadd.f32 %v640, %v2124
        %v2634 = vadd.f32 %v641, %v2127
        %v2635 = vadd.f32 %v642, %v2129
        %v2636 = vadd.f32 %v643, %v2132
        %v2637 = vadd.f32 %v644, %v2134
        %v2638 = vadd.f32 %v645, %v2137
        %v2639 = vadd.f32 %v646, %v2139
        %v2640 = vadd.f32 %v647, %v2142
        %v2641 = vadd.f32 %v648, %v2144
        %v2642 = vadd.f32 %v649, %v2147
        %v2643 = vadd.f32 %v650, %v2149
        %v2644 = vadd.f32 %v651, %v2152
        %v2645 = vadd.f32 %v652, %v2154
        %v2646 = vadd.f32 %v653, %v2157
        %v2647 = vadd.f32 %v654, %v2159
        %v2648 = vadd.f32 %v655, %v2162
        %v2649 = vadd.f32 %v656, %v2164
        %v2650 = vadd.f32 %v657, %v2167
        %v2651 = vadd.f32 %v658, %v2169
        %v2652 = vadd.f32 %v659, %v2172
        %v2653 = vadd.f32 %v660, %v2174
        %v2654 = vadd.f32 %v661, %v2177
        %v2655 = vadd.f32 %v662, %v2179
        %v2656 = vadd.f32 %v663, %v2182
        %v2657 = vadd.f32 %v664, %v2184
        %v2658 = vadd.f32 %v665, %v2187
        %v2659 = vadd.f32 %v666, %v2189
        %v2660 = vadd.f32 %v667, %v2192
        %v2661 = vadd.f32 %v668, %v2194
        %v2662 = vadd.f32 %v669, %v2197
        %v2663 = vadd.f32 %v670, %v2199
        %v2664 = vadd.f32 %v671, %v2202
        %v2665 = vadd.f32 %v672, %v2204
        %v2666 = vadd.f32 %v673, %v2207
        %v2667 = vadd.f32 %v674, %v2209
        %v2668 = vadd.f32 %v675, %v2212
        %v2669 = vadd.f32 %v676, %v2214
        %v2670 = vadd.f32 %v677, %v2217
        %v2671 = vadd.f32 %v678, %v2219
        %v2672 = vadd.f32 %v679, %v2222
        %v2673 = vadd.f32 %v680, %v2224
        %v2674 = vadd.f32 %v681, %v2227
        %v2675 = vadd.f32 %v682, %v2229
        %v2676 = vadd.f32 %v683, %v2232
        %v2677 = vadd.f32 %v684, %v2234
        %v2678 = vadd.f32 %v685, %v2237
        %v2679 = vadd.f32 %v686, %v2239
        %v2680 = vadd.f32 %v687, %v2242
        %v2681 = vadd.f32 %v688, %v2244
        %v2682 = vadd.f32 %v689, %v2247
        %v2683 = vadd.f32 %v690, %v2249
        %v2684 = vadd.f32 %v691, %v2252
        %v2685 = vadd.f32 %v692, %v2254
        %v2686 = vadd.f32 %v693, %v2257
        %v2687 = vadd.f32 %v694, %v2259
        %v2688 = vadd.f32 %v695, %v2262
        %v2689 = vadd.f32 %v696, %v2264
        %v2690 = vadd.f32 %v697, %v2267
        %v2691 = vadd.f32 %v698, %v2269
        %v2692 = vadd.f32 %v699, %v2272
        %v2693 = vadd.f32 %v700, %v2274
        %v2694 = vadd.f32 %v701, %v2277
        %v2695 = vadd.f32 %v702, %v2279
        %v2696 = vadd.f32 %v703, %v2282
        %v2697 = vadd.f32 %v704, %v2284
        %v2698 = vadd.f32 %v705, %v2287
        %v2699 = vadd.f32 %v706, %v2289
        %v2700 = vadd.f32 %v707, %v2292
        %v2701 = vadd.f32 %v708, %v2294
        %v2702 = vadd.f32 %v709, %v2297
        %v2703 = vadd.f32 %v710, %v2299
        %v2704 = vadd.f32 %v711, %v2302
        %v2705 = vadd.f32 %v712, %v2304
        %v2706 = vadd.f32 %v713, %v2307
        %v2707 = vadd.f32 %v714, %v2309
        %v2708 = vadd.f32 %v715, %v2312
        %v2709 = vadd.f32 %v716, %v2314
        %v2710 = vadd.f32 %v717, %v2317
        %v2711 = vadd.f32 %v718, %v2319
        %v2712 = vadd.f32 %v719, %v2322
        %v2713 = vadd.f32 %v720, %v2324
        %v2714 = vadd.f32 %v721, %v2327
        %v2715 = vadd.f32 %v722, %v2329
        %v2716 = vadd.f32 %v723, %v2332
        %v2717 = vadd.f32 %v724, %v2334
        %v2718 = vadd.f32 %v725, %v2337
        %v2719 = vadd.f32 %v726, %v2339
        %v2720 = vadd.f32 %v727, %v2342
        %v2721 = vadd.f32 %v728, %v2344
        %v2722 = vadd.f32 %v729, %v2347
        %v2723 = vadd.f32 %v730, %v2349
        %v2724 = vadd.f32 %v731, %v2352
        %v2725 = vadd.f32 %v732, %v2354
        %v2726 = vadd.f32 %v733, %v2357
        %v2727 = vadd.f32 %v734, %v2359
        %v2728 = vadd.f32 %v735, %v2362
        %v2729 = vadd.f32 %v736, %v2364
        %v2730 = vadd.f32 %v737, %v2367
        %v2731 = vadd.f32 %v738, %v2369
        %v2732 = vadd.f32 %v739, %v2372
        %v2733 = vadd.f32 %v740, %v2374
        %v2734 = vadd.f32 %v741, %v2377
        %v2735 = vadd.f32 %v742, %v2379
        %v2736 = vadd.f32 %v743, %v2382
        %v2737 = vadd.f32 %v744, %v2384
        %v2738 = vadd.f32 %v745, %v2387
        %v2739 = vadd.f32 %v746, %v2389
        %v2740 = vadd.f32 %v747, %v2392
        %v2741 = vadd.f32 %v748, %v2394
        %v2742 = vadd.f32 %v749, %v2397
        %v2743 = vadd.f32 %v750, %v2399
        %v2744 = vadd.f32 %v751, %v2402
        %v2745 = vadd.f32 %v752, %v2404
        %v2746 = vadd.f32 %v753, %v2407
        %v2747 = vadd.f32 %v754, %v2409
        %v2748 = vadd.f32 %v755, %v2412
        %v2749 = vadd.f32 %v756, %v2414
        %v2750 = vadd.f32 %v757, %v2417
        %v2751 = vadd.f32 %v758, %v2419
        %v2752 = vadd.f32 %v759, %v2422
        %v2753 = vadd.f32 %v760, %v2424
        %v2754 = vadd.f32 %v761, %v2427
        %v2755 = vadd.f32 %v762, %v2429
        %v2756 = vadd.f32 %v763, %v2432
        %v2757 = vadd.f32 %v764, %v2434
        %v2758 = vadd.f32 %v765, %v2437
        %v2759 = vadd.f32 %v766, %v2439
        %v2760 = vadd.f32 %v767, %v2442
        %v2761 = vadd.f32 %v768, %v2444
        %v2762 = vadd.f32 %v769, %v2447
        %v2763 = vadd.f32 %v770, %v2449
        %v2764 = vadd.f32 %v771, %v2452
        %v2765 = vadd.f32 %v772, %v2454
        %v2766 = vadd.f32 %v773, %v2457
        %v2767 = vadd.f32 %v774, %v2459
        %v2768 = vadd.f32 %v775, %v2462
        %v2769 = vadd.f32 %v776, %v2464
        %v2770 = vadd.f32 %v777, %v2467
        %v2771 = vadd.f32 %v778, %v2469
        %v2772 = vadd.f32 %v779, %v2472
        %v2773 = vadd.f32 %v780, %v2474
        %v2774 = vadd.f32 %v781, %v2477
        %v2775 = vadd.f32 %v782, %v2479
        %v2776 = vadd.f32 %v783, %v2482
        %v2777 = vadd.f32 %v784, %v2484
        %v2778 = vadd.f32 %v785, %v2487
        %v2779 = vadd.f32 %v786, %v2489
        %v2780 = vadd.f32 %v787, %v2492
        %v2781 = vadd.f32 %v788, %v2494
        %v2782 = vadd.f32 %v789, %v2497
        %v2783 = vadd.f32 %v790, %v2499
        %v2784 = vadd.f32 %v791, %v2502
        %v2785 = vadd.f32 %v792, %v2504
        %v2786 = vadd.f32 %v793, %v2507
        %v2787 = vadd.f32 %v794, %v2509
        %v2788 = vadd.f32 %v795, %v2512
        %v2789 = vadd.f32 %v796, %v2514
        %v2790 = vadd.f32 %v797, %v2517
        %v2791 = vadd.f32 %v798, %v2519
        %v2792 = vadd.f32 %v799, %v2522
        %v2793 = vadd.f32 %v800, %v2524
        %v2794 = vadd.f32 %v801, %v2527
        %v2795 = vadd.f32 %v802, %v2529
        %v2796 = vadd.f32 %v803, %v2532
        %v2797 = vadd.f32 %v804, %v2534
        %v2798 = vadd.f32 %v805, %v2537
        %v2799 = vadd.f32 %v806, %v2539
        %v2800 = vadd.f32 %v807, %v2542
        %v2801 = vadd.f32 %v808, %v2544
        %vm2802 = vcmask 523264
        %2803 = vst.msk [vmem:[#allocation2] sm:$0xff] %vm2802, %v2546
        %2804 = vst.msk [vmem:[#allocation2 + $0x8] sm:$0xff] %vm2802, %v2547
        %2805 = vst.msk [vmem:[#allocation2 + $0x10] sm:$0xff] %vm2802, %v2548
        %2806 = vst.msk [vmem:[#allocation2 + $0x18] sm:$0xff] %vm2802, %v2549
        %2807 = vst.msk [vmem:[#allocation2 + $0x20] sm:$0xff] %vm2802, %v2550
        %2808 = vst.msk [vmem:[#allocation2 + $0x28] sm:$0xff] %vm2802, %v2551
        %2809 = vst.msk [vmem:[#allocation2 + $0x30] sm:$0xff] %vm2802, %v2552
        %2810 = vst.msk [vmem:[#allocation2 + $0x38] sm:$0xff] %vm2802, %v2553
        %2811 = vst.msk [vmem:[#allocation2 + $0x40] sm:$0xff] %vm2802, %v2554
        %2812 = vst.msk [vmem:[#allocation2 + $0x48] sm:$0xff] %vm2802, %v2555
        %2813 = vst.msk [vmem:[#allocation2 + $0x50] sm:$0xff] %vm2802, %v2556
        %2814 = vst.msk [vmem:[#allocation2 + $0x58] sm:$0xff] %vm2802, %v2557
        %2815 = vst.msk [vmem:[#allocation2 + $0x60] sm:$0xff] %vm2802, %v2558
        %2816 = vst.msk [vmem:[#allocation2 + $0x68] sm:$0xff] %vm2802, %v2559
        %2817 = vst.msk [vmem:[#allocation2 + $0x70] sm:$0xff] %vm2802, %v2560
        %2818 = vst.msk [vmem:[#allocation2 + $0x78] sm:$0xff] %vm2802, %v2561
        %2819 = vst.msk [vmem:[#allocation2 + $0x80] sm:$0xff] %vm2802, %v2562
        %2820 = vst.msk [vmem:[#allocation2 + $0x88] sm:$0xff] %vm2802, %v2563
        %2821 = vst.msk [vmem:[#allocation2 + $0x90] sm:$0xff] %vm2802, %v2564
        %2822 = vst.msk [vmem:[#allocation2 + $0x98] sm:$0xff] %vm2802, %v2565
        %2823 = vst.msk [vmem:[#allocation2 + $0xa0] sm:$0xff] %vm2802, %v2566
        %2824 = vst.msk [vmem:[#allocation2 + $0xa8] sm:$0xff] %vm2802, %v2567
        %2825 = vst.msk [vmem:[#allocation2 + $0xb0] sm:$0xff] %vm2802, %v2568
        %2826 = vst.msk [vmem:[#allocation2 + $0xb8] sm:$0xff] %vm2802, %v2569
        %2827 = vst.msk [vmem:[#allocation2 + $0xc0] sm:$0xff] %vm2802, %v2570
        %2828 = vst.msk [vmem:[#allocation2 + $0xc8] sm:$0xff] %vm2802, %v2571
        %2829 = vst.msk [vmem:[#allocation2 + $0xd0] sm:$0xff] %vm2802, %v2572
        %2830 = vst.msk [vmem:[#allocation2 + $0xd8] sm:$0xff] %vm2802, %v2573
        %2831 = vst.msk [vmem:[#allocation2 + $0xe0] sm:$0xff] %vm2802, %v2574
        %2832 = vst.msk [vmem:[#allocation2 + $0xe8] sm:$0xff] %vm2802, %v2575
        %2833 = vst.msk [vmem:[#allocation2 + $0xf0] sm:$0xff] %vm2802, %v2576
        %2834 = vst.msk [vmem:[#allocation2 + $0xf8] sm:$0xff] %vm2802, %v2577
        %2835 = vst.msk [vmem:[#allocation2 + $0x100] sm:$0xff] %vm2802, %v2578
        %2836 = vst.msk [vmem:[#allocation2 + $0x108] sm:$0xff] %vm2802, %v2579
        %2837 = vst.msk [vmem:[#allocation2 + $0x110] sm:$0xff] %vm2802, %v2580
        %2838 = vst.msk [vmem:[#allocation2 + $0x118] sm:$0xff] %vm2802, %v2581
        %2839 = vst.msk [vmem:[#allocation2 + $0x120] sm:$0xff] %vm2802, %v2582
        %2840 = vst.msk [vmem:[#allocation2 + $0x128] sm:$0xff] %vm2802, %v2583
        %2841 = vst.msk [vmem:[#allocation2 + $0x130] sm:$0xff] %vm2802, %v2584
        %2842 = vst.msk [vmem:[#allocation2 + $0x138] sm:$0xff] %vm2802, %v2585
        %2843 = vst.msk [vmem:[#allocation2 + $0x140] sm:$0xff] %vm2802, %v2586
        %2844 = vst.msk [vmem:[#allocation2 + $0x148] sm:$0xff] %vm2802, %v2587
        %2845 = vst.msk [vmem:[#allocation2 + $0x150] sm:$0xff] %vm2802, %v2588
        %2846 = vst.msk [vmem:[#allocation2 + $0x158] sm:$0xff] %vm2802, %v2589
        %2847 = vst.msk [vmem:[#allocation2 + $0x160] sm:$0xff] %vm2802, %v2590
        %2848 = vst.msk [vmem:[#allocation2 + $0x168] sm:$0xff] %vm2802, %v2591
        %2849 = vst.msk [vmem:[#allocation2 + $0x170] sm:$0xff] %vm2802, %v2592
        %2850 = vst.msk [vmem:[#allocation2 + $0x178] sm:$0xff] %vm2802, %v2593
        %2851 = vst.msk [vmem:[#allocation2 + $0x180] sm:$0xff] %vm2802, %v2594
        %2852 = vst.msk [vmem:[#allocation2 + $0x188] sm:$0xff] %vm2802, %v2595
        %2853 = vst.msk [vmem:[#allocation2 + $0x190] sm:$0xff] %vm2802, %v2596
        %2854 = vst.msk [vmem:[#allocation2 + $0x198] sm:$0xff] %vm2802, %v2597
        %2855 = vst.msk [vmem:[#allocation2 + $0x1a0] sm:$0xff] %vm2802, %v2598
        %2856 = vst.msk [vmem:[#allocation2 + $0x1a8] sm:$0xff] %vm2802, %v2599
        %2857 = vst.msk [vmem:[#allocation2 + $0x1b0] sm:$0xff] %vm2802, %v2600
        %2858 = vst.msk [vmem:[#allocation2 + $0x1b8] sm:$0xff] %vm2802, %v2601
        %2859 = vst.msk [vmem:[#allocation2 + $0x1c0] sm:$0xff] %vm2802, %v2602
        %2860 = vst.msk [vmem:[#allocation2 + $0x1c8] sm:$0xff] %vm2802, %v2603
        %2861 = vst.msk [vmem:[#allocation2 + $0x1d0] sm:$0xff] %vm2802, %v2604
        %2862 = vst.msk [vmem:[#allocation2 + $0x1d8] sm:$0xff] %vm2802, %v2605
        %2863 = vst.msk [vmem:[#allocation2 + $0x1e0] sm:$0xff] %vm2802, %v2606
        %2864 = vst.msk [vmem:[#allocation2 + $0x1e8] sm:$0xff] %vm2802, %v2607
        %2865 = vst.msk [vmem:[#allocation2 + $0x1f0] sm:$0xff] %vm2802, %v2608
        %2866 = vst.msk [vmem:[#allocation2 + $0x1f8] sm:$0xff] %vm2802, %v2609
        %2867 = vst.msk [vmem:[#allocation2 + $0x200] sm:$0xff] %vm2802, %v2610
        %2868 = vst.msk [vmem:[#allocation2 + $0x208] sm:$0xff] %vm2802, %v2611
        %2869 = vst.msk [vmem:[#allocation2 + $0x210] sm:$0xff] %vm2802, %v2612
        %2870 = vst.msk [vmem:[#allocation2 + $0x218] sm:$0xff] %vm2802, %v2613
        %2871 = vst.msk [vmem:[#allocation2 + $0x220] sm:$0xff] %vm2802, %v2614
        %2872 = vst.msk [vmem:[#allocation2 + $0x228] sm:$0xff] %vm2802, %v2615
        %2873 = vst.msk [vmem:[#allocation2 + $0x230] sm:$0xff] %vm2802, %v2616
        %2874 = vst.msk [vmem:[#allocation2 + $0x238] sm:$0xff] %vm2802, %v2617
        %2875 = vst.msk [vmem:[#allocation2 + $0x240] sm:$0xff] %vm2802, %v2618
        %2876 = vst.msk [vmem:[#allocation2 + $0x248] sm:$0xff] %vm2802, %v2619
        %2877 = vst.msk [vmem:[#allocation2 + $0x250] sm:$0xff] %vm2802, %v2620
        %2878 = vst.msk [vmem:[#allocation2 + $0x258] sm:$0xff] %vm2802, %v2621
        %2879 = vst.msk [vmem:[#allocation2 + $0x260] sm:$0xff] %vm2802, %v2622
        %2880 = vst.msk [vmem:[#allocation2 + $0x268] sm:$0xff] %vm2802, %v2623
        %2881 = vst.msk [vmem:[#allocation2 + $0x270] sm:$0xff] %vm2802, %v2624
        %2882 = vst.msk [vmem:[#allocation2 + $0x278] sm:$0xff] %vm2802, %v2625
        %2883 = vst.msk [vmem:[#allocation2 + $0x280] sm:$0xff] %vm2802, %v2626
        %2884 = vst.msk [vmem:[#allocation2 + $0x288] sm:$0xff] %vm2802, %v2627
        %2885 = vst.msk [vmem:[#allocation2 + $0x290] sm:$0xff] %vm2802, %v2628
        %2886 = vst.msk [vmem:[#allocation2 + $0x298] sm:$0xff] %vm2802, %v2629
        %2887 = vst.msk [vmem:[#allocation2 + $0x2a0] sm:$0xff] %vm2802, %v2630
        %2888 = vst.msk [vmem:[#allocation2 + $0x2a8] sm:$0xff] %vm2802, %v2631
        %2889 = vst.msk [vmem:[#allocation2 + $0x2b0] sm:$0xff] %vm2802, %v2632
        %2890 = vst.msk [vmem:[#allocation2 + $0x2b8] sm:$0xff] %vm2802, %v2633
        %2891 = vst.msk [vmem:[#allocation2 + $0x2c0] sm:$0xff] %vm2802, %v2634
        %2892 = vst.msk [vmem:[#allocation2 + $0x2c8] sm:$0xff] %vm2802, %v2635
        %2893 = vst.msk [vmem:[#allocation2 + $0x2d0] sm:$0xff] %vm2802, %v2636
        %2894 = vst.msk [vmem:[#allocation2 + $0x2d8] sm:$0xff] %vm2802, %v2637
        %2895 = vst.msk [vmem:[#allocation2 + $0x2e0] sm:$0xff] %vm2802, %v2638
        %2896 = vst.msk [vmem:[#allocation2 + $0x2e8] sm:$0xff] %vm2802, %v2639
        %2897 = vst.msk [vmem:[#allocation2 + $0x2f0] sm:$0xff] %vm2802, %v2640
        %2898 = vst.msk [vmem:[#allocation2 + $0x2f8] sm:$0xff] %vm2802, %v2641
        %2899 = vst.msk [vmem:[#allocation2 + $0x300] sm:$0xff] %vm2802, %v2642
        %2900 = vst.msk [vmem:[#allocation2 + $0x308] sm:$0xff] %vm2802, %v2643
        %2901 = vst.msk [vmem:[#allocation2 + $0x310] sm:$0xff] %vm2802, %v2644
        %2902 = vst.msk [vmem:[#allocation2 + $0x318] sm:$0xff] %vm2802, %v2645
        %2903 = vst.msk [vmem:[#allocation2 + $0x320] sm:$0xff] %vm2802, %v2646
        %2904 = vst.msk [vmem:[#allocation2 + $0x328] sm:$0xff] %vm2802, %v2647
        %2905 = vst.msk [vmem:[#allocation2 + $0x330] sm:$0xff] %vm2802, %v2648
        %2906 = vst.msk [vmem:[#allocation2 + $0x338] sm:$0xff] %vm2802, %v2649
        %2907 = vst.msk [vmem:[#allocation2 + $0x340] sm:$0xff] %vm2802, %v2650
        %2908 = vst.msk [vmem:[#allocation2 + $0x348] sm:$0xff] %vm2802, %v2651
        %2909 = vst.msk [vmem:[#allocation2 + $0x350] sm:$0xff] %vm2802, %v2652
        %2910 = vst.msk [vmem:[#allocation2 + $0x358] sm:$0xff] %vm2802, %v2653
        %2911 = vst.msk [vmem:[#allocation2 + $0x360] sm:$0xff] %vm2802, %v2654
        %2912 = vst.msk [vmem:[#allocation2 + $0x368] sm:$0xff] %vm2802, %v2655
        %2913 = vst.msk [vmem:[#allocation2 + $0x370] sm:$0xff] %vm2802, %v2656
        %2914 = vst.msk [vmem:[#allocation2 + $0x378] sm:$0xff] %vm2802, %v2657
        %2915 = vst.msk [vmem:[#allocation2 + $0x380] sm:$0xff] %vm2802, %v2658
        %2916 = vst.msk [vmem:[#allocation2 + $0x388] sm:$0xff] %vm2802, %v2659
        %2917 = vst.msk [vmem:[#allocation2 + $0x390] sm:$0xff] %vm2802, %v2660
        %2918 = vst.msk [vmem:[#allocation2 + $0x398] sm:$0xff] %vm2802, %v2661
        %2919 = vst.msk [vmem:[#allocation2 + $0x3a0] sm:$0xff] %vm2802, %v2662
        %2920 = vst.msk [vmem:[#allocation2 + $0x3a8] sm:$0xff] %vm2802, %v2663
        %2921 = vst.msk [vmem:[#allocation2 + $0x3b0] sm:$0xff] %vm2802, %v2664
        %2922 = vst.msk [vmem:[#allocation2 + $0x3b8] sm:$0xff] %vm2802, %v2665
        %2923 = vst.msk [vmem:[#allocation2 + $0x3c0] sm:$0xff] %vm2802, %v2666
        %2924 = vst.msk [vmem:[#allocation2 + $0x3c8] sm:$0xff] %vm2802, %v2667
        %2925 = vst.msk [vmem:[#allocation2 + $0x3d0] sm:$0xff] %vm2802, %v2668
        %2926 = vst.msk [vmem:[#allocation2 + $0x3d8] sm:$0xff] %vm2802, %v2669
        %2927 = vst.msk [vmem:[#allocation2 + $0x3e0] sm:$0xff] %vm2802, %v2670
        %2928 = vst.msk [vmem:[#allocation2 + $0x3e8] sm:$0xff] %vm2802, %v2671
        %2929 = vst.msk [vmem:[#allocation2 + $0x3f0] sm:$0xff] %vm2802, %v2672
        %2930 = vst.msk [vmem:[#allocation2 + $0x3f8] sm:$0xff] %vm2802, %v2673
        %2931 = vst.msk [vmem:[#allocation2 + $0x400] sm:$0xff] %vm2802, %v2674
        %2932 = vst.msk [vmem:[#allocation2 + $0x408] sm:$0xff] %vm2802, %v2675
        %2933 = vst.msk [vmem:[#allocation2 + $0x410] sm:$0xff] %vm2802, %v2676
        %2934 = vst.msk [vmem:[#allocation2 + $0x418] sm:$0xff] %vm2802, %v2677
        %2935 = vst.msk [vmem:[#allocation2 + $0x420] sm:$0xff] %vm2802, %v2678
        %2936 = vst.msk [vmem:[#allocation2 + $0x428] sm:$0xff] %vm2802, %v2679
        %2937 = vst.msk [vmem:[#allocation2 + $0x430] sm:$0xff] %vm2802, %v2680
        %2938 = vst.msk [vmem:[#allocation2 + $0x438] sm:$0xff] %vm2802, %v2681
        %2939 = vst.msk [vmem:[#allocation2 + $0x440] sm:$0xff] %vm2802, %v2682
        %2940 = vst.msk [vmem:[#allocation2 + $0x448] sm:$0xff] %vm2802, %v2683
        %2941 = vst.msk [vmem:[#allocation2 + $0x450] sm:$0xff] %vm2802, %v2684
        %2942 = vst.msk [vmem:[#allocation2 + $0x458] sm:$0xff] %vm2802, %v2685
        %2943 = vst.msk [vmem:[#allocation2 + $0x460] sm:$0xff] %vm2802, %v2686
        %2944 = vst.msk [vmem:[#allocation2 + $0x468] sm:$0xff] %vm2802, %v2687
        %2945 = vst.msk [vmem:[#allocation2 + $0x470] sm:$0xff] %vm2802, %v2688
        %2946 = vst.msk [vmem:[#allocation2 + $0x478] sm:$0xff] %vm2802, %v2689
        %2947 = vst.msk [vmem:[#allocation2 + $0x480] sm:$0xff] %vm2802, %v2690
        %2948 = vst.msk [vmem:[#allocation2 + $0x488] sm:$0xff] %vm2802, %v2691
        %2949 = vst.msk [vmem:[#allocation2 + $0x490] sm:$0xff] %vm2802, %v2692
        %2950 = vst.msk [vmem:[#allocation2 + $0x498] sm:$0xff] %vm2802, %v2693
        %2951 = vst.msk [vmem:[#allocation2 + $0x4a0] sm:$0xff] %vm2802, %v2694
        %2952 = vst.msk [vmem:[#allocation2 + $0x4a8] sm:$0xff] %vm2802, %v2695
        %2953 = vst.msk [vmem:[#allocation2 + $0x4b0] sm:$0xff] %vm2802, %v2696
        %2954 = vst.msk [vmem:[#allocation2 + $0x4b8] sm:$0xff] %vm2802, %v2697
        %2955 = vst.msk [vmem:[#allocation2 + $0x4c0] sm:$0xff] %vm2802, %v2698
        %2956 = vst.msk [vmem:[#allocation2 + $0x4c8] sm:$0xff] %vm2802, %v2699
        %2957 = vst.msk [vmem:[#allocation2 + $0x4d0] sm:$0xff] %vm2802, %v2700
        %2958 = vst.msk [vmem:[#allocation2 + $0x4d8] sm:$0xff] %vm2802, %v2701
        %2959 = vst.msk [vmem:[#allocation2 + $0x4e0] sm:$0xff] %vm2802, %v2702
        %2960 = vst.msk [vmem:[#allocation2 + $0x4e8] sm:$0xff] %vm2802, %v2703
        %2961 = vst.msk [vmem:[#allocation2 + $0x4f0] sm:$0xff] %vm2802, %v2704
        %2962 = vst.msk [vmem:[#allocation2 + $0x4f8] sm:$0xff] %vm2802, %v2705
        %2963 = vst.msk [vmem:[#allocation2 + $0x500] sm:$0xff] %vm2802, %v2706
        %2964 = vst.msk [vmem:[#allocation2 + $0x508] sm:$0xff] %vm2802, %v2707
        %2965 = vst.msk [vmem:[#allocation2 + $0x510] sm:$0xff] %vm2802, %v2708
        %2966 = vst.msk [vmem:[#allocation2 + $0x518] sm:$0xff] %vm2802, %v2709
        %2967 = vst.msk [vmem:[#allocation2 + $0x520] sm:$0xff] %vm2802, %v2710
        %2968 = vst.msk [vmem:[#allocation2 + $0x528] sm:$0xff] %vm2802, %v2711
        %2969 = vst.msk [vmem:[#allocation2 + $0x530] sm:$0xff] %vm2802, %v2712
        %2970 = vst.msk [vmem:[#allocation2 + $0x538] sm:$0xff] %vm2802, %v2713
        %2971 = vst.msk [vmem:[#allocation2 + $0x540] sm:$0xff] %vm2802, %v2714
        %2972 = vst.msk [vmem:[#allocation2 + $0x548] sm:$0xff] %vm2802, %v2715
        %2973 = vst.msk [vmem:[#allocation2 + $0x550] sm:$0xff] %vm2802, %v2716
        %2974 = vst.msk [vmem:[#allocation2 + $0x558] sm:$0xff] %vm2802, %v2717
        %2975 = vst.msk [vmem:[#allocation2 + $0x560] sm:$0xff] %vm2802, %v2718
        %2976 = vst.msk [vmem:[#allocation2 + $0x568] sm:$0xff] %vm2802, %v2719
        %2977 = vst.msk [vmem:[#allocation2 + $0x570] sm:$0xff] %vm2802, %v2720
        %2978 = vst.msk [vmem:[#allocation2 + $0x578] sm:$0xff] %vm2802, %v2721
        %2979 = vst.msk [vmem:[#allocation2 + $0x580] sm:$0xff] %vm2802, %v2722
        %2980 = vst.msk [vmem:[#allocation2 + $0x588] sm:$0xff] %vm2802, %v2723
        %2981 = vst.msk [vmem:[#allocation2 + $0x590] sm:$0xff] %vm2802, %v2724
        %2982 = vst.msk [vmem:[#allocation2 + $0x598] sm:$0xff] %vm2802, %v2725
        %2983 = vst.msk [vmem:[#allocation2 + $0x5a0] sm:$0xff] %vm2802, %v2726
        %2984 = vst.msk [vmem:[#allocation2 + $0x5a8] sm:$0xff] %vm2802, %v2727
        %2985 = vst.msk [vmem:[#allocation2 + $0x5b0] sm:$0xff] %vm2802, %v2728
        %2986 = vst.msk [vmem:[#allocation2 + $0x5b8] sm:$0xff] %vm2802, %v2729
        %2987 = vst.msk [vmem:[#allocation2 + $0x5c0] sm:$0xff] %vm2802, %v2730
        %2988 = vst.msk [vmem:[#allocation2 + $0x5c8] sm:$0xff] %vm2802, %v2731
        %2989 = vst.msk [vmem:[#allocation2 + $0x5d0] sm:$0xff] %vm2802, %v2732
        %2990 = vst.msk [vmem:[#allocation2 + $0x5d8] sm:$0xff] %vm2802, %v2733
        %2991 = vst.msk [vmem:[#allocation2 + $0x5e0] sm:$0xff] %vm2802, %v2734
        %2992 = vst.msk [vmem:[#allocation2 + $0x5e8] sm:$0xff] %vm2802, %v2735
        %2993 = vst.msk [vmem:[#allocation2 + $0x5f0] sm:$0xff] %vm2802, %v2736
        %2994 = vst.msk [vmem:[#allocation2 + $0x5f8] sm:$0xff] %vm2802, %v2737
        %2995 = vst.msk [vmem:[#allocation2 + $0x600] sm:$0xff] %vm2802, %v2738
        %2996 = vst.msk [vmem:[#allocation2 + $0x608] sm:$0xff] %vm2802, %v2739
        %2997 = vst.msk [vmem:[#allocation2 + $0x610] sm:$0xff] %vm2802, %v2740
        %2998 = vst.msk [vmem:[#allocation2 + $0x618] sm:$0xff] %vm2802, %v2741
        %2999 = vst.msk [vmem:[#allocation2 + $0x620] sm:$0xff] %vm2802, %v2742
        %3000 = vst.msk [vmem:[#allocation2 + $0x628] sm:$0xff] %vm2802, %v2743
        %3001 = vst.msk [vmem:[#allocation2 + $0x630] sm:$0xff] %vm2802, %v2744
        %3002 = vst.msk [vmem:[#allocation2 + $0x638] sm:$0xff] %vm2802, %v2745
        %3003 = vst.msk [vmem:[#allocation2 + $0x640] sm:$0xff] %vm2802, %v2746
        %3004 = vst.msk [vmem:[#allocation2 + $0x648] sm:$0xff] %vm2802, %v2747
        %3005 = vst.msk [vmem:[#allocation2 + $0x650] sm:$0xff] %vm2802, %v2748
        %3006 = vst.msk [vmem:[#allocation2 + $0x658] sm:$0xff] %vm2802, %v2749
        %3007 = vst.msk [vmem:[#allocation2 + $0x660] sm:$0xff] %vm2802, %v2750
        %3008 = vst.msk [vmem:[#allocation2 + $0x668] sm:$0xff] %vm2802, %v2751
        %3009 = vst.msk [vmem:[#allocation2 + $0x670] sm:$0xff] %vm2802, %v2752
        %3010 = vst.msk [vmem:[#allocation2 + $0x678] sm:$0xff] %vm2802, %v2753
        %3011 = vst.msk [vmem:[#allocation2 + $0x680] sm:$0xff] %vm2802, %v2754
        %3012 = vst.msk [vmem:[#allocation2 + $0x688] sm:$0xff] %vm2802, %v2755
        %3013 = vst.msk [vmem:[#allocation2 + $0x690] sm:$0xff] %vm2802, %v2756
        %3014 = vst.msk [vmem:[#allocation2 + $0x698] sm:$0xff] %vm2802, %v2757
        %3015 = vst.msk [vmem:[#allocation2 + $0x6a0] sm:$0xff] %vm2802, %v2758
        %3016 = vst.msk [vmem:[#allocation2 + $0x6a8] sm:$0xff] %vm2802, %v2759
        %3017 = vst.msk [vmem:[#allocation2 + $0x6b0] sm:$0xff] %vm2802, %v2760
        %3018 = vst.msk [vmem:[#allocation2 + $0x6b8] sm:$0xff] %vm2802, %v2761
        %3019 = vst.msk [vmem:[#allocation2 + $0x6c0] sm:$0xff] %vm2802, %v2762
        %3020 = vst.msk [vmem:[#allocation2 + $0x6c8] sm:$0xff] %vm2802, %v2763
        %3021 = vst.msk [vmem:[#allocation2 + $0x6d0] sm:$0xff] %vm2802, %v2764
        %3022 = vst.msk [vmem:[#allocation2 + $0x6d8] sm:$0xff] %vm2802, %v2765
        %3023 = vst.msk [vmem:[#allocation2 + $0x6e0] sm:$0xff] %vm2802, %v2766
        %3024 = vst.msk [vmem:[#allocation2 + $0x6e8] sm:$0xff] %vm2802, %v2767
        %3025 = vst.msk [vmem:[#allocation2 + $0x6f0] sm:$0xff] %vm2802, %v2768
        %3026 = vst.msk [vmem:[#allocation2 + $0x6f8] sm:$0xff] %vm2802, %v2769
        %3027 = vst.msk [vmem:[#allocation2 + $0x700] sm:$0xff] %vm2802, %v2770
        %3028 = vst.msk [vmem:[#allocation2 + $0x708] sm:$0xff] %vm2802, %v2771
        %3029 = vst.msk [vmem:[#allocation2 + $0x710] sm:$0xff] %vm2802, %v2772
        %3030 = vst.msk [vmem:[#allocation2 + $0x718] sm:$0xff] %vm2802, %v2773
        %3031 = vst.msk [vmem:[#allocation2 + $0x720] sm:$0xff] %vm2802, %v2774
        %3032 = vst.msk [vmem:[#allocation2 + $0x728] sm:$0xff] %vm2802, %v2775
        %3033 = vst.msk [vmem:[#allocation2 + $0x730] sm:$0xff] %vm2802, %v2776
        %3034 = vst.msk [vmem:[#allocation2 + $0x738] sm:$0xff] %vm2802, %v2777
        %3035 = vst.msk [vmem:[#allocation2 + $0x740] sm:$0xff] %vm2802, %v2778
        %3036 = vst.msk [vmem:[#allocation2 + $0x748] sm:$0xff] %vm2802, %v2779
        %3037 = vst.msk [vmem:[#allocation2 + $0x750] sm:$0xff] %vm2802, %v2780
        %3038 = vst.msk [vmem:[#allocation2 + $0x758] sm:$0xff] %vm2802, %v2781
        %3039 = vst.msk [vmem:[#allocation2 + $0x760] sm:$0xff] %vm2802, %v2782
        %3040 = vst.msk [vmem:[#allocation2 + $0x768] sm:$0xff] %vm2802, %v2783
        %3041 = vst.msk [vmem:[#allocation2 + $0x770] sm:$0xff] %vm2802, %v2784
        %3042 = vst.msk [vmem:[#allocation2 + $0x778] sm:$0xff] %vm2802, %v2785
        %3043 = vst.msk [vmem:[#allocation2 + $0x780] sm:$0xff] %vm2802, %v2786
        %3044 = vst.msk [vmem:[#allocation2 + $0x788] sm:$0xff] %vm2802, %v2787
        %3045 = vst.msk [vmem:[#allocation2 + $0x790] sm:$0xff] %vm2802, %v2788
        %3046 = vst.msk [vmem:[#allocation2 + $0x798] sm:$0xff] %vm2802, %v2789
        %3047 = vst.msk [vmem:[#allocation2 + $0x7a0] sm:$0xff] %vm2802, %v2790
        %3048 = vst.msk [vmem:[#allocation2 + $0x7a8] sm:$0xff] %vm2802, %v2791
        %3049 = vst.msk [vmem:[#allocation2 + $0x7b0] sm:$0xff] %vm2802, %v2792
        %3050 = vst.msk [vmem:[#allocation2 + $0x7b8] sm:$0xff] %vm2802, %v2793
        %3051 = vst.msk [vmem:[#allocation2 + $0x7c0] sm:$0xff] %vm2802, %v2794
        %3052 = vst.msk [vmem:[#allocation2 + $0x7c8] sm:$0xff] %vm2802, %v2795
        %3053 = vst.msk [vmem:[#allocation2 + $0x7d0] sm:$0xff] %vm2802, %v2796
        %3054 = vst.msk [vmem:[#allocation2 + $0x7d8] sm:$0xff] %vm2802, %v2797
        %3055 = vst.msk [vmem:[#allocation2 + $0x7e0] sm:$0xff] %vm2802, %v2798
        %3056 = vst.msk [vmem:[#allocation2 + $0x7e8] sm:$0xff] %vm2802, %v2799
        %3057 = vst.msk [vmem:[#allocation2 + $0x7f0] sm:$0xff] %vm2802, %v2800
        %3058 = vst.msk [vmem:[#allocation2 + $0x7f8] sm:$0xff] %vm2802, %v2801
        // Predicated region
        $region41: #{conv3d.1} parent=35 // pred_check
          %p3059 = pneg %p292
        $region42: #{conv3d.1} parent=35 // pred_check_branch
          %3061 = sbr.rel (%p3059) target = $region44
        $region43: #{conv3d.1} parent=35 // pred_region
          %v3062 = vld [vmem:[#allocation2] sm:$0xff]
          %v3063 = vld [vmem:[#allocation2 + $0x8] sm:$0xff]
          %v3064 = vld [vmem:[#allocation2 + $0x10] sm:$0xff]
          %v3065 = vld [vmem:[#allocation2 + $0x18] sm:$0xff]
          %v3066 = vld [vmem:[#allocation2 + $0x20] sm:$0xff]
          %v3067 = vld [vmem:[#allocation2 + $0x28] sm:$0xff]
          %v3068 = vld [vmem:[#allocation2 + $0x30] sm:$0xff]
          %v3069 = vld [vmem:[#allocation2 + $0x38] sm:$0xff]
          %v3070 = vld [vmem:[#allocation2 + $0x40] sm:$0xff]
          %v3071 = vld [vmem:[#allocation2 + $0x48] sm:$0xff]
          %v3072 = vld [vmem:[#allocation2 + $0x50] sm:$0xff]
          %v3073 = vld [vmem:[#allocation2 + $0x58] sm:$0xff]
          %v3074 = vld [vmem:[#allocation2 + $0x60] sm:$0xff]
          %v3075 = vld [vmem:[#allocation2 + $0x68] sm:$0xff]
          %v3076 = vld [vmem:[#allocation2 + $0x70] sm:$0xff]
          %v3077 = vld [vmem:[#allocation2 + $0x78] sm:$0xff]
          %v3078 = vld [vmem:[#allocation2 + $0x80] sm:$0xff]
          %v3079 = vld [vmem:[#allocation2 + $0x88] sm:$0xff]
          %v3080 = vld [vmem:[#allocation2 + $0x90] sm:$0xff]
          %v3081 = vld [vmem:[#allocation2 + $0x98] sm:$0xff]
          %v3082 = vld [vmem:[#allocation2 + $0xa0] sm:$0xff]
          %v3083 = vld [vmem:[#allocation2 + $0xa8] sm:$0xff]
          %v3084 = vld [vmem:[#allocation2 + $0xb0] sm:$0xff]
          %v3085 = vld [vmem:[#allocation2 + $0xb8] sm:$0xff]
          %v3086 = vld [vmem:[#allocation2 + $0xc0] sm:$0xff]
          %v3087 = vld [vmem:[#allocation2 + $0xc8] sm:$0xff]
          %v3088 = vld [vmem:[#allocation2 + $0xd0] sm:$0xff]
          %v3089 = vld [vmem:[#allocation2 + $0xd8] sm:$0xff]
          %v3090 = vld [vmem:[#allocation2 + $0xe0] sm:$0xff]
          %v3091 = vld [vmem:[#allocation2 + $0xe8] sm:$0xff]
          %v3092 = vld [vmem:[#allocation2 + $0xf0] sm:$0xff]
          %v3093 = vld [vmem:[#allocation2 + $0xf8] sm:$0xff]
          %v3094 = vld [vmem:[#allocation2 + $0x100] sm:$0xff]
          %v3095 = vld [vmem:[#allocation2 + $0x108] sm:$0xff]
          %v3096 = vld [vmem:[#allocation2 + $0x110] sm:$0xff]
          %v3097 = vld [vmem:[#allocation2 + $0x118] sm:$0xff]
          %v3098 = vld [vmem:[#allocation2 + $0x120] sm:$0xff]
          %v3099 = vld [vmem:[#allocation2 + $0x128] sm:$0xff]
          %v3100 = vld [vmem:[#allocation2 + $0x130] sm:$0xff]
          %v3101 = vld [vmem:[#allocation2 + $0x138] sm:$0xff]
          %v3102 = vld [vmem:[#allocation2 + $0x140] sm:$0xff]
          %v3103 = vld [vmem:[#allocation2 + $0x148] sm:$0xff]
          %v3104 = vld [vmem:[#allocation2 + $0x150] sm:$0xff]
          %v3105 = vld [vmem:[#allocation2 + $0x158] sm:$0xff]
          %v3106 = vld [vmem:[#allocation2 + $0x160] sm:$0xff]
          %v3107 = vld [vmem:[#allocation2 + $0x168] sm:$0xff]
          %v3108 = vld [vmem:[#allocation2 + $0x170] sm:$0xff]
          %v3109 = vld [vmem:[#allocation2 + $0x178] sm:$0xff]
          %v3110 = vld [vmem:[#allocation2 + $0x180] sm:$0xff]
          %v3111 = vld [vmem:[#allocation2 + $0x188] sm:$0xff]
          %v3112 = vld [vmem:[#allocation2 + $0x190] sm:$0xff]
          %v3113 = vld [vmem:[#allocation2 + $0x198] sm:$0xff]
          %v3114 = vld [vmem:[#allocation2 + $0x1a0] sm:$0xff]
          %v3115 = vld [vmem:[#allocation2 + $0x1a8] sm:$0xff]
          %v3116 = vld [vmem:[#allocation2 + $0x1b0] sm:$0xff]
          %v3117 = vld [vmem:[#allocation2 + $0x1b8] sm:$0xff]
          %v3118 = vld [vmem:[#allocation2 + $0x1c0] sm:$0xff]
          %v3119 = vld [vmem:[#allocation2 + $0x1c8] sm:$0xff]
          %v3120 = vld [vmem:[#allocation2 + $0x1d0] sm:$0xff]
          %v3121 = vld [vmem:[#allocation2 + $0x1d8] sm:$0xff]
          %v3122 = vld [vmem:[#allocation2 + $0x1e0] sm:$0xff]
          %v3123 = vld [vmem:[#allocation2 + $0x1e8] sm:$0xff]
          %v3124 = vld [vmem:[#allocation2 + $0x1f0] sm:$0xff]
          %v3125 = vld [vmem:[#allocation2 + $0x1f8] sm:$0xff]
          %v3126 = vld [vmem:[#allocation2 + $0x200] sm:$0xff]
          %v3127 = vld [vmem:[#allocation2 + $0x208] sm:$0xff]
          %v3128 = vld [vmem:[#allocation2 + $0x210] sm:$0xff]
          %v3129 = vld [vmem:[#allocation2 + $0x218] sm:$0xff]
          %v3130 = vld [vmem:[#allocation2 + $0x220] sm:$0xff]
          %v3131 = vld [vmem:[#allocation2 + $0x228] sm:$0xff]
          %v3132 = vld [vmem:[#allocation2 + $0x230] sm:$0xff]
          %v3133 = vld [vmem:[#allocation2 + $0x238] sm:$0xff]
          %v3134 = vld [vmem:[#allocation2 + $0x240] sm:$0xff]
          %v3135 = vld [vmem:[#allocation2 + $0x248] sm:$0xff]
          %v3136 = vld [vmem:[#allocation2 + $0x250] sm:$0xff]
          %v3137 = vld [vmem:[#allocation2 + $0x258] sm:$0xff]
          %v3138 = vld [vmem:[#allocation2 + $0x260] sm:$0xff]
          %v3139 = vld [vmem:[#allocation2 + $0x268] sm:$0xff]
          %v3140 = vld [vmem:[#allocation2 + $0x270] sm:$0xff]
          %v3141 = vld [vmem:[#allocation2 + $0x278] sm:$0xff]
          %v3142 = vld [vmem:[#allocation2 + $0x280] sm:$0xff]
          %v3143 = vld [vmem:[#allocation2 + $0x288] sm:$0xff]
          %v3144 = vld [vmem:[#allocation2 + $0x290] sm:$0xff]
          %v3145 = vld [vmem:[#allocation2 + $0x298] sm:$0xff]
          %v3146 = vld [vmem:[#allocation2 + $0x2a0] sm:$0xff]
          %v3147 = vld [vmem:[#allocation2 + $0x2a8] sm:$0xff]
          %v3148 = vld [vmem:[#allocation2 + $0x2b0] sm:$0xff]
          %v3149 = vld [vmem:[#allocation2 + $0x2b8] sm:$0xff]
          %v3150 = vld [vmem:[#allocation2 + $0x2c0] sm:$0xff]
          %v3151 = vld [vmem:[#allocation2 + $0x2c8] sm:$0xff]
          %v3152 = vld [vmem:[#allocation2 + $0x2d0] sm:$0xff]
          %v3153 = vld [vmem:[#allocation2 + $0x2d8] sm:$0xff]
          %v3154 = vld [vmem:[#allocation2 + $0x2e0] sm:$0xff]
          %v3155 = vld [vmem:[#allocation2 + $0x2e8] sm:$0xff]
          %v3156 = vld [vmem:[#allocation2 + $0x2f0] sm:$0xff]
          %v3157 = vld [vmem:[#allocation2 + $0x2f8] sm:$0xff]
          %v3158 = vld [vmem:[#allocation2 + $0x300] sm:$0xff]
          %v3159 = vld [vmem:[#allocation2 + $0x308] sm:$0xff]
          %v3160 = vld [vmem:[#allocation2 + $0x310] sm:$0xff]
          %v3161 = vld [vmem:[#allocation2 + $0x318] sm:$0xff]
          %v3162 = vld [vmem:[#allocation2 + $0x320] sm:$0xff]
          %v3163 = vld [vmem:[#allocation2 + $0x328] sm:$0xff]
          %v3164 = vld [vmem:[#allocation2 + $0x330] sm:$0xff]
          %v3165 = vld [vmem:[#allocation2 + $0x338] sm:$0xff]
          %v3166 = vld [vmem:[#allocation2 + $0x340] sm:$0xff]
          %v3167 = vld [vmem:[#allocation2 + $0x348] sm:$0xff]
          %v3168 = vld [vmem:[#allocation2 + $0x350] sm:$0xff]
          %v3169 = vld [vmem:[#allocation2 + $0x358] sm:$0xff]
          %v3170 = vld [vmem:[#allocation2 + $0x360] sm:$0xff]
          %v3171 = vld [vmem:[#allocation2 + $0x368] sm:$0xff]
          %v3172 = vld [vmem:[#allocation2 + $0x370] sm:$0xff]
          %v3173 = vld [vmem:[#allocation2 + $0x378] sm:$0xff]
          %v3174 = vld [vmem:[#allocation2 + $0x380] sm:$0xff]
          %v3175 = vld [vmem:[#allocation2 + $0x388] sm:$0xff]
          %v3176 = vld [vmem:[#allocation2 + $0x390] sm:$0xff]
          %v3177 = vld [vmem:[#allocation2 + $0x398] sm:$0xff]
          %v3178 = vld [vmem:[#allocation2 + $0x3a0] sm:$0xff]
          %v3179 = vld [vmem:[#allocation2 + $0x3a8] sm:$0xff]
          %v3180 = vld [vmem:[#allocation2 + $0x3b0] sm:$0xff]
          %v3181 = vld [vmem:[#allocation2 + $0x3b8] sm:$0xff]
          %v3182 = vld [vmem:[#allocation2 + $0x3c0] sm:$0xff]
          %v3183 = vld [vmem:[#allocation2 + $0x3c8] sm:$0xff]
          %v3184 = vld [vmem:[#allocation2 + $0x3d0] sm:$0xff]
          %v3185 = vld [vmem:[#allocation2 + $0x3d8] sm:$0xff]
          %v3186 = vld [vmem:[#allocation2 + $0x3e0] sm:$0xff]
          %v3187 = vld [vmem:[#allocation2 + $0x3e8] sm:$0xff]
          %v3188 = vld [vmem:[#allocation2 + $0x3f0] sm:$0xff]
          %v3189 = vld [vmem:[#allocation2 + $0x3f8] sm:$0xff]
          %v3190 = vld [vmem:[#allocation2 + $0x400] sm:$0xff]
          %v3191 = vld [vmem:[#allocation2 + $0x408] sm:$0xff]
          %v3192 = vld [vmem:[#allocation2 + $0x410] sm:$0xff]
          %v3193 = vld [vmem:[#allocation2 + $0x418] sm:$0xff]
          %v3194 = vld [vmem:[#allocation2 + $0x420] sm:$0xff]
          %v3195 = vld [vmem:[#allocation2 + $0x428] sm:$0xff]
          %v3196 = vld [vmem:[#allocation2 + $0x430] sm:$0xff]
          %v3197 = vld [vmem:[#allocation2 + $0x438] sm:$0xff]
          %v3198 = vld [vmem:[#allocation2 + $0x440] sm:$0xff]
          %v3199 = vld [vmem:[#allocation2 + $0x448] sm:$0xff]
          %v3200 = vld [vmem:[#allocation2 + $0x450] sm:$0xff]
          %v3201 = vld [vmem:[#allocation2 + $0x458] sm:$0xff]
          %v3202 = vld [vmem:[#allocation2 + $0x460] sm:$0xff]
          %v3203 = vld [vmem:[#allocation2 + $0x468] sm:$0xff]
          %v3204 = vld [vmem:[#allocation2 + $0x470] sm:$0xff]
          %v3205 = vld [vmem:[#allocation2 + $0x478] sm:$0xff]
          %v3206 = vld [vmem:[#allocation2 + $0x480] sm:$0xff]
          %v3207 = vld [vmem:[#allocation2 + $0x488] sm:$0xff]
          %v3208 = vld [vmem:[#allocation2 + $0x490] sm:$0xff]
          %v3209 = vld [vmem:[#allocation2 + $0x498] sm:$0xff]
          %v3210 = vld [vmem:[#allocation2 + $0x4a0] sm:$0xff]
          %v3211 = vld [vmem:[#allocation2 + $0x4a8] sm:$0xff]
          %v3212 = vld [vmem:[#allocation2 + $0x4b0] sm:$0xff]
          %v3213 = vld [vmem:[#allocation2 + $0x4b8] sm:$0xff]
          %v3214 = vld [vmem:[#allocation2 + $0x4c0] sm:$0xff]
          %v3215 = vld [vmem:[#allocation2 + $0x4c8] sm:$0xff]
          %v3216 = vld [vmem:[#allocation2 + $0x4d0] sm:$0xff]
          %v3217 = vld [vmem:[#allocation2 + $0x4d8] sm:$0xff]
          %v3218 = vld [vmem:[#allocation2 + $0x4e0] sm:$0xff]
          %v3219 = vld [vmem:[#allocation2 + $0x4e8] sm:$0xff]
          %v3220 = vld [vmem:[#allocation2 + $0x4f0] sm:$0xff]
          %v3221 = vld [vmem:[#allocation2 + $0x4f8] sm:$0xff]
          %v3222 = vld [vmem:[#allocation2 + $0x500] sm:$0xff]
          %v3223 = vld [vmem:[#allocation2 + $0x508] sm:$0xff]
          %v3224 = vld [vmem:[#allocation2 + $0x510] sm:$0xff]
          %v3225 = vld [vmem:[#allocation2 + $0x518] sm:$0xff]
          %v3226 = vld [vmem:[#allocation2 + $0x520] sm:$0xff]
          %v3227 = vld [vmem:[#allocation2 + $0x528] sm:$0xff]
          %v3228 = vld [vmem:[#allocation2 + $0x530] sm:$0xff]
          %v3229 = vld [vmem:[#allocation2 + $0x538] sm:$0xff]
          %v3230 = vld [vmem:[#allocation2 + $0x540] sm:$0xff]
          %v3231 = vld [vmem:[#allocation2 + $0x548] sm:$0xff]
          %v3232 = vld [vmem:[#allocation2 + $0x550] sm:$0xff]
          %v3233 = vld [vmem:[#allocation2 + $0x558] sm:$0xff]
          %v3234 = vld [vmem:[#allocation2 + $0x560] sm:$0xff]
          %v3235 = vld [vmem:[#allocation2 + $0x568] sm:$0xff]
          %v3236 = vld [vmem:[#allocation2 + $0x570] sm:$0xff]
          %v3237 = vld [vmem:[#allocation2 + $0x578] sm:$0xff]
          %v3238 = vld [vmem:[#allocation2 + $0x580] sm:$0xff]
          %v3239 = vld [vmem:[#allocation2 + $0x588] sm:$0xff]
          %v3240 = vld [vmem:[#allocation2 + $0x590] sm:$0xff]
          %v3241 = vld [vmem:[#allocation2 + $0x598] sm:$0xff]
          %v3242 = vld [vmem:[#allocation2 + $0x5a0] sm:$0xff]
          %v3243 = vld [vmem:[#allocation2 + $0x5a8] sm:$0xff]
          %v3244 = vld [vmem:[#allocation2 + $0x5b0] sm:$0xff]
          %v3245 = vld [vmem:[#allocation2 + $0x5b8] sm:$0xff]
          %v3246 = vld [vmem:[#allocation2 + $0x5c0] sm:$0xff]
          %v3247 = vld [vmem:[#allocation2 + $0x5c8] sm:$0xff]
          %v3248 = vld [vmem:[#allocation2 + $0x5d0] sm:$0xff]
          %v3249 = vld [vmem:[#allocation2 + $0x5d8] sm:$0xff]
          %v3250 = vld [vmem:[#allocation2 + $0x5e0] sm:$0xff]
          %v3251 = vld [vmem:[#allocation2 + $0x5e8] sm:$0xff]
          %v3252 = vld [vmem:[#allocation2 + $0x5f0] sm:$0xff]
          %v3253 = vld [vmem:[#allocation2 + $0x5f8] sm:$0xff]
          %v3254 = vld [vmem:[#allocation2 + $0x600] sm:$0xff]
          %v3255 = vld [vmem:[#allocation2 + $0x608] sm:$0xff]
          %v3256 = vld [vmem:[#allocation2 + $0x610] sm:$0xff]
          %v3257 = vld [vmem:[#allocation2 + $0x618] sm:$0xff]
          %v3258 = vld [vmem:[#allocation2 + $0x620] sm:$0xff]
          %v3259 = vld [vmem:[#allocation2 + $0x628] sm:$0xff]
          %v3260 = vld [vmem:[#allocation2 + $0x630] sm:$0xff]
          %v3261 = vld [vmem:[#allocation2 + $0x638] sm:$0xff]
          %v3262 = vld [vmem:[#allocation2 + $0x640] sm:$0xff]
          %v3263 = vld [vmem:[#allocation2 + $0x648] sm:$0xff]
          %v3264 = vld [vmem:[#allocation2 + $0x650] sm:$0xff]
          %v3265 = vld [vmem:[#allocation2 + $0x658] sm:$0xff]
          %v3266 = vld [vmem:[#allocation2 + $0x660] sm:$0xff]
          %v3267 = vld [vmem:[#allocation2 + $0x668] sm:$0xff]
          %v3268 = vld [vmem:[#allocation2 + $0x670] sm:$0xff]
          %v3269 = vld [vmem:[#allocation2 + $0x678] sm:$0xff]
          %v3270 = vld [vmem:[#allocation2 + $0x680] sm:$0xff]
          %v3271 = vld [vmem:[#allocation2 + $0x688] sm:$0xff]
          %v3272 = vld [vmem:[#allocation2 + $0x690] sm:$0xff]
          %v3273 = vld [vmem:[#allocation2 + $0x698] sm:$0xff]
          %v3274 = vld [vmem:[#allocation2 + $0x6a0] sm:$0xff]
          %v3275 = vld [vmem:[#allocation2 + $0x6a8] sm:$0xff]
          %v3276 = vld [vmem:[#allocation2 + $0x6b0] sm:$0xff]
          %v3277 = vld [vmem:[#allocation2 + $0x6b8] sm:$0xff]
          %v3278 = vld [vmem:[#allocation2 + $0x6c0] sm:$0xff]
          %v3279 = vld [vmem:[#allocation2 + $0x6c8] sm:$0xff]
          %v3280 = vld [vmem:[#allocation2 + $0x6d0] sm:$0xff]
          %v3281 = vld [vmem:[#allocation2 + $0x6d8] sm:$0xff]
          %v3282 = vld [vmem:[#allocation2 + $0x6e0] sm:$0xff]
          %v3283 = vld [vmem:[#allocation2 + $0x6e8] sm:$0xff]
          %v3284 = vld [vmem:[#allocation2 + $0x6f0] sm:$0xff]
          %v3285 = vld [vmem:[#allocation2 + $0x6f8] sm:$0xff]
          %v3286 = vld [vmem:[#allocation2 + $0x700] sm:$0xff]
          %v3287 = vld [vmem:[#allocation2 + $0x708] sm:$0xff]
          %v3288 = vld [vmem:[#allocation2 + $0x710] sm:$0xff]
          %v3289 = vld [vmem:[#allocation2 + $0x718] sm:$0xff]
          %v3290 = vld [vmem:[#allocation2 + $0x720] sm:$0xff]
          %v3291 = vld [vmem:[#allocation2 + $0x728] sm:$0xff]
          %v3292 = vld [vmem:[#allocation2 + $0x730] sm:$0xff]
          %v3293 = vld [vmem:[#allocation2 + $0x738] sm:$0xff]
          %v3294 = vld [vmem:[#allocation2 + $0x740] sm:$0xff]
          %v3295 = vld [vmem:[#allocation2 + $0x748] sm:$0xff]
          %v3296 = vld [vmem:[#allocation2 + $0x750] sm:$0xff]
          %v3297 = vld [vmem:[#allocation2 + $0x758] sm:$0xff]
          %v3298 = vld [vmem:[#allocation2 + $0x760] sm:$0xff]
          %v3299 = vld [vmem:[#allocation2 + $0x768] sm:$0xff]
          %v3300 = vld [vmem:[#allocation2 + $0x770] sm:$0xff]
          %v3301 = vld [vmem:[#allocation2 + $0x778] sm:$0xff]
          %v3302 = vld [vmem:[#allocation2 + $0x780] sm:$0xff]
          %v3303 = vld [vmem:[#allocation2 + $0x788] sm:$0xff]
          %v3304 = vld [vmem:[#allocation2 + $0x790] sm:$0xff]
          %v3305 = vld [vmem:[#allocation2 + $0x798] sm:$0xff]
          %v3306 = vld [vmem:[#allocation2 + $0x7a0] sm:$0xff]
          %v3307 = vld [vmem:[#allocation2 + $0x7a8] sm:$0xff]
          %v3308 = vld [vmem:[#allocation2 + $0x7b0] sm:$0xff]
          %v3309 = vld [vmem:[#allocation2 + $0x7b8] sm:$0xff]
          %v3310 = vld [vmem:[#allocation2 + $0x7c0] sm:$0xff]
          %v3311 = vld [vmem:[#allocation2 + $0x7c8] sm:$0xff]
          %v3312 = vld [vmem:[#allocation2 + $0x7d0] sm:$0xff]
          %v3313 = vld [vmem:[#allocation2 + $0x7d8] sm:$0xff]
          %v3314 = vld [vmem:[#allocation2 + $0x7e0] sm:$0xff]
          %v3315 = vld [vmem:[#allocation2 + $0x7e8] sm:$0xff]
          %v3316 = vld [vmem:[#allocation2 + $0x7f0] sm:$0xff]
          %v3317 = vld [vmem:[#allocation2 + $0x7f8] sm:$0xff]
          %v3318 = vld [vmem:[%s287] sm:$0x1]
          %v3320 = vperm.slane %v3318, 0
          %v3322 = vmul.f32 %v3062, %v3320
          %v3323 = vmul.f32 %v3063, %v3320
          %v3324 = vmul.f32 %v3064, %v3320
          %v3325 = vmul.f32 %v3065, %v3320
          %v3326 = vmul.f32 %v3066, %v3320
          %v3327 = vmul.f32 %v3067, %v3320
          %v3328 = vmul.f32 %v3068, %v3320
          %v3329 = vmul.f32 %v3069, %v3320
          %v3330 = vmul.f32 %v3070, %v3320
          %v3331 = vmul.f32 %v3071, %v3320
          %v3332 = vmul.f32 %v3072, %v3320
          %v3333 = vmul.f32 %v3073, %v3320
          %v3334 = vmul.f32 %v3074, %v3320
          %v3335 = vmul.f32 %v3075, %v3320
          %v3336 = vmul.f32 %v3076, %v3320
          %v3337 = vmul.f32 %v3077, %v3320
          %v3338 = vmul.f32 %v3078, %v3320
          %v3339 = vmul.f32 %v3079, %v3320
          %v3340 = vmul.f32 %v3080, %v3320
          %v3341 = vmul.f32 %v3081, %v3320
          %v3342 = vmul.f32 %v3082, %v3320
          %v3343 = vmul.f32 %v3083, %v3320
          %v3344 = vmul.f32 %v3084, %v3320
          %v3345 = vmul.f32 %v3085, %v3320
          %v3346 = vmul.f32 %v3086, %v3320
          %v3347 = vmul.f32 %v3087, %v3320
          %v3348 = vmul.f32 %v3088, %v3320
          %v3349 = vmul.f32 %v3089, %v3320
          %v3350 = vmul.f32 %v3090, %v3320
          %v3351 = vmul.f32 %v3091, %v3320
          %v3352 = vmul.f32 %v3092, %v3320
          %v3353 = vmul.f32 %v3093, %v3320
          %v3354 = vmul.f32 %v3094, %v3320
          %v3355 = vmul.f32 %v3095, %v3320
          %v3356 = vmul.f32 %v3096, %v3320
          %v3357 = vmul.f32 %v3097, %v3320
          %v3358 = vmul.f32 %v3098, %v3320
          %v3359 = vmul.f32 %v3099, %v3320
          %v3360 = vmul.f32 %v3100, %v3320
          %v3361 = vmul.f32 %v3101, %v3320
          %v3362 = vmul.f32 %v3102, %v3320
          %v3363 = vmul.f32 %v3103, %v3320
          %v3364 = vmul.f32 %v3104, %v3320
          %v3365 = vmul.f32 %v3105, %v3320
          %v3366 = vmul.f32 %v3106, %v3320
          %v3367 = vmul.f32 %v3107, %v3320
          %v3368 = vmul.f32 %v3108, %v3320
          %v3369 = vmul.f32 %v3109, %v3320
          %v3370 = vmul.f32 %v3110, %v3320
          %v3371 = vmul.f32 %v3111, %v3320
          %v3372 = vmul.f32 %v3112, %v3320
          %v3373 = vmul.f32 %v3113, %v3320
          %v3374 = vmul.f32 %v3114, %v3320
          %v3375 = vmul.f32 %v3115, %v3320
          %v3376 = vmul.f32 %v3116, %v3320
          %v3377 = vmul.f32 %v3117, %v3320
          %v3378 = vmul.f32 %v3118, %v3320
          %v3379 = vmul.f32 %v3119, %v3320
          %v3380 = vmul.f32 %v3120, %v3320
          %v3381 = vmul.f32 %v3121, %v3320
          %v3382 = vmul.f32 %v3122, %v3320
          %v3383 = vmul.f32 %v3123, %v3320
          %v3384 = vmul.f32 %v3124, %v3320
          %v3385 = vmul.f32 %v3125, %v3320
          %v3386 = vmul.f32 %v3126, %v3320
          %v3387 = vmul.f32 %v3127, %v3320
          %v3388 = vmul.f32 %v3128, %v3320
          %v3389 = vmul.f32 %v3129, %v3320
          %v3390 = vmul.f32 %v3130, %v3320
          %v3391 = vmul.f32 %v3131, %v3320
          %v3392 = vmul.f32 %v3132, %v3320
          %v3393 = vmul.f32 %v3133, %v3320
          %v3394 = vmul.f32 %v3134, %v3320
          %v3395 = vmul.f32 %v3135, %v3320
          %v3396 = vmul.f32 %v3136, %v3320
          %v3397 = vmul.f32 %v3137, %v3320
          %v3398 = vmul.f32 %v3138, %v3320
          %v3399 = vmul.f32 %v3139, %v3320
          %v3400 = vmul.f32 %v3140, %v3320
          %v3401 = vmul.f32 %v3141, %v3320
          %v3402 = vmul.f32 %v3142, %v3320
          %v3403 = vmul.f32 %v3143, %v3320
          %v3404 = vmul.f32 %v3144, %v3320
          %v3405 = vmul.f32 %v3145, %v3320
          %v3406 = vmul.f32 %v3146, %v3320
          %v3407 = vmul.f32 %v3147, %v3320
          %v3408 = vmul.f32 %v3148, %v3320
          %v3409 = vmul.f32 %v3149, %v3320
          %v3410 = vmul.f32 %v3150, %v3320
          %v3411 = vmul.f32 %v3151, %v3320
          %v3412 = vmul.f32 %v3152, %v3320
          %v3413 = vmul.f32 %v3153, %v3320
          %v3414 = vmul.f32 %v3154, %v3320
          %v3415 = vmul.f32 %v3155, %v3320
          %v3416 = vmul.f32 %v3156, %v3320
          %v3417 = vmul.f32 %v3157, %v3320
          %v3418 = vmul.f32 %v3158, %v3320
          %v3419 = vmul.f32 %v3159, %v3320
          %v3420 = vmul.f32 %v3160, %v3320
          %v3421 = vmul.f32 %v3161, %v3320
          %v3422 = vmul.f32 %v3162, %v3320
          %v3423 = vmul.f32 %v3163, %v3320
          %v3424 = vmul.f32 %v3164, %v3320
          %v3425 = vmul.f32 %v3165, %v3320
          %v3426 = vmul.f32 %v3166, %v3320
          %v3427 = vmul.f32 %v3167, %v3320
          %v3428 = vmul.f32 %v3168, %v3320
          %v3429 = vmul.f32 %v3169, %v3320
          %v3430 = vmul.f32 %v3170, %v3320
          %v3431 = vmul.f32 %v3171, %v3320
          %v3432 = vmul.f32 %v3172, %v3320
          %v3433 = vmul.f32 %v3173, %v3320
          %v3434 = vmul.f32 %v3174, %v3320
          %v3435 = vmul.f32 %v3175, %v3320
          %v3436 = vmul.f32 %v3176, %v3320
          %v3437 = vmul.f32 %v3177, %v3320
          %v3438 = vmul.f32 %v3178, %v3320
          %v3439 = vmul.f32 %v3179, %v3320
          %v3440 = vmul.f32 %v3180, %v3320
          %v3441 = vmul.f32 %v3181, %v3320
          %v3442 = vmul.f32 %v3182, %v3320
          %v3443 = vmul.f32 %v3183, %v3320
          %v3444 = vmul.f32 %v3184, %v3320
          %v3445 = vmul.f32 %v3185, %v3320
          %v3446 = vmul.f32 %v3186, %v3320
          %v3447 = vmul.f32 %v3187, %v3320
          %v3448 = vmul.f32 %v3188, %v3320
          %v3449 = vmul.f32 %v3189, %v3320
          %v3450 = vmul.f32 %v3190, %v3320
          %v3451 = vmul.f32 %v3191, %v3320
          %v3452 = vmul.f32 %v3192, %v3320
          %v3453 = vmul.f32 %v3193, %v3320
          %v3454 = vmul.f32 %v3194, %v3320
          %v3455 = vmul.f32 %v3195, %v3320
          %v3456 = vmul.f32 %v3196, %v3320
          %v3457 = vmul.f32 %v3197, %v3320
          %v3458 = vmul.f32 %v3198, %v3320
          %v3459 = vmul.f32 %v3199, %v3320
          %v3460 = vmul.f32 %v3200, %v3320
          %v3461 = vmul.f32 %v3201, %v3320
          %v3462 = vmul.f32 %v3202, %v3320
          %v3463 = vmul.f32 %v3203, %v3320
          %v3464 = vmul.f32 %v3204, %v3320
          %v3465 = vmul.f32 %v3205, %v3320
          %v3466 = vmul.f32 %v3206, %v3320
          %v3467 = vmul.f32 %v3207, %v3320
          %v3468 = vmul.f32 %v3208, %v3320
          %v3469 = vmul.f32 %v3209, %v3320
          %v3470 = vmul.f32 %v3210, %v3320
          %v3471 = vmul.f32 %v3211, %v3320
          %v3472 = vmul.f32 %v3212, %v3320
          %v3473 = vmul.f32 %v3213, %v3320
          %v3474 = vmul.f32 %v3214, %v3320
          %v3475 = vmul.f32 %v3215, %v3320
          %v3476 = vmul.f32 %v3216, %v3320
          %v3477 = vmul.f32 %v3217, %v3320
          %v3478 = vmul.f32 %v3218, %v3320
          %v3479 = vmul.f32 %v3219, %v3320
          %v3480 = vmul.f32 %v3220, %v3320
          %v3481 = vmul.f32 %v3221, %v3320
          %v3482 = vmul.f32 %v3222, %v3320
          %v3483 = vmul.f32 %v3223, %v3320
          %v3484 = vmul.f32 %v3224, %v3320
          %v3485 = vmul.f32 %v3225, %v3320
          %v3486 = vmul.f32 %v3226, %v3320
          %v3487 = vmul.f32 %v3227, %v3320
          %v3488 = vmul.f32 %v3228, %v3320
          %v3489 = vmul.f32 %v3229, %v3320
          %v3490 = vmul.f32 %v3230, %v3320
          %v3491 = vmul.f32 %v3231, %v3320
          %v3492 = vmul.f32 %v3232, %v3320
          %v3493 = vmul.f32 %v3233, %v3320
          %v3494 = vmul.f32 %v3234, %v3320
          %v3495 = vmul.f32 %v3235, %v3320
          %v3496 = vmul.f32 %v3236, %v3320
          %v3497 = vmul.f32 %v3237, %v3320
          %v3498 = vmul.f32 %v3238, %v3320
          %v3499 = vmul.f32 %v3239, %v3320
          %v3500 = vmul.f32 %v3240, %v3320
          %v3501 = vmul.f32 %v3241, %v3320
          %v3502 = vmul.f32 %v3242, %v3320
          %v3503 = vmul.f32 %v3243, %v3320
          %v3504 = vmul.f32 %v3244, %v3320
          %v3505 = vmul.f32 %v3245, %v3320
          %v3506 = vmul.f32 %v3246, %v3320
          %v3507 = vmul.f32 %v3247, %v3320
          %v3508 = vmul.f32 %v3248, %v3320
          %v3509 = vmul.f32 %v3249, %v3320
          %v3510 = vmul.f32 %v3250, %v3320
          %v3511 = vmul.f32 %v3251, %v3320
          %v3512 = vmul.f32 %v3252, %v3320
          %v3513 = vmul.f32 %v3253, %v3320
          %v3514 = vmul.f32 %v3254, %v3320
          %v3515 = vmul.f32 %v3255, %v3320
          %v3516 = vmul.f32 %v3256, %v3320
          %v3517 = vmul.f32 %v3257, %v3320
          %v3518 = vmul.f32 %v3258, %v3320
          %v3519 = vmul.f32 %v3259, %v3320
          %v3520 = vmul.f32 %v3260, %v3320
          %v3521 = vmul.f32 %v3261, %v3320
          %v3522 = vmul.f32 %v3262, %v3320
          %v3523 = vmul.f32 %v3263, %v3320
          %v3524 = vmul.f32 %v3264, %v3320
          %v3525 = vmul.f32 %v3265, %v3320
          %v3526 = vmul.f32 %v3266, %v3320
          %v3527 = vmul.f32 %v3267, %v3320
          %v3528 = vmul.f32 %v3268, %v3320
          %v3529 = vmul.f32 %v3269, %v3320
          %v3530 = vmul.f32 %v3270, %v3320
          %v3531 = vmul.f32 %v3271, %v3320
          %v3532 = vmul.f32 %v3272, %v3320
          %v3533 = vmul.f32 %v3273, %v3320
          %v3534 = vmul.f32 %v3274, %v3320
          %v3535 = vmul.f32 %v3275, %v3320
          %v3536 = vmul.f32 %v3276, %v3320
          %v3537 = vmul.f32 %v3277, %v3320
          %v3538 = vmul.f32 %v3278, %v3320
          %v3539 = vmul.f32 %v3279, %v3320
          %v3540 = vmul.f32 %v3280, %v3320
          %v3541 = vmul.f32 %v3281, %v3320
          %v3542 = vmul.f32 %v3282, %v3320
          %v3543 = vmul.f32 %v3283, %v3320
          %v3544 = vmul.f32 %v3284, %v3320
          %v3545 = vmul.f32 %v3285, %v3320
          %v3546 = vmul.f32 %v3286, %v3320
          %v3547 = vmul.f32 %v3287, %v3320
          %v3548 = vmul.f32 %v3288, %v3320
          %v3549 = vmul.f32 %v3289, %v3320
          %v3550 = vmul.f32 %v3290, %v3320
          %v3551 = vmul.f32 %v3291, %v3320
          %v3552 = vmul.f32 %v3292, %v3320
          %v3553 = vmul.f32 %v3293, %v3320
          %v3554 = vmul.f32 %v3294, %v3320
          %v3555 = vmul.f32 %v3295, %v3320
          %v3556 = vmul.f32 %v3296, %v3320
          %v3557 = vmul.f32 %v3297, %v3320
          %v3558 = vmul.f32 %v3298, %v3320
          %v3559 = vmul.f32 %v3299, %v3320
          %v3560 = vmul.f32 %v3300, %v3320
          %v3561 = vmul.f32 %v3301, %v3320
          %v3562 = vmul.f32 %v3302, %v3320
          %v3563 = vmul.f32 %v3303, %v3320
          %v3564 = vmul.f32 %v3304, %v3320
          %v3565 = vmul.f32 %v3305, %v3320
          %v3566 = vmul.f32 %v3306, %v3320
          %v3567 = vmul.f32 %v3307, %v3320
          %v3568 = vmul.f32 %v3308, %v3320
          %v3569 = vmul.f32 %v3309, %v3320
          %v3570 = vmul.f32 %v3310, %v3320
          %v3571 = vmul.f32 %v3311, %v3320
          %v3572 = vmul.f32 %v3312, %v3320
          %v3573 = vmul.f32 %v3313, %v3320
          %v3574 = vmul.f32 %v3314, %v3320
          %v3575 = vmul.f32 %v3315, %v3320
          %v3576 = vmul.f32 %v3316, %v3320
          %v3577 = vmul.f32 %v3317, %v3320
          %v3578 = vld [vmem:[%s290] sm:$0x1]
          %v3580 = vperm.slane %v3578, 0
          %v3582 = vadd.f32 %v3322, %v3580
          %v3583 = vadd.f32 %v3323, %v3580
          %v3584 = vadd.f32 %v3324, %v3580
          %v3585 = vadd.f32 %v3325, %v3580
          %v3586 = vadd.f32 %v3326, %v3580
          %v3587 = vadd.f32 %v3327, %v3580
          %v3588 = vadd.f32 %v3328, %v3580
          %v3589 = vadd.f32 %v3329, %v3580
          %v3590 = vadd.f32 %v3330, %v3580
          %v3591 = vadd.f32 %v3331, %v3580
          %v3592 = vadd.f32 %v3332, %v3580
          %v3593 = vadd.f32 %v3333, %v3580
          %v3594 = vadd.f32 %v3334, %v3580
          %v3595 = vadd.f32 %v3335, %v3580
          %v3596 = vadd.f32 %v3336, %v3580
          %v3597 = vadd.f32 %v3337, %v3580
          %v3598 = vadd.f32 %v3338, %v3580
          %v3599 = vadd.f32 %v3339, %v3580
          %v3600 = vadd.f32 %v3340, %v3580
          %v3601 = vadd.f32 %v3341, %v3580
          %v3602 = vadd.f32 %v3342, %v3580
          %v3603 = vadd.f32 %v3343, %v3580
          %v3604 = vadd.f32 %v3344, %v3580
          %v3605 = vadd.f32 %v3345, %v3580
          %v3606 = vadd.f32 %v3346, %v3580
          %v3607 = vadd.f32 %v3347, %v3580
          %v3608 = vadd.f32 %v3348, %v3580
          %v3609 = vadd.f32 %v3349, %v3580
          %v3610 = vadd.f32 %v3350, %v3580
          %v3611 = vadd.f32 %v3351, %v3580
          %v3612 = vadd.f32 %v3352, %v3580
          %v3613 = vadd.f32 %v3353, %v3580
          %v3614 = vadd.f32 %v3354, %v3580
          %v3615 = vadd.f32 %v3355, %v3580
          %v3616 = vadd.f32 %v3356, %v3580
          %v3617 = vadd.f32 %v3357, %v3580
          %v3618 = vadd.f32 %v3358, %v3580
          %v3619 = vadd.f32 %v3359, %v3580
          %v3620 = vadd.f32 %v3360, %v3580
          %v3621 = vadd.f32 %v3361, %v3580
          %v3622 = vadd.f32 %v3362, %v3580
          %v3623 = vadd.f32 %v3363, %v3580
          %v3624 = vadd.f32 %v3364, %v3580
          %v3625 = vadd.f32 %v3365, %v3580
          %v3626 = vadd.f32 %v3366, %v3580
          %v3627 = vadd.f32 %v3367, %v3580
          %v3628 = vadd.f32 %v3368, %v3580
          %v3629 = vadd.f32 %v3369, %v3580
          %v3630 = vadd.f32 %v3370, %v3580
          %v3631 = vadd.f32 %v3371, %v3580
          %v3632 = vadd.f32 %v3372, %v3580
          %v3633 = vadd.f32 %v3373, %v3580
          %v3634 = vadd.f32 %v3374, %v3580
          %v3635 = vadd.f32 %v3375, %v3580
          %v3636 = vadd.f32 %v3376, %v3580
          %v3637 = vadd.f32 %v3377, %v3580
          %v3638 = vadd.f32 %v3378, %v3580
          %v3639 = vadd.f32 %v3379, %v3580
          %v3640 = vadd.f32 %v3380, %v3580
          %v3641 = vadd.f32 %v3381, %v3580
          %v3642 = vadd.f32 %v3382, %v3580
          %v3643 = vadd.f32 %v3383, %v3580
          %v3644 = vadd.f32 %v3384, %v3580
          %v3645 = vadd.f32 %v3385, %v3580
          %v3646 = vadd.f32 %v3386, %v3580
          %v3647 = vadd.f32 %v3387, %v3580
          %v3648 = vadd.f32 %v3388, %v3580
          %v3649 = vadd.f32 %v3389, %v3580
          %v3650 = vadd.f32 %v3390, %v3580
          %v3651 = vadd.f32 %v3391, %v3580
          %v3652 = vadd.f32 %v3392, %v3580
          %v3653 = vadd.f32 %v3393, %v3580
          %v3654 = vadd.f32 %v3394, %v3580
          %v3655 = vadd.f32 %v3395, %v3580
          %v3656 = vadd.f32 %v3396, %v3580
          %v3657 = vadd.f32 %v3397, %v3580
          %v3658 = vadd.f32 %v3398, %v3580
          %v3659 = vadd.f32 %v3399, %v3580
          %v3660 = vadd.f32 %v3400, %v3580
          %v3661 = vadd.f32 %v3401, %v3580
          %v3662 = vadd.f32 %v3402, %v3580
          %v3663 = vadd.f32 %v3403, %v3580
          %v3664 = vadd.f32 %v3404, %v3580
          %v3665 = vadd.f32 %v3405, %v3580
          %v3666 = vadd.f32 %v3406, %v3580
          %v3667 = vadd.f32 %v3407, %v3580
          %v3668 = vadd.f32 %v3408, %v3580
          %v3669 = vadd.f32 %v3409, %v3580
          %v3670 = vadd.f32 %v3410, %v3580
          %v3671 = vadd.f32 %v3411, %v3580
          %v3672 = vadd.f32 %v3412, %v3580
          %v3673 = vadd.f32 %v3413, %v3580
          %v3674 = vadd.f32 %v3414, %v3580
          %v3675 = vadd.f32 %v3415, %v3580
          %v3676 = vadd.f32 %v3416, %v3580
          %v3677 = vadd.f32 %v3417, %v3580
          %v3678 = vadd.f32 %v3418, %v3580
          %v3679 = vadd.f32 %v3419, %v3580
          %v3680 = vadd.f32 %v3420, %v3580
          %v3681 = vadd.f32 %v3421, %v3580
          %v3682 = vadd.f32 %v3422, %v3580
          %v3683 = vadd.f32 %v3423, %v3580
          %v3684 = vadd.f32 %v3424, %v3580
          %v3685 = vadd.f32 %v3425, %v3580
          %v3686 = vadd.f32 %v3426, %v3580
          %v3687 = vadd.f32 %v3427, %v3580
          %v3688 = vadd.f32 %v3428, %v3580
          %v3689 = vadd.f32 %v3429, %v3580
          %v3690 = vadd.f32 %v3430, %v3580
          %v3691 = vadd.f32 %v3431, %v3580
          %v3692 = vadd.f32 %v3432, %v3580
          %v3693 = vadd.f32 %v3433, %v3580
          %v3694 = vadd.f32 %v3434, %v3580
          %v3695 = vadd.f32 %v3435, %v3580
          %v3696 = vadd.f32 %v3436, %v3580
          %v3697 = vadd.f32 %v3437, %v3580
          %v3698 = vadd.f32 %v3438, %v3580
          %v3699 = vadd.f32 %v3439, %v3580
          %v3700 = vadd.f32 %v3440, %v3580
          %v3701 = vadd.f32 %v3441, %v3580
          %v3702 = vadd.f32 %v3442, %v3580
          %v3703 = vadd.f32 %v3443, %v3580
          %v3704 = vadd.f32 %v3444, %v3580
          %v3705 = vadd.f32 %v3445, %v3580
          %v3706 = vadd.f32 %v3446, %v3580
          %v3707 = vadd.f32 %v3447, %v3580
          %v3708 = vadd.f32 %v3448, %v3580
          %v3709 = vadd.f32 %v3449, %v3580
          %v3710 = vadd.f32 %v3450, %v3580
          %v3711 = vadd.f32 %v3451, %v3580
          %v3712 = vadd.f32 %v3452, %v3580
          %v3713 = vadd.f32 %v3453, %v3580
          %v3714 = vadd.f32 %v3454, %v3580
          %v3715 = vadd.f32 %v3455, %v3580
          %v3716 = vadd.f32 %v3456, %v3580
          %v3717 = vadd.f32 %v3457, %v3580
          %v3718 = vadd.f32 %v3458, %v3580
          %v3719 = vadd.f32 %v3459, %v3580
          %v3720 = vadd.f32 %v3460, %v3580
          %v3721 = vadd.f32 %v3461, %v3580
          %v3722 = vadd.f32 %v3462, %v3580
          %v3723 = vadd.f32 %v3463, %v3580
          %v3724 = vadd.f32 %v3464, %v3580
          %v3725 = vadd.f32 %v3465, %v3580
          %v3726 = vadd.f32 %v3466, %v3580
          %v3727 = vadd.f32 %v3467, %v3580
          %v3728 = vadd.f32 %v3468, %v3580
          %v3729 = vadd.f32 %v3469, %v3580
          %v3730 = vadd.f32 %v3470, %v3580
          %v3731 = vadd.f32 %v3471, %v3580
          %v3732 = vadd.f32 %v3472, %v3580
          %v3733 = vadd.f32 %v3473, %v3580
          %v3734 = vadd.f32 %v3474, %v3580
          %v3735 = vadd.f32 %v3475, %v3580
          %v3736 = vadd.f32 %v3476, %v3580
          %v3737 = vadd.f32 %v3477, %v3580
          %v3738 = vadd.f32 %v3478, %v3580
          %v3739 = vadd.f32 %v3479, %v3580
          %v3740 = vadd.f32 %v3480, %v3580
          %v3741 = vadd.f32 %v3481, %v3580
          %v3742 = vadd.f32 %v3482, %v3580
          %v3743 = vadd.f32 %v3483, %v3580
          %v3744 = vadd.f32 %v3484, %v3580
          %v3745 = vadd.f32 %v3485, %v3580
          %v3746 = vadd.f32 %v3486, %v3580
          %v3747 = vadd.f32 %v3487, %v3580
          %v3748 = vadd.f32 %v3488, %v3580
          %v3749 = vadd.f32 %v3489, %v3580
          %v3750 = vadd.f32 %v3490, %v3580
          %v3751 = vadd.f32 %v3491, %v3580
          %v3752 = vadd.f32 %v3492, %v3580
          %v3753 = vadd.f32 %v3493, %v3580
          %v3754 = vadd.f32 %v3494, %v3580
          %v3755 = vadd.f32 %v3495, %v3580
          %v3756 = vadd.f32 %v3496, %v3580
          %v3757 = vadd.f32 %v3497, %v3580
          %v3758 = vadd.f32 %v3498, %v3580
          %v3759 = vadd.f32 %v3499, %v3580
          %v3760 = vadd.f32 %v3500, %v3580
          %v3761 = vadd.f32 %v3501, %v3580
          %v3762 = vadd.f32 %v3502, %v3580
          %v3763 = vadd.f32 %v3503, %v3580
          %v3764 = vadd.f32 %v3504, %v3580
          %v3765 = vadd.f32 %v3505, %v3580
          %v3766 = vadd.f32 %v3506, %v3580
          %v3767 = vadd.f32 %v3507, %v3580
          %v3768 = vadd.f32 %v3508, %v3580
          %v3769 = vadd.f32 %v3509, %v3580
          %v3770 = vadd.f32 %v3510, %v3580
          %v3771 = vadd.f32 %v3511, %v3580
          %v3772 = vadd.f32 %v3512, %v3580
          %v3773 = vadd.f32 %v3513, %v3580
          %v3774 = vadd.f32 %v3514, %v3580
          %v3775 = vadd.f32 %v3515, %v3580
          %v3776 = vadd.f32 %v3516, %v3580
          %v3777 = vadd.f32 %v3517, %v3580
          %v3778 = vadd.f32 %v3518, %v3580
          %v3779 = vadd.f32 %v3519, %v3580
          %v3780 = vadd.f32 %v3520, %v3580
          %v3781 = vadd.f32 %v3521, %v3580
          %v3782 = vadd.f32 %v3522, %v3580
          %v3783 = vadd.f32 %v3523, %v3580
          %v3784 = vadd.f32 %v3524, %v3580
          %v3785 = vadd.f32 %v3525, %v3580
          %v3786 = vadd.f32 %v3526, %v3580
          %v3787 = vadd.f32 %v3527, %v3580
          %v3788 = vadd.f32 %v3528, %v3580
          %v3789 = vadd.f32 %v3529, %v3580
          %v3790 = vadd.f32 %v3530, %v3580
          %v3791 = vadd.f32 %v3531, %v3580
          %v3792 = vadd.f32 %v3532, %v3580
          %v3793 = vadd.f32 %v3533, %v3580
          %v3794 = vadd.f32 %v3534, %v3580
          %v3795 = vadd.f32 %v3535, %v3580
          %v3796 = vadd.f32 %v3536, %v3580
          %v3797 = vadd.f32 %v3537, %v3580
          %v3798 = vadd.f32 %v3538, %v3580
          %v3799 = vadd.f32 %v3539, %v3580
          %v3800 = vadd.f32 %v3540, %v3580
          %v3801 = vadd.f32 %v3541, %v3580
          %v3802 = vadd.f32 %v3542, %v3580
          %v3803 = vadd.f32 %v3543, %v3580
          %v3804 = vadd.f32 %v3544, %v3580
          %v3805 = vadd.f32 %v3545, %v3580
          %v3806 = vadd.f32 %v3546, %v3580
          %v3807 = vadd.f32 %v3547, %v3580
          %v3808 = vadd.f32 %v3548, %v3580
          %v3809 = vadd.f32 %v3549, %v3580
          %v3810 = vadd.f32 %v3550, %v3580
          %v3811 = vadd.f32 %v3551, %v3580
          %v3812 = vadd.f32 %v3552, %v3580
          %v3813 = vadd.f32 %v3553, %v3580
          %v3814 = vadd.f32 %v3554, %v3580
          %v3815 = vadd.f32 %v3555, %v3580
          %v3816 = vadd.f32 %v3556, %v3580
          %v3817 = vadd.f32 %v3557, %v3580
          %v3818 = vadd.f32 %v3558, %v3580
          %v3819 = vadd.f32 %v3559, %v3580
          %v3820 = vadd.f32 %v3560, %v3580
          %v3821 = vadd.f32 %v3561, %v3580
          %v3822 = vadd.f32 %v3562, %v3580
          %v3823 = vadd.f32 %v3563, %v3580
          %v3824 = vadd.f32 %v3564, %v3580
          %v3825 = vadd.f32 %v3565, %v3580
          %v3826 = vadd.f32 %v3566, %v3580
          %v3827 = vadd.f32 %v3567, %v3580
          %v3828 = vadd.f32 %v3568, %v3580
          %v3829 = vadd.f32 %v3569, %v3580
          %v3830 = vadd.f32 %v3570, %v3580
          %v3831 = vadd.f32 %v3571, %v3580
          %v3832 = vadd.f32 %v3572, %v3580
          %v3833 = vadd.f32 %v3573, %v3580
          %v3834 = vadd.f32 %v3574, %v3580
          %v3835 = vadd.f32 %v3575, %v3580
          %v3836 = vadd.f32 %v3576, %v3580
          %v3837 = vadd.f32 %v3577, %v3580
          %vm3838 = vcmp.ge.f32.partialorder %v3582, 0.0
          %vm3839 = vcmp.ge.f32.partialorder %v3583, 0.0
          %vm3840 = vcmp.ge.f32.partialorder %v3584, 0.0
          %vm3841 = vcmp.ge.f32.partialorder %v3585, 0.0
          %vm3842 = vcmp.ge.f32.partialorder %v3586, 0.0
          %vm3843 = vcmp.ge.f32.partialorder %v3587, 0.0
          %vm3844 = vcmp.ge.f32.partialorder %v3588, 0.0
          %vm3845 = vcmp.ge.f32.partialorder %v3589, 0.0
          %vm3846 = vcmp.ge.f32.partialorder %v3590, 0.0
          %vm3847 = vcmp.ge.f32.partialorder %v3591, 0.0
          %vm3848 = vcmp.ge.f32.partialorder %v3592, 0.0
          %vm3849 = vcmp.ge.f32.partialorder %v3593, 0.0
          %vm3850 = vcmp.ge.f32.partialorder %v3594, 0.0
          %vm3851 = vcmp.ge.f32.partialorder %v3595, 0.0
          %vm3852 = vcmp.ge.f32.partialorder %v3596, 0.0
          %vm3853 = vcmp.ge.f32.partialorder %v3597, 0.0
          %vm3854 = vcmp.ge.f32.partialorder %v3598, 0.0
          %vm3855 = vcmp.ge.f32.partialorder %v3599, 0.0
          %vm3856 = vcmp.ge.f32.partialorder %v3600, 0.0
          %vm3857 = vcmp.ge.f32.partialorder %v3601, 0.0
          %vm3858 = vcmp.ge.f32.partialorder %v3602, 0.0
          %vm3859 = vcmp.ge.f32.partialorder %v3603, 0.0
          %vm3860 = vcmp.ge.f32.partialorder %v3604, 0.0
          %vm3861 = vcmp.ge.f32.partialorder %v3605, 0.0
          %vm3862 = vcmp.ge.f32.partialorder %v3606, 0.0
          %vm3863 = vcmp.ge.f32.partialorder %v3607, 0.0
          %vm3864 = vcmp.ge.f32.partialorder %v3608, 0.0
          %vm3865 = vcmp.ge.f32.partialorder %v3609, 0.0
          %vm3866 = vcmp.ge.f32.partialorder %v3610, 0.0
          %vm3867 = vcmp.ge.f32.partialorder %v3611, 0.0
          %vm3868 = vcmp.ge.f32.partialorder %v3612, 0.0
          %vm3869 = vcmp.ge.f32.partialorder %v3613, 0.0
          %vm3870 = vcmp.ge.f32.partialorder %v3614, 0.0
          %vm3871 = vcmp.ge.f32.partialorder %v3615, 0.0
          %vm3872 = vcmp.ge.f32.partialorder %v3616, 0.0
          %vm3873 = vcmp.ge.f32.partialorder %v3617, 0.0
          %vm3874 = vcmp.ge.f32.partialorder %v3618, 0.0
          %vm3875 = vcmp.ge.f32.partialorder %v3619, 0.0
          %vm3876 = vcmp.ge.f32.partialorder %v3620, 0.0
          %vm3877 = vcmp.ge.f32.partialorder %v3621, 0.0
          %vm3878 = vcmp.ge.f32.partialorder %v3622, 0.0
          %vm3879 = vcmp.ge.f32.partialorder %v3623, 0.0
          %vm3880 = vcmp.ge.f32.partialorder %v3624, 0.0
          %vm3881 = vcmp.ge.f32.partialorder %v3625, 0.0
          %vm3882 = vcmp.ge.f32.partialorder %v3626, 0.0
          %vm3883 = vcmp.ge.f32.partialorder %v3627, 0.0
          %vm3884 = vcmp.ge.f32.partialorder %v3628, 0.0
          %vm3885 = vcmp.ge.f32.partialorder %v3629, 0.0
          %vm3886 = vcmp.ge.f32.partialorder %v3630, 0.0
          %vm3887 = vcmp.ge.f32.partialorder %v3631, 0.0
          %vm3888 = vcmp.ge.f32.partialorder %v3632, 0.0
          %vm3889 = vcmp.ge.f32.partialorder %v3633, 0.0
          %vm3890 = vcmp.ge.f32.partialorder %v3634, 0.0
          %vm3891 = vcmp.ge.f32.partialorder %v3635, 0.0
          %vm3892 = vcmp.ge.f32.partialorder %v3636, 0.0
          %vm3893 = vcmp.ge.f32.partialorder %v3637, 0.0
          %vm3894 = vcmp.ge.f32.partialorder %v3638, 0.0
          %vm3895 = vcmp.ge.f32.partialorder %v3639, 0.0
          %vm3896 = vcmp.ge.f32.partialorder %v3640, 0.0
          %vm3897 = vcmp.ge.f32.partialorder %v3641, 0.0
          %vm3898 = vcmp.ge.f32.partialorder %v3642, 0.0
          %vm3899 = vcmp.ge.f32.partialorder %v3643, 0.0
          %vm3900 = vcmp.ge.f32.partialorder %v3644, 0.0
          %vm3901 = vcmp.ge.f32.partialorder %v3645, 0.0
          %vm3902 = vcmp.ge.f32.partialorder %v3646, 0.0
          %vm3903 = vcmp.ge.f32.partialorder %v3647, 0.0
          %vm3904 = vcmp.ge.f32.partialorder %v3648, 0.0
          %vm3905 = vcmp.ge.f32.partialorder %v3649, 0.0
          %vm3906 = vcmp.ge.f32.partialorder %v3650, 0.0
          %vm3907 = vcmp.ge.f32.partialorder %v3651, 0.0
          %vm3908 = vcmp.ge.f32.partialorder %v3652, 0.0
          %vm3909 = vcmp.ge.f32.partialorder %v3653, 0.0
          %vm3910 = vcmp.ge.f32.partialorder %v3654, 0.0
          %vm3911 = vcmp.ge.f32.partialorder %v3655, 0.0
          %vm3912 = vcmp.ge.f32.partialorder %v3656, 0.0
          %vm3913 = vcmp.ge.f32.partialorder %v3657, 0.0
          %vm3914 = vcmp.ge.f32.partialorder %v3658, 0.0
          %vm3915 = vcmp.ge.f32.partialorder %v3659, 0.0
          %vm3916 = vcmp.ge.f32.partialorder %v3660, 0.0
          %vm3917 = vcmp.ge.f32.partialorder %v3661, 0.0
          %vm3918 = vcmp.ge.f32.partialorder %v3662, 0.0
          %vm3919 = vcmp.ge.f32.partialorder %v3663, 0.0
          %vm3920 = vcmp.ge.f32.partialorder %v3664, 0.0
          %vm3921 = vcmp.ge.f32.partialorder %v3665, 0.0
          %vm3922 = vcmp.ge.f32.partialorder %v3666, 0.0
          %vm3923 = vcmp.ge.f32.partialorder %v3667, 0.0
          %vm3924 = vcmp.ge.f32.partialorder %v3668, 0.0
          %vm3925 = vcmp.ge.f32.partialorder %v3669, 0.0
          %vm3926 = vcmp.ge.f32.partialorder %v3670, 0.0
          %vm3927 = vcmp.ge.f32.partialorder %v3671, 0.0
          %vm3928 = vcmp.ge.f32.partialorder %v3672, 0.0
          %vm3929 = vcmp.ge.f32.partialorder %v3673, 0.0
          %vm3930 = vcmp.ge.f32.partialorder %v3674, 0.0
          %vm3931 = vcmp.ge.f32.partialorder %v3675, 0.0
          %vm3932 = vcmp.ge.f32.partialorder %v3676, 0.0
          %vm3933 = vcmp.ge.f32.partialorder %v3677, 0.0
          %vm3934 = vcmp.ge.f32.partialorder %v3678, 0.0
          %vm3935 = vcmp.ge.f32.partialorder %v3679, 0.0
          %vm3936 = vcmp.ge.f32.partialorder %v3680, 0.0
          %vm3937 = vcmp.ge.f32.partialorder %v3681, 0.0
          %vm3938 = vcmp.ge.f32.partialorder %v3682, 0.0
          %vm3939 = vcmp.ge.f32.partialorder %v3683, 0.0
          %vm3940 = vcmp.ge.f32.partialorder %v3684, 0.0
          %vm3941 = vcmp.ge.f32.partialorder %v3685, 0.0
          %vm3942 = vcmp.ge.f32.partialorder %v3686, 0.0
          %vm3943 = vcmp.ge.f32.partialorder %v3687, 0.0
          %vm3944 = vcmp.ge.f32.partialorder %v3688, 0.0
          %vm3945 = vcmp.ge.f32.partialorder %v3689, 0.0
          %vm3946 = vcmp.ge.f32.partialorder %v3690, 0.0
          %vm3947 = vcmp.ge.f32.partialorder %v3691, 0.0
          %vm3948 = vcmp.ge.f32.partialorder %v3692, 0.0
          %vm3949 = vcmp.ge.f32.partialorder %v3693, 0.0
          %vm3950 = vcmp.ge.f32.partialorder %v3694, 0.0
          %vm3951 = vcmp.ge.f32.partialorder %v3695, 0.0
          %vm3952 = vcmp.ge.f32.partialorder %v3696, 0.0
          %vm3953 = vcmp.ge.f32.partialorder %v3697, 0.0
          %vm3954 = vcmp.ge.f32.partialorder %v3698, 0.0
          %vm3955 = vcmp.ge.f32.partialorder %v3699, 0.0
          %vm3956 = vcmp.ge.f32.partialorder %v3700, 0.0
          %vm3957 = vcmp.ge.f32.partialorder %v3701, 0.0
          %vm3958 = vcmp.ge.f32.partialorder %v3702, 0.0
          %vm3959 = vcmp.ge.f32.partialorder %v3703, 0.0
          %vm3960 = vcmp.ge.f32.partialorder %v3704, 0.0
          %vm3961 = vcmp.ge.f32.partialorder %v3705, 0.0
          %vm3962 = vcmp.ge.f32.partialorder %v3706, 0.0
          %vm3963 = vcmp.ge.f32.partialorder %v3707, 0.0
          %vm3964 = vcmp.ge.f32.partialorder %v3708, 0.0
          %vm3965 = vcmp.ge.f32.partialorder %v3709, 0.0
          %vm3966 = vcmp.ge.f32.partialorder %v3710, 0.0
          %vm3967 = vcmp.ge.f32.partialorder %v3711, 0.0
          %vm3968 = vcmp.ge.f32.partialorder %v3712, 0.0
          %vm3969 = vcmp.ge.f32.partialorder %v3713, 0.0
          %vm3970 = vcmp.ge.f32.partialorder %v3714, 0.0
          %vm3971 = vcmp.ge.f32.partialorder %v3715, 0.0
          %vm3972 = vcmp.ge.f32.partialorder %v3716, 0.0
          %vm3973 = vcmp.ge.f32.partialorder %v3717, 0.0
          %vm3974 = vcmp.ge.f32.partialorder %v3718, 0.0
          %vm3975 = vcmp.ge.f32.partialorder %v3719, 0.0
          %vm3976 = vcmp.ge.f32.partialorder %v3720, 0.0
          %vm3977 = vcmp.ge.f32.partialorder %v3721, 0.0
          %vm3978 = vcmp.ge.f32.partialorder %v3722, 0.0
          %vm3979 = vcmp.ge.f32.partialorder %v3723, 0.0
          %vm3980 = vcmp.ge.f32.partialorder %v3724, 0.0
          %vm3981 = vcmp.ge.f32.partialorder %v3725, 0.0
          %vm3982 = vcmp.ge.f32.partialorder %v3726, 0.0
          %vm3983 = vcmp.ge.f32.partialorder %v3727, 0.0
          %vm3984 = vcmp.ge.f32.partialorder %v3728, 0.0
          %vm3985 = vcmp.ge.f32.partialorder %v3729, 0.0
          %vm3986 = vcmp.ge.f32.partialorder %v3730, 0.0
          %vm3987 = vcmp.ge.f32.partialorder %v3731, 0.0
          %vm3988 = vcmp.ge.f32.partialorder %v3732, 0.0
          %vm3989 = vcmp.ge.f32.partialorder %v3733, 0.0
          %vm3990 = vcmp.ge.f32.partialorder %v3734, 0.0
          %vm3991 = vcmp.ge.f32.partialorder %v3735, 0.0
          %vm3992 = vcmp.ge.f32.partialorder %v3736, 0.0
          %vm3993 = vcmp.ge.f32.partialorder %v3737, 0.0
          %vm3994 = vcmp.ge.f32.partialorder %v3738, 0.0
          %vm3995 = vcmp.ge.f32.partialorder %v3739, 0.0
          %vm3996 = vcmp.ge.f32.partialorder %v3740, 0.0
          %vm3997 = vcmp.ge.f32.partialorder %v3741, 0.0
          %vm3998 = vcmp.ge.f32.partialorder %v3742, 0.0
          %vm3999 = vcmp.ge.f32.partialorder %v3743, 0.0
          %vm4000 = vcmp.ge.f32.partialorder %v3744, 0.0
          %vm4001 = vcmp.ge.f32.partialorder %v3745, 0.0
          %vm4002 = vcmp.ge.f32.partialorder %v3746, 0.0
          %vm4003 = vcmp.ge.f32.partialorder %v3747, 0.0
          %vm4004 = vcmp.ge.f32.partialorder %v3748, 0.0
          %vm4005 = vcmp.ge.f32.partialorder %v3749, 0.0
          %vm4006 = vcmp.ge.f32.partialorder %v3750, 0.0
          %vm4007 = vcmp.ge.f32.partialorder %v3751, 0.0
          %vm4008 = vcmp.ge.f32.partialorder %v3752, 0.0
          %vm4009 = vcmp.ge.f32.partialorder %v3753, 0.0
          %vm4010 = vcmp.ge.f32.partialorder %v3754, 0.0
          %vm4011 = vcmp.ge.f32.partialorder %v3755, 0.0
          %vm4012 = vcmp.ge.f32.partialorder %v3756, 0.0
          %vm4013 = vcmp.ge.f32.partialorder %v3757, 0.0
          %vm4014 = vcmp.ge.f32.partialorder %v3758, 0.0
          %vm4015 = vcmp.ge.f32.partialorder %v3759, 0.0
          %vm4016 = vcmp.ge.f32.partialorder %v3760, 0.0
          %vm4017 = vcmp.ge.f32.partialorder %v3761, 0.0
          %vm4018 = vcmp.ge.f32.partialorder %v3762, 0.0
          %vm4019 = vcmp.ge.f32.partialorder %v3763, 0.0
          %vm4020 = vcmp.ge.f32.partialorder %v3764, 0.0
          %vm4021 = vcmp.ge.f32.partialorder %v3765, 0.0
          %vm4022 = vcmp.ge.f32.partialorder %v3766, 0.0
          %vm4023 = vcmp.ge.f32.partialorder %v3767, 0.0
          %vm4024 = vcmp.ge.f32.partialorder %v3768, 0.0
          %vm4025 = vcmp.ge.f32.partialorder %v3769, 0.0
          %vm4026 = vcmp.ge.f32.partialorder %v3770, 0.0
          %vm4027 = vcmp.ge.f32.partialorder %v3771, 0.0
          %vm4028 = vcmp.ge.f32.partialorder %v3772, 0.0
          %vm4029 = vcmp.ge.f32.partialorder %v3773, 0.0
          %vm4030 = vcmp.ge.f32.partialorder %v3774, 0.0
          %vm4031 = vcmp.ge.f32.partialorder %v3775, 0.0
          %vm4032 = vcmp.ge.f32.partialorder %v3776, 0.0
          %vm4033 = vcmp.ge.f32.partialorder %v3777, 0.0
          %vm4034 = vcmp.ge.f32.partialorder %v3778, 0.0
          %vm4035 = vcmp.ge.f32.partialorder %v3779, 0.0
          %vm4036 = vcmp.ge.f32.partialorder %v3780, 0.0
          %vm4037 = vcmp.ge.f32.partialorder %v3781, 0.0
          %vm4038 = vcmp.ge.f32.partialorder %v3782, 0.0
          %vm4039 = vcmp.ge.f32.partialorder %v3783, 0.0
          %vm4040 = vcmp.ge.f32.partialorder %v3784, 0.0
          %vm4041 = vcmp.ge.f32.partialorder %v3785, 0.0
          %vm4042 = vcmp.ge.f32.partialorder %v3786, 0.0
          %vm4043 = vcmp.ge.f32.partialorder %v3787, 0.0
          %vm4044 = vcmp.ge.f32.partialorder %v3788, 0.0
          %vm4045 = vcmp.ge.f32.partialorder %v3789, 0.0
          %vm4046 = vcmp.ge.f32.partialorder %v3790, 0.0
          %vm4047 = vcmp.ge.f32.partialorder %v3791, 0.0
          %vm4048 = vcmp.ge.f32.partialorder %v3792, 0.0
          %vm4049 = vcmp.ge.f32.partialorder %v3793, 0.0
          %vm4050 = vcmp.ge.f32.partialorder %v3794, 0.0
          %vm4051 = vcmp.ge.f32.partialorder %v3795, 0.0
          %vm4052 = vcmp.ge.f32.partialorder %v3796, 0.0
          %vm4053 = vcmp.ge.f32.partialorder %v3797, 0.0
          %vm4054 = vcmp.ge.f32.partialorder %v3798, 0.0
          %vm4055 = vcmp.ge.f32.partialorder %v3799, 0.0
          %vm4056 = vcmp.ge.f32.partialorder %v3800, 0.0
          %vm4057 = vcmp.ge.f32.partialorder %v3801, 0.0
          %vm4058 = vcmp.ge.f32.partialorder %v3802, 0.0
          %vm4059 = vcmp.ge.f32.partialorder %v3803, 0.0
          %vm4060 = vcmp.ge.f32.partialorder %v3804, 0.0
          %vm4061 = vcmp.ge.f32.partialorder %v3805, 0.0
          %vm4062 = vcmp.ge.f32.partialorder %v3806, 0.0
          %vm4063 = vcmp.ge.f32.partialorder %v3807, 0.0
          %vm4064 = vcmp.ge.f32.partialorder %v3808, 0.0
          %vm4065 = vcmp.ge.f32.partialorder %v3809, 0.0
          %vm4066 = vcmp.ge.f32.partialorder %v3810, 0.0
          %vm4067 = vcmp.ge.f32.partialorder %v3811, 0.0
          %vm4068 = vcmp.ge.f32.partialorder %v3812, 0.0
          %vm4069 = vcmp.ge.f32.partialorder %v3813, 0.0
          %vm4070 = vcmp.ge.f32.partialorder %v3814, 0.0
          %vm4071 = vcmp.ge.f32.partialorder %v3815, 0.0
          %vm4072 = vcmp.ge.f32.partialorder %v3816, 0.0
          %vm4073 = vcmp.ge.f32.partialorder %v3817, 0.0
          %vm4074 = vcmp.ge.f32.partialorder %v3818, 0.0
          %vm4075 = vcmp.ge.f32.partialorder %v3819, 0.0
          %vm4076 = vcmp.ge.f32.partialorder %v3820, 0.0
          %vm4077 = vcmp.ge.f32.partialorder %v3821, 0.0
          %vm4078 = vcmp.ge.f32.partialorder %v3822, 0.0
          %vm4079 = vcmp.ge.f32.partialorder %v3823, 0.0
          %vm4080 = vcmp.ge.f32.partialorder %v3824, 0.0
          %vm4081 = vcmp.ge.f32.partialorder %v3825, 0.0
          %vm4082 = vcmp.ge.f32.partialorder %v3826, 0.0
          %vm4083 = vcmp.ge.f32.partialorder %v3827, 0.0
          %vm4084 = vcmp.ge.f32.partialorder %v3828, 0.0
          %vm4085 = vcmp.ge.f32.partialorder %v3829, 0.0
          %vm4086 = vcmp.ge.f32.partialorder %v3830, 0.0
          %vm4087 = vcmp.ge.f32.partialorder %v3831, 0.0
          %vm4088 = vcmp.ge.f32.partialorder %v3832, 0.0
          %vm4089 = vcmp.ge.f32.partialorder %v3833, 0.0
          %vm4090 = vcmp.ge.f32.partialorder %v3834, 0.0
          %vm4091 = vcmp.ge.f32.partialorder %v3835, 0.0
          %vm4092 = vcmp.ge.f32.partialorder %v3836, 0.0
          %vm4093 = vcmp.ge.f32.partialorder %v3837, 0.0
          %v4094 = vmul.f32 %v3582, 0.2
          %v4095 = vmul.f32 %v3583, 0.2
          %v4096 = vmul.f32 %v3584, 0.2
          %v4097 = vmul.f32 %v3585, 0.2
          %v4098 = vmul.f32 %v3586, 0.2
          %v4099 = vmul.f32 %v3587, 0.2
          %v4100 = vmul.f32 %v3588, 0.2
          %v4101 = vmul.f32 %v3589, 0.2
          %v4102 = vmul.f32 %v3590, 0.2
          %v4103 = vmul.f32 %v3591, 0.2
          %v4104 = vmul.f32 %v3592, 0.2
          %v4105 = vmul.f32 %v3593, 0.2
          %v4106 = vmul.f32 %v3594, 0.2
          %v4107 = vmul.f32 %v3595, 0.2
          %v4108 = vmul.f32 %v3596, 0.2
          %v4109 = vmul.f32 %v3597, 0.2
          %v4110 = vmul.f32 %v3598, 0.2
          %v4111 = vmul.f32 %v3599, 0.2
          %v4112 = vmul.f32 %v3600, 0.2
          %v4113 = vmul.f32 %v3601, 0.2
          %v4114 = vmul.f32 %v3602, 0.2
          %v4115 = vmul.f32 %v3603, 0.2
          %v4116 = vmul.f32 %v3604, 0.2
          %v4117 = vmul.f32 %v3605, 0.2
          %v4118 = vmul.f32 %v3606, 0.2
          %v4119 = vmul.f32 %v3607, 0.2
          %v4120 = vmul.f32 %v3608, 0.2
          %v4121 = vmul.f32 %v3609, 0.2
          %v4122 = vmul.f32 %v3610, 0.2
          %v4123 = vmul.f32 %v3611, 0.2
          %v4124 = vmul.f32 %v3612, 0.2
          %v4125 = vmul.f32 %v3613, 0.2
          %v4126 = vmul.f32 %v3614, 0.2
          %v4127 = vmul.f32 %v3615, 0.2
          %v4128 = vmul.f32 %v3616, 0.2
          %v4129 = vmul.f32 %v3617, 0.2
          %v4130 = vmul.f32 %v3618, 0.2
          %v4131 = vmul.f32 %v3619, 0.2
          %v4132 = vmul.f32 %v3620, 0.2
          %v4133 = vmul.f32 %v3621, 0.2
          %v4134 = vmul.f32 %v3622, 0.2
          %v4135 = vmul.f32 %v3623, 0.2
          %v4136 = vmul.f32 %v3624, 0.2
          %v4137 = vmul.f32 %v3625, 0.2
          %v4138 = vmul.f32 %v3626, 0.2
          %v4139 = vmul.f32 %v3627, 0.2
          %v4140 = vmul.f32 %v3628, 0.2
          %v4141 = vmul.f32 %v3629, 0.2
          %v4142 = vmul.f32 %v3630, 0.2
          %v4143 = vmul.f32 %v3631, 0.2
          %v4144 = vmul.f32 %v3632, 0.2
          %v4145 = vmul.f32 %v3633, 0.2
          %v4146 = vmul.f32 %v3634, 0.2
          %v4147 = vmul.f32 %v3635, 0.2
          %v4148 = vmul.f32 %v3636, 0.2
          %v4149 = vmul.f32 %v3637, 0.2
          %v4150 = vmul.f32 %v3638, 0.2
          %v4151 = vmul.f32 %v3639, 0.2
          %v4152 = vmul.f32 %v3640, 0.2
          %v4153 = vmul.f32 %v3641, 0.2
          %v4154 = vmul.f32 %v3642, 0.2
          %v4155 = vmul.f32 %v3643, 0.2
          %v4156 = vmul.f32 %v3644, 0.2
          %v4157 = vmul.f32 %v3645, 0.2
          %v4158 = vmul.f32 %v3646, 0.2
          %v4159 = vmul.f32 %v3647, 0.2
          %v4160 = vmul.f32 %v3648, 0.2
          %v4161 = vmul.f32 %v3649, 0.2
          %v4162 = vmul.f32 %v3650, 0.2
          %v4163 = vmul.f32 %v3651, 0.2
          %v4164 = vmul.f32 %v3652, 0.2
          %v4165 = vmul.f32 %v3653, 0.2
          %v4166 = vmul.f32 %v3654, 0.2
          %v4167 = vmul.f32 %v3655, 0.2
          %v4168 = vmul.f32 %v3656, 0.2
          %v4169 = vmul.f32 %v3657, 0.2
          %v4170 = vmul.f32 %v3658, 0.2
          %v4171 = vmul.f32 %v3659, 0.2
          %v4172 = vmul.f32 %v3660, 0.2
          %v4173 = vmul.f32 %v3661, 0.2
          %v4174 = vmul.f32 %v3662, 0.2
          %v4175 = vmul.f32 %v3663, 0.2
          %v4176 = vmul.f32 %v3664, 0.2
          %v4177 = vmul.f32 %v3665, 0.2
          %v4178 = vmul.f32 %v3666, 0.2
          %v4179 = vmul.f32 %v3667, 0.2
          %v4180 = vmul.f32 %v3668, 0.2
          %v4181 = vmul.f32 %v3669, 0.2
          %v4182 = vmul.f32 %v3670, 0.2
          %v4183 = vmul.f32 %v3671, 0.2
          %v4184 = vmul.f32 %v3672, 0.2
          %v4185 = vmul.f32 %v3673, 0.2
          %v4186 = vmul.f32 %v3674, 0.2
          %v4187 = vmul.f32 %v3675, 0.2
          %v4188 = vmul.f32 %v3676, 0.2
          %v4189 = vmul.f32 %v3677, 0.2
          %v4190 = vmul.f32 %v3678, 0.2
          %v4191 = vmul.f32 %v3679, 0.2
          %v4192 = vmul.f32 %v3680, 0.2
          %v4193 = vmul.f32 %v3681, 0.2
          %v4194 = vmul.f32 %v3682, 0.2
          %v4195 = vmul.f32 %v3683, 0.2
          %v4196 = vmul.f32 %v3684, 0.2
          %v4197 = vmul.f32 %v3685, 0.2
          %v4198 = vmul.f32 %v3686, 0.2
          %v4199 = vmul.f32 %v3687, 0.2
          %v4200 = vmul.f32 %v3688, 0.2
          %v4201 = vmul.f32 %v3689, 0.2
          %v4202 = vmul.f32 %v3690, 0.2
          %v4203 = vmul.f32 %v3691, 0.2
          %v4204 = vmul.f32 %v3692, 0.2
          %v4205 = vmul.f32 %v3693, 0.2
          %v4206 = vmul.f32 %v3694, 0.2
          %v4207 = vmul.f32 %v3695, 0.2
          %v4208 = vmul.f32 %v3696, 0.2
          %v4209 = vmul.f32 %v3697, 0.2
          %v4210 = vmul.f32 %v3698, 0.2
          %v4211 = vmul.f32 %v3699, 0.2
          %v4212 = vmul.f32 %v3700, 0.2
          %v4213 = vmul.f32 %v3701, 0.2
          %v4214 = vmul.f32 %v3702, 0.2
          %v4215 = vmul.f32 %v3703, 0.2
          %v4216 = vmul.f32 %v3704, 0.2
          %v4217 = vmul.f32 %v3705, 0.2
          %v4218 = vmul.f32 %v3706, 0.2
          %v4219 = vmul.f32 %v3707, 0.2
          %v4220 = vmul.f32 %v3708, 0.2
          %v4221 = vmul.f32 %v3709, 0.2
          %v4222 = vmul.f32 %v3710, 0.2
          %v4223 = vmul.f32 %v3711, 0.2
          %v4224 = vmul.f32 %v3712, 0.2
          %v4225 = vmul.f32 %v3713, 0.2
          %v4226 = vmul.f32 %v3714, 0.2
          %v4227 = vmul.f32 %v3715, 0.2
          %v4228 = vmul.f32 %v3716, 0.2
          %v4229 = vmul.f32 %v3717, 0.2
          %v4230 = vmul.f32 %v3718, 0.2
          %v4231 = vmul.f32 %v3719, 0.2
          %v4232 = vmul.f32 %v3720, 0.2
          %v4233 = vmul.f32 %v3721, 0.2
          %v4234 = vmul.f32 %v3722, 0.2
          %v4235 = vmul.f32 %v3723, 0.2
          %v4236 = vmul.f32 %v3724, 0.2
          %v4237 = vmul.f32 %v3725, 0.2
          %v4238 = vmul.f32 %v3726, 0.2
          %v4239 = vmul.f32 %v3727, 0.2
          %v4240 = vmul.f32 %v3728, 0.2
          %v4241 = vmul.f32 %v3729, 0.2
          %v4242 = vmul.f32 %v3730, 0.2
          %v4243 = vmul.f32 %v3731, 0.2
          %v4244 = vmul.f32 %v3732, 0.2
          %v4245 = vmul.f32 %v3733, 0.2
          %v4246 = vmul.f32 %v3734, 0.2
          %v4247 = vmul.f32 %v3735, 0.2
          %v4248 = vmul.f32 %v3736, 0.2
          %v4249 = vmul.f32 %v3737, 0.2
          %v4250 = vmul.f32 %v3738, 0.2
          %v4251 = vmul.f32 %v3739, 0.2
          %v4252 = vmul.f32 %v3740, 0.2
          %v4253 = vmul.f32 %v3741, 0.2
          %v4254 = vmul.f32 %v3742, 0.2
          %v4255 = vmul.f32 %v3743, 0.2
          %v4256 = vmul.f32 %v3744, 0.2
          %v4257 = vmul.f32 %v3745, 0.2
          %v4258 = vmul.f32 %v3746, 0.2
          %v4259 = vmul.f32 %v3747, 0.2
          %v4260 = vmul.f32 %v3748, 0.2
          %v4261 = vmul.f32 %v3749, 0.2
          %v4262 = vmul.f32 %v3750, 0.2
          %v4263 = vmul.f32 %v3751, 0.2
          %v4264 = vmul.f32 %v3752, 0.2
          %v4265 = vmul.f32 %v3753, 0.2
          %v4266 = vmul.f32 %v3754, 0.2
          %v4267 = vmul.f32 %v3755, 0.2
          %v4268 = vmul.f32 %v3756, 0.2
          %v4269 = vmul.f32 %v3757, 0.2
          %v4270 = vmul.f32 %v3758, 0.2
          %v4271 = vmul.f32 %v3759, 0.2
          %v4272 = vmul.f32 %v3760, 0.2
          %v4273 = vmul.f32 %v3761, 0.2
          %v4274 = vmul.f32 %v3762, 0.2
          %v4275 = vmul.f32 %v3763, 0.2
          %v4276 = vmul.f32 %v3764, 0.2
          %v4277 = vmul.f32 %v3765, 0.2
          %v4278 = vmul.f32 %v3766, 0.2
          %v4279 = vmul.f32 %v3767, 0.2
          %v4280 = vmul.f32 %v3768, 0.2
          %v4281 = vmul.f32 %v3769, 0.2
          %v4282 = vmul.f32 %v3770, 0.2
          %v4283 = vmul.f32 %v3771, 0.2
          %v4284 = vmul.f32 %v3772, 0.2
          %v4285 = vmul.f32 %v3773, 0.2
          %v4286 = vmul.f32 %v3774, 0.2
          %v4287 = vmul.f32 %v3775, 0.2
          %v4288 = vmul.f32 %v3776, 0.2
          %v4289 = vmul.f32 %v3777, 0.2
          %v4290 = vmul.f32 %v3778, 0.2
          %v4291 = vmul.f32 %v3779, 0.2
          %v4292 = vmul.f32 %v3780, 0.2
          %v4293 = vmul.f32 %v3781, 0.2
          %v4294 = vmul.f32 %v3782, 0.2
          %v4295 = vmul.f32 %v3783, 0.2
          %v4296 = vmul.f32 %v3784, 0.2
          %v4297 = vmul.f32 %v3785, 0.2
          %v4298 = vmul.f32 %v3786, 0.2
          %v4299 = vmul.f32 %v3787, 0.2
          %v4300 = vmul.f32 %v3788, 0.2
          %v4301 = vmul.f32 %v3789, 0.2
          %v4302 = vmul.f32 %v3790, 0.2
          %v4303 = vmul.f32 %v3791, 0.2
          %v4304 = vmul.f32 %v3792, 0.2
          %v4305 = vmul.f32 %v3793, 0.2
          %v4306 = vmul.f32 %v3794, 0.2
          %v4307 = vmul.f32 %v3795, 0.2
          %v4308 = vmul.f32 %v3796, 0.2
          %v4309 = vmul.f32 %v3797, 0.2
          %v4310 = vmul.f32 %v3798, 0.2
          %v4311 = vmul.f32 %v3799, 0.2
          %v4312 = vmul.f32 %v3800, 0.2
          %v4313 = vmul.f32 %v3801, 0.2
          %v4314 = vmul.f32 %v3802, 0.2
          %v4315 = vmul.f32 %v3803, 0.2
          %v4316 = vmul.f32 %v3804, 0.2
          %v4317 = vmul.f32 %v3805, 0.2
          %v4318 = vmul.f32 %v3806, 0.2
          %v4319 = vmul.f32 %v3807, 0.2
          %v4320 = vmul.f32 %v3808, 0.2
          %v4321 = vmul.f32 %v3809, 0.2
          %v4322 = vmul.f32 %v3810, 0.2
          %v4323 = vmul.f32 %v3811, 0.2
          %v4324 = vmul.f32 %v3812, 0.2
          %v4325 = vmul.f32 %v3813, 0.2
          %v4326 = vmul.f32 %v3814, 0.2
          %v4327 = vmul.f32 %v3815, 0.2
          %v4328 = vmul.f32 %v3816, 0.2
          %v4329 = vmul.f32 %v3817, 0.2
          %v4330 = vmul.f32 %v3818, 0.2
          %v4331 = vmul.f32 %v3819, 0.2
          %v4332 = vmul.f32 %v3820, 0.2
          %v4333 = vmul.f32 %v3821, 0.2
          %v4334 = vmul.f32 %v3822, 0.2
          %v4335 = vmul.f32 %v3823, 0.2
          %v4336 = vmul.f32 %v3824, 0.2
          %v4337 = vmul.f32 %v3825, 0.2
          %v4338 = vmul.f32 %v3826, 0.2
          %v4339 = vmul.f32 %v3827, 0.2
          %v4340 = vmul.f32 %v3828, 0.2
          %v4341 = vmul.f32 %v3829, 0.2
          %v4342 = vmul.f32 %v3830, 0.2
          %v4343 = vmul.f32 %v3831, 0.2
          %v4344 = vmul.f32 %v3832, 0.2
          %v4345 = vmul.f32 %v3833, 0.2
          %v4346 = vmul.f32 %v3834, 0.2
          %v4347 = vmul.f32 %v3835, 0.2
          %v4348 = vmul.f32 %v3836, 0.2
          %v4349 = vmul.f32 %v3837, 0.2
          %v4350 = vsel %vm3838, %v3582, %v4094
          %v4351 = vsel %vm3839, %v3583, %v4095
          %v4352 = vsel %vm3840, %v3584, %v4096
          %v4353 = vsel %vm3841, %v3585, %v4097
          %v4354 = vsel %vm3842, %v3586, %v4098
          %v4355 = vsel %vm3843, %v3587, %v4099
          %v4356 = vsel %vm3844, %v3588, %v4100
          %v4357 = vsel %vm3845, %v3589, %v4101
          %v4358 = vsel %vm3846, %v3590, %v4102
          %v4359 = vsel %vm3847, %v3591, %v4103
          %v4360 = vsel %vm3848, %v3592, %v4104
          %v4361 = vsel %vm3849, %v3593, %v4105
          %v4362 = vsel %vm3850, %v3594, %v4106
          %v4363 = vsel %vm3851, %v3595, %v4107
          %v4364 = vsel %vm3852, %v3596, %v4108
          %v4365 = vsel %vm3853, %v3597, %v4109
          %v4366 = vsel %vm3854, %v3598, %v4110
          %v4367 = vsel %vm3855, %v3599, %v4111
          %v4368 = vsel %vm3856, %v3600, %v4112
          %v4369 = vsel %vm3857, %v3601, %v4113
          %v4370 = vsel %vm3858, %v3602, %v4114
          %v4371 = vsel %vm3859, %v3603, %v4115
          %v4372 = vsel %vm3860, %v3604, %v4116
          %v4373 = vsel %vm3861, %v3605, %v4117
          %v4374 = vsel %vm3862, %v3606, %v4118
          %v4375 = vsel %vm3863, %v3607, %v4119
          %v4376 = vsel %vm3864, %v3608, %v4120
          %v4377 = vsel %vm3865, %v3609, %v4121
          %v4378 = vsel %vm3866, %v3610, %v4122
          %v4379 = vsel %vm3867, %v3611, %v4123
          %v4380 = vsel %vm3868, %v3612, %v4124
          %v4381 = vsel %vm3869, %v3613, %v4125
          %v4382 = vsel %vm3870, %v3614, %v4126
          %v4383 = vsel %vm3871, %v3615, %v4127
          %v4384 = vsel %vm3872, %v3616, %v4128
          %v4385 = vsel %vm3873, %v3617, %v4129
          %v4386 = vsel %vm3874, %v3618, %v4130
          %v4387 = vsel %vm3875, %v3619, %v4131
          %v4388 = vsel %vm3876, %v3620, %v4132
          %v4389 = vsel %vm3877, %v3621, %v4133
          %v4390 = vsel %vm3878, %v3622, %v4134
          %v4391 = vsel %vm3879, %v3623, %v4135
          %v4392 = vsel %vm3880, %v3624, %v4136
          %v4393 = vsel %vm3881, %v3625, %v4137
          %v4394 = vsel %vm3882, %v3626, %v4138
          %v4395 = vsel %vm3883, %v3627, %v4139
          %v4396 = vsel %vm3884, %v3628, %v4140
          %v4397 = vsel %vm3885, %v3629, %v4141
          %v4398 = vsel %vm3886, %v3630, %v4142
          %v4399 = vsel %vm3887, %v3631, %v4143
          %v4400 = vsel %vm3888, %v3632, %v4144
          %v4401 = vsel %vm3889, %v3633, %v4145
          %v4402 = vsel %vm3890, %v3634, %v4146
          %v4403 = vsel %vm3891, %v3635, %v4147
          %v4404 = vsel %vm3892, %v3636, %v4148
          %v4405 = vsel %vm3893, %v3637, %v4149
          %v4406 = vsel %vm3894, %v3638, %v4150
          %v4407 = vsel %vm3895, %v3639, %v4151
          %v4408 = vsel %vm3896, %v3640, %v4152
          %v4409 = vsel %vm3897, %v3641, %v4153
          %v4410 = vsel %vm3898, %v3642, %v4154
          %v4411 = vsel %vm3899, %v3643, %v4155
          %v4412 = vsel %vm3900, %v3644, %v4156
          %v4413 = vsel %vm3901, %v3645, %v4157
          %v4414 = vsel %vm3902, %v3646, %v4158
          %v4415 = vsel %vm3903, %v3647, %v4159
          %v4416 = vsel %vm3904, %v3648, %v4160
          %v4417 = vsel %vm3905, %v3649, %v4161
          %v4418 = vsel %vm3906, %v3650, %v4162
          %v4419 = vsel %vm3907, %v3651, %v4163
          %v4420 = vsel %vm3908, %v3652, %v4164
          %v4421 = vsel %vm3909, %v3653, %v4165
          %v4422 = vsel %vm3910, %v3654, %v4166
          %v4423 = vsel %vm3911, %v3655, %v4167
          %v4424 = vsel %vm3912, %v3656, %v4168
          %v4425 = vsel %vm3913, %v3657, %v4169
          %v4426 = vsel %vm3914, %v3658, %v4170
          %v4427 = vsel %vm3915, %v3659, %v4171
          %v4428 = vsel %vm3916, %v3660, %v4172
          %v4429 = vsel %vm3917, %v3661, %v4173
          %v4430 = vsel %vm3918, %v3662, %v4174
          %v4431 = vsel %vm3919, %v3663, %v4175
          %v4432 = vsel %vm3920, %v3664, %v4176
          %v4433 = vsel %vm3921, %v3665, %v4177
          %v4434 = vsel %vm3922, %v3666, %v4178
          %v4435 = vsel %vm3923, %v3667, %v4179
          %v4436 = vsel %vm3924, %v3668, %v4180
          %v4437 = vsel %vm3925, %v3669, %v4181
          %v4438 = vsel %vm3926, %v3670, %v4182
          %v4439 = vsel %vm3927, %v3671, %v4183
          %v4440 = vsel %vm3928, %v3672, %v4184
          %v4441 = vsel %vm3929, %v3673, %v4185
          %v4442 = vsel %vm3930, %v3674, %v4186
          %v4443 = vsel %vm3931, %v3675, %v4187
          %v4444 = vsel %vm3932, %v3676, %v4188
          %v4445 = vsel %vm3933, %v3677, %v4189
          %v4446 = vsel %vm3934, %v3678, %v4190
          %v4447 = vsel %vm3935, %v3679, %v4191
          %v4448 = vsel %vm3936, %v3680, %v4192
          %v4449 = vsel %vm3937, %v3681, %v4193
          %v4450 = vsel %vm3938, %v3682, %v4194
          %v4451 = vsel %vm3939, %v3683, %v4195
          %v4452 = vsel %vm3940, %v3684, %v4196
          %v4453 = vsel %vm3941, %v3685, %v4197
          %v4454 = vsel %vm3942, %v3686, %v4198
          %v4455 = vsel %vm3943, %v3687, %v4199
          %v4456 = vsel %vm3944, %v3688, %v4200
          %v4457 = vsel %vm3945, %v3689, %v4201
          %v4458 = vsel %vm3946, %v3690, %v4202
          %v4459 = vsel %vm3947, %v3691, %v4203
          %v4460 = vsel %vm3948, %v3692, %v4204
          %v4461 = vsel %vm3949, %v3693, %v4205
          %v4462 = vsel %vm3950, %v3694, %v4206
          %v4463 = vsel %vm3951, %v3695, %v4207
          %v4464 = vsel %vm3952, %v3696, %v4208
          %v4465 = vsel %vm3953, %v3697, %v4209
          %v4466 = vsel %vm3954, %v3698, %v4210
          %v4467 = vsel %vm3955, %v3699, %v4211
          %v4468 = vsel %vm3956, %v3700, %v4212
          %v4469 = vsel %vm3957, %v3701, %v4213
          %v4470 = vsel %vm3958, %v3702, %v4214
          %v4471 = vsel %vm3959, %v3703, %v4215
          %v4472 = vsel %vm3960, %v3704, %v4216
          %v4473 = vsel %vm3961, %v3705, %v4217
          %v4474 = vsel %vm3962, %v3706, %v4218
          %v4475 = vsel %vm3963, %v3707, %v4219
          %v4476 = vsel %vm3964, %v3708, %v4220
          %v4477 = vsel %vm3965, %v3709, %v4221
          %v4478 = vsel %vm3966, %v3710, %v4222
          %v4479 = vsel %vm3967, %v3711, %v4223
          %v4480 = vsel %vm3968, %v3712, %v4224
          %v4481 = vsel %vm3969, %v3713, %v4225
          %v4482 = vsel %vm3970, %v3714, %v4226
          %v4483 = vsel %vm3971, %v3715, %v4227
          %v4484 = vsel %vm3972, %v3716, %v4228
          %v4485 = vsel %vm3973, %v3717, %v4229
          %v4486 = vsel %vm3974, %v3718, %v4230
          %v4487 = vsel %vm3975, %v3719, %v4231
          %v4488 = vsel %vm3976, %v3720, %v4232
          %v4489 = vsel %vm3977, %v3721, %v4233
          %v4490 = vsel %vm3978, %v3722, %v4234
          %v4491 = vsel %vm3979, %v3723, %v4235
          %v4492 = vsel %vm3980, %v3724, %v4236
          %v4493 = vsel %vm3981, %v3725, %v4237
          %v4494 = vsel %vm3982, %v3726, %v4238
          %v4495 = vsel %vm3983, %v3727, %v4239
          %v4496 = vsel %vm3984, %v3728, %v4240
          %v4497 = vsel %vm3985, %v3729, %v4241
          %v4498 = vsel %vm3986, %v3730, %v4242
          %v4499 = vsel %vm3987, %v3731, %v4243
          %v4500 = vsel %vm3988, %v3732, %v4244
          %v4501 = vsel %vm3989, %v3733, %v4245
          %v4502 = vsel %vm3990, %v3734, %v4246
          %v4503 = vsel %vm3991, %v3735, %v4247
          %v4504 = vsel %vm3992, %v3736, %v4248
          %v4505 = vsel %vm3993, %v3737, %v4249
          %v4506 = vsel %vm3994, %v3738, %v4250
          %v4507 = vsel %vm3995, %v3739, %v4251
          %v4508 = vsel %vm3996, %v3740, %v4252
          %v4509 = vsel %vm3997, %v3741, %v4253
          %v4510 = vsel %vm3998, %v3742, %v4254
          %v4511 = vsel %vm3999, %v3743, %v4255
          %v4512 = vsel %vm4000, %v3744, %v4256
          %v4513 = vsel %vm4001, %v3745, %v4257
          %v4514 = vsel %vm4002, %v3746, %v4258
          %v4515 = vsel %vm4003, %v3747, %v4259
          %v4516 = vsel %vm4004, %v3748, %v4260
          %v4517 = vsel %vm4005, %v3749, %v4261
          %v4518 = vsel %vm4006, %v3750, %v4262
          %v4519 = vsel %vm4007, %v3751, %v4263
          %v4520 = vsel %vm4008, %v3752, %v4264
          %v4521 = vsel %vm4009, %v3753, %v4265
          %v4522 = vsel %vm4010, %v3754, %v4266
          %v4523 = vsel %vm4011, %v3755, %v4267
          %v4524 = vsel %vm4012, %v3756, %v4268
          %v4525 = vsel %vm4013, %v3757, %v4269
          %v4526 = vsel %vm4014, %v3758, %v4270
          %v4527 = vsel %vm4015, %v3759, %v4271
          %v4528 = vsel %vm4016, %v3760, %v4272
          %v4529 = vsel %vm4017, %v3761, %v4273
          %v4530 = vsel %vm4018, %v3762, %v4274
          %v4531 = vsel %vm4019, %v3763, %v4275
          %v4532 = vsel %vm4020, %v3764, %v4276
          %v4533 = vsel %vm4021, %v3765, %v4277
          %v4534 = vsel %vm4022, %v3766, %v4278
          %v4535 = vsel %vm4023, %v3767, %v4279
          %v4536 = vsel %vm4024, %v3768, %v4280
          %v4537 = vsel %vm4025, %v3769, %v4281
          %v4538 = vsel %vm4026, %v3770, %v4282
          %v4539 = vsel %vm4027, %v3771, %v4283
          %v4540 = vsel %vm4028, %v3772, %v4284
          %v4541 = vsel %vm4029, %v3773, %v4285
          %v4542 = vsel %vm4030, %v3774, %v4286
          %v4543 = vsel %vm4031, %v3775, %v4287
          %v4544 = vsel %vm4032, %v3776, %v4288
          %v4545 = vsel %vm4033, %v3777, %v4289
          %v4546 = vsel %vm4034, %v3778, %v4290
          %v4547 = vsel %vm4035, %v3779, %v4291
          %v4548 = vsel %vm4036, %v3780, %v4292
          %v4549 = vsel %vm4037, %v3781, %v4293
          %v4550 = vsel %vm4038, %v3782, %v4294
          %v4551 = vsel %vm4039, %v3783, %v4295
          %v4552 = vsel %vm4040, %v3784, %v4296
          %v4553 = vsel %vm4041, %v3785, %v4297
          %v4554 = vsel %vm4042, %v3786, %v4298
          %v4555 = vsel %vm4043, %v3787, %v4299
          %v4556 = vsel %vm4044, %v3788, %v4300
          %v4557 = vsel %vm4045, %v3789, %v4301
          %v4558 = vsel %vm4046, %v3790, %v4302
          %v4559 = vsel %vm4047, %v3791, %v4303
          %v4560 = vsel %vm4048, %v3792, %v4304
          %v4561 = vsel %vm4049, %v3793, %v4305
          %v4562 = vsel %vm4050, %v3794, %v4306
          %v4563 = vsel %vm4051, %v3795, %v4307
          %v4564 = vsel %vm4052, %v3796, %v4308
          %v4565 = vsel %vm4053, %v3797, %v4309
          %v4566 = vsel %vm4054, %v3798, %v4310
          %v4567 = vsel %vm4055, %v3799, %v4311
          %v4568 = vsel %vm4056, %v3800, %v4312
          %v4569 = vsel %vm4057, %v3801, %v4313
          %v4570 = vsel %vm4058, %v3802, %v4314
          %v4571 = vsel %vm4059, %v3803, %v4315
          %v4572 = vsel %vm4060, %v3804, %v4316
          %v4573 = vsel %vm4061, %v3805, %v4317
          %v4574 = vsel %vm4062, %v3806, %v4318
          %v4575 = vsel %vm4063, %v3807, %v4319
          %v4576 = vsel %vm4064, %v3808, %v4320
          %v4577 = vsel %vm4065, %v3809, %v4321
          %v4578 = vsel %vm4066, %v3810, %v4322
          %v4579 = vsel %vm4067, %v3811, %v4323
          %v4580 = vsel %vm4068, %v3812, %v4324
          %v4581 = vsel %vm4069, %v3813, %v4325
          %v4582 = vsel %vm4070, %v3814, %v4326
          %v4583 = vsel %vm4071, %v3815, %v4327
          %v4584 = vsel %vm4072, %v3816, %v4328
          %v4585 = vsel %vm4073, %v3817, %v4329
          %v4586 = vsel %vm4074, %v3818, %v4330
          %v4587 = vsel %vm4075, %v3819, %v4331
          %v4588 = vsel %vm4076, %v3820, %v4332
          %v4589 = vsel %vm4077, %v3821, %v4333
          %v4590 = vsel %vm4078, %v3822, %v4334
          %v4591 = vsel %vm4079, %v3823, %v4335
          %v4592 = vsel %vm4080, %v3824, %v4336
          %v4593 = vsel %vm4081, %v3825, %v4337
          %v4594 = vsel %vm4082, %v3826, %v4338
          %v4595 = vsel %vm4083, %v3827, %v4339
          %v4596 = vsel %vm4084, %v3828, %v4340
          %v4597 = vsel %vm4085, %v3829, %v4341
          %v4598 = vsel %vm4086, %v3830, %v4342
          %v4599 = vsel %vm4087, %v3831, %v4343
          %v4600 = vsel %vm4088, %v3832, %v4344
          %v4601 = vsel %vm4089, %v3833, %v4345
          %v4602 = vsel %vm4090, %v3834, %v4346
          %v4603 = vsel %vm4091, %v3835, %v4347
          %v4604 = vsel %vm4092, %v3836, %v4348
          %v4605 = vsel %vm4093, %v3837, %v4349
          %4606 = vst.msk [vmem:[%s266] sm:$0xff] %vm2802, %v4350
          %4607 = vst.msk [vmem:[%s266 + $0x8] sm:$0xff] %vm2802, %v4351
          %4608 = vst.msk [vmem:[%s266 + $0x10] sm:$0xff] %vm2802, %v4352
          %4609 = vst.msk [vmem:[%s266 + $0x18] sm:$0xff] %vm2802, %v4353
          %4610 = vst.msk [vmem:[%s266 + $0x20] sm:$0xff] %vm2802, %v4354
          %4611 = vst.msk [vmem:[%s266 + $0x28] sm:$0xff] %vm2802, %v4355
          %4612 = vst.msk [vmem:[%s266 + $0x30] sm:$0xff] %vm2802, %v4356
          %4613 = vst.msk [vmem:[%s266 + $0x38] sm:$0xff] %vm2802, %v4357
          %4614 = vst.msk [vmem:[%s266 + $0x40] sm:$0xff] %vm2802, %v4358
          %4615 = vst.msk [vmem:[%s266 + $0x48] sm:$0xff] %vm2802, %v4359
          %4616 = vst.msk [vmem:[%s266 + $0x50] sm:$0xff] %vm2802, %v4360
          %4617 = vst.msk [vmem:[%s266 + $0x58] sm:$0xff] %vm2802, %v4361
          %4618 = vst.msk [vmem:[%s266 + $0x60] sm:$0xff] %vm2802, %v4362
          %4619 = vst.msk [vmem:[%s266 + $0x68] sm:$0xff] %vm2802, %v4363
          %4620 = vst.msk [vmem:[%s266 + $0x70] sm:$0xff] %vm2802, %v4364
          %4621 = vst.msk [vmem:[%s266 + $0x78] sm:$0xff] %vm2802, %v4365
          %4622 = vst.msk [vmem:[%s266 + $0x80] sm:$0xff] %vm2802, %v4366
          %4623 = vst.msk [vmem:[%s266 + $0x88] sm:$0xff] %vm2802, %v4367
          %4624 = vst.msk [vmem:[%s266 + $0x90] sm:$0xff] %vm2802, %v4368
          %4625 = vst.msk [vmem:[%s266 + $0x98] sm:$0xff] %vm2802, %v4369
          %4626 = vst.msk [vmem:[%s266 + $0xa0] sm:$0xff] %vm2802, %v4370
          %4627 = vst.msk [vmem:[%s266 + $0xa8] sm:$0xff] %vm2802, %v4371
          %4628 = vst.msk [vmem:[%s266 + $0xb0] sm:$0xff] %vm2802, %v4372
          %4629 = vst.msk [vmem:[%s266 + $0xb8] sm:$0xff] %vm2802, %v4373
          %4630 = vst.msk [vmem:[%s266 + $0xc0] sm:$0xff] %vm2802, %v4374
          %4631 = vst.msk [vmem:[%s266 + $0xc8] sm:$0xff] %vm2802, %v4375
          %4632 = vst.msk [vmem:[%s266 + $0xd0] sm:$0xff] %vm2802, %v4376
          %4633 = vst.msk [vmem:[%s266 + $0xd8] sm:$0xff] %vm2802, %v4377
          %4634 = vst.msk [vmem:[%s266 + $0xe0] sm:$0xff] %vm2802, %v4378
          %4635 = vst.msk [vmem:[%s266 + $0xe8] sm:$0xff] %vm2802, %v4379
          %4636 = vst.msk [vmem:[%s266 + $0xf0] sm:$0xff] %vm2802, %v4380
          %4637 = vst.msk [vmem:[%s266 + $0xf8] sm:$0xff] %vm2802, %v4381
          %4638 = vst.msk [vmem:[%s266 + $0x100] sm:$0xff] %vm2802, %v4382
          %4639 = vst.msk [vmem:[%s266 + $0x108] sm:$0xff] %vm2802, %v4383
          %4640 = vst.msk [vmem:[%s266 + $0x110] sm:$0xff] %vm2802, %v4384
          %4641 = vst.msk [vmem:[%s266 + $0x118] sm:$0xff] %vm2802, %v4385
          %4642 = vst.msk [vmem:[%s266 + $0x120] sm:$0xff] %vm2802, %v4386
          %4643 = vst.msk [vmem:[%s266 + $0x128] sm:$0xff] %vm2802, %v4387
          %4644 = vst.msk [vmem:[%s266 + $0x130] sm:$0xff] %vm2802, %v4388
          %4645 = vst.msk [vmem:[%s266 + $0x138] sm:$0xff] %vm2802, %v4389
          %4646 = vst.msk [vmem:[%s266 + $0x140] sm:$0xff] %vm2802, %v4390
          %4647 = vst.msk [vmem:[%s266 + $0x148] sm:$0xff] %vm2802, %v4391
          %4648 = vst.msk [vmem:[%s266 + $0x150] sm:$0xff] %vm2802, %v4392
          %4649 = vst.msk [vmem:[%s266 + $0x158] sm:$0xff] %vm2802, %v4393
          %4650 = vst.msk [vmem:[%s266 + $0x160] sm:$0xff] %vm2802, %v4394
          %4651 = vst.msk [vmem:[%s266 + $0x168] sm:$0xff] %vm2802, %v4395
          %4652 = vst.msk [vmem:[%s266 + $0x170] sm:$0xff] %vm2802, %v4396
          %4653 = vst.msk [vmem:[%s266 + $0x178] sm:$0xff] %vm2802, %v4397
          %4654 = vst.msk [vmem:[%s266 + $0x180] sm:$0xff] %vm2802, %v4398
          %4655 = vst.msk [vmem:[%s266 + $0x188] sm:$0xff] %vm2802, %v4399
          %4656 = vst.msk [vmem:[%s266 + $0x190] sm:$0xff] %vm2802, %v4400
          %4657 = vst.msk [vmem:[%s266 + $0x198] sm:$0xff] %vm2802, %v4401
          %4658 = vst.msk [vmem:[%s266 + $0x1a0] sm:$0xff] %vm2802, %v4402
          %4659 = vst.msk [vmem:[%s266 + $0x1a8] sm:$0xff] %vm2802, %v4403
          %4660 = vst.msk [vmem:[%s266 + $0x1b0] sm:$0xff] %vm2802, %v4404
          %4661 = vst.msk [vmem:[%s266 + $0x1b8] sm:$0xff] %vm2802, %v4405
          %4662 = vst.msk [vmem:[%s266 + $0x1c0] sm:$0xff] %vm2802, %v4406
          %4663 = vst.msk [vmem:[%s266 + $0x1c8] sm:$0xff] %vm2802, %v4407
          %4664 = vst.msk [vmem:[%s266 + $0x1d0] sm:$0xff] %vm2802, %v4408
          %4665 = vst.msk [vmem:[%s266 + $0x1d8] sm:$0xff] %vm2802, %v4409
          %4666 = vst.msk [vmem:[%s266 + $0x1e0] sm:$0xff] %vm2802, %v4410
          %4667 = vst.msk [vmem:[%s266 + $0x1e8] sm:$0xff] %vm2802, %v4411
          %4668 = vst.msk [vmem:[%s266 + $0x1f0] sm:$0xff] %vm2802, %v4412
          %4669 = vst.msk [vmem:[%s266 + $0x1f8] sm:$0xff] %vm2802, %v4413
          %4670 = vst.msk [vmem:[%s266 + $0x200] sm:$0xff] %vm2802, %v4414
          %4671 = vst.msk [vmem:[%s266 + $0x208] sm:$0xff] %vm2802, %v4415
          %4672 = vst.msk [vmem:[%s266 + $0x210] sm:$0xff] %vm2802, %v4416
          %4673 = vst.msk [vmem:[%s266 + $0x218] sm:$0xff] %vm2802, %v4417
          %4674 = vst.msk [vmem:[%s266 + $0x220] sm:$0xff] %vm2802, %v4418
          %4675 = vst.msk [vmem:[%s266 + $0x228] sm:$0xff] %vm2802, %v4419
          %4676 = vst.msk [vmem:[%s266 + $0x230] sm:$0xff] %vm2802, %v4420
          %4677 = vst.msk [vmem:[%s266 + $0x238] sm:$0xff] %vm2802, %v4421
          %4678 = vst.msk [vmem:[%s266 + $0x240] sm:$0xff] %vm2802, %v4422
          %4679 = vst.msk [vmem:[%s266 + $0x248] sm:$0xff] %vm2802, %v4423
          %4680 = vst.msk [vmem:[%s266 + $0x250] sm:$0xff] %vm2802, %v4424
          %4681 = vst.msk [vmem:[%s266 + $0x258] sm:$0xff] %vm2802, %v4425
          %4682 = vst.msk [vmem:[%s266 + $0x260] sm:$0xff] %vm2802, %v4426
          %4683 = vst.msk [vmem:[%s266 + $0x268] sm:$0xff] %vm2802, %v4427
          %4684 = vst.msk [vmem:[%s266 + $0x270] sm:$0xff] %vm2802, %v4428
          %4685 = vst.msk [vmem:[%s266 + $0x278] sm:$0xff] %vm2802, %v4429
          %4686 = vst.msk [vmem:[%s266 + $0x280] sm:$0xff] %vm2802, %v4430
          %4687 = vst.msk [vmem:[%s266 + $0x288] sm:$0xff] %vm2802, %v4431
          %4688 = vst.msk [vmem:[%s266 + $0x290] sm:$0xff] %vm2802, %v4432
          %4689 = vst.msk [vmem:[%s266 + $0x298] sm:$0xff] %vm2802, %v4433
          %4690 = vst.msk [vmem:[%s266 + $0x2a0] sm:$0xff] %vm2802, %v4434
          %4691 = vst.msk [vmem:[%s266 + $0x2a8] sm:$0xff] %vm2802, %v4435
          %4692 = vst.msk [vmem:[%s266 + $0x2b0] sm:$0xff] %vm2802, %v4436
          %4693 = vst.msk [vmem:[%s266 + $0x2b8] sm:$0xff] %vm2802, %v4437
          %4694 = vst.msk [vmem:[%s266 + $0x2c0] sm:$0xff] %vm2802, %v4438
          %4695 = vst.msk [vmem:[%s266 + $0x2c8] sm:$0xff] %vm2802, %v4439
          %4696 = vst.msk [vmem:[%s266 + $0x2d0] sm:$0xff] %vm2802, %v4440
          %4697 = vst.msk [vmem:[%s266 + $0x2d8] sm:$0xff] %vm2802, %v4441
          %4698 = vst.msk [vmem:[%s266 + $0x2e0] sm:$0xff] %vm2802, %v4442
          %4699 = vst.msk [vmem:[%s266 + $0x2e8] sm:$0xff] %vm2802, %v4443
          %4700 = vst.msk [vmem:[%s266 + $0x2f0] sm:$0xff] %vm2802, %v4444
          %4701 = vst.msk [vmem:[%s266 + $0x2f8] sm:$0xff] %vm2802, %v4445
          %4702 = vst.msk [vmem:[%s266 + $0x300] sm:$0xff] %vm2802, %v4446
          %4703 = vst.msk [vmem:[%s266 + $0x308] sm:$0xff] %vm2802, %v4447
          %4704 = vst.msk [vmem:[%s266 + $0x310] sm:$0xff] %vm2802, %v4448
          %4705 = vst.msk [vmem:[%s266 + $0x318] sm:$0xff] %vm2802, %v4449
          %4706 = vst.msk [vmem:[%s266 + $0x320] sm:$0xff] %vm2802, %v4450
          %4707 = vst.msk [vmem:[%s266 + $0x328] sm:$0xff] %vm2802, %v4451
          %4708 = vst.msk [vmem:[%s266 + $0x330] sm:$0xff] %vm2802, %v4452
          %4709 = vst.msk [vmem:[%s266 + $0x338] sm:$0xff] %vm2802, %v4453
          %4710 = vst.msk [vmem:[%s266 + $0x340] sm:$0xff] %vm2802, %v4454
          %4711 = vst.msk [vmem:[%s266 + $0x348] sm:$0xff] %vm2802, %v4455
          %4712 = vst.msk [vmem:[%s266 + $0x350] sm:$0xff] %vm2802, %v4456
          %4713 = vst.msk [vmem:[%s266 + $0x358] sm:$0xff] %vm2802, %v4457
          %4714 = vst.msk [vmem:[%s266 + $0x360] sm:$0xff] %vm2802, %v4458
          %4715 = vst.msk [vmem:[%s266 + $0x368] sm:$0xff] %vm2802, %v4459
          %4716 = vst.msk [vmem:[%s266 + $0x370] sm:$0xff] %vm2802, %v4460
          %4717 = vst.msk [vmem:[%s266 + $0x378] sm:$0xff] %vm2802, %v4461
          %4718 = vst.msk [vmem:[%s266 + $0x380] sm:$0xff] %vm2802, %v4462
          %4719 = vst.msk [vmem:[%s266 + $0x388] sm:$0xff] %vm2802, %v4463
          %4720 = vst.msk [vmem:[%s266 + $0x390] sm:$0xff] %vm2802, %v4464
          %4721 = vst.msk [vmem:[%s266 + $0x398] sm:$0xff] %vm2802, %v4465
          %4722 = vst.msk [vmem:[%s266 + $0x3a0] sm:$0xff] %vm2802, %v4466
          %4723 = vst.msk [vmem:[%s266 + $0x3a8] sm:$0xff] %vm2802, %v4467
          %4724 = vst.msk [vmem:[%s266 + $0x3b0] sm:$0xff] %vm2802, %v4468
          %4725 = vst.msk [vmem:[%s266 + $0x3b8] sm:$0xff] %vm2802, %v4469
          %4726 = vst.msk [vmem:[%s266 + $0x3c0] sm:$0xff] %vm2802, %v4470
          %4727 = vst.msk [vmem:[%s266 + $0x3c8] sm:$0xff] %vm2802, %v4471
          %4728 = vst.msk [vmem:[%s266 + $0x3d0] sm:$0xff] %vm2802, %v4472
          %4729 = vst.msk [vmem:[%s266 + $0x3d8] sm:$0xff] %vm2802, %v4473
          %4730 = vst.msk [vmem:[%s266 + $0x3e0] sm:$0xff] %vm2802, %v4474
          %4731 = vst.msk [vmem:[%s266 + $0x3e8] sm:$0xff] %vm2802, %v4475
          %4732 = vst.msk [vmem:[%s266 + $0x3f0] sm:$0xff] %vm2802, %v4476
          %4733 = vst.msk [vmem:[%s266 + $0x3f8] sm:$0xff] %vm2802, %v4477
          %4734 = vst.msk [vmem:[%s266 + $0x400] sm:$0xff] %vm2802, %v4478
          %4735 = vst.msk [vmem:[%s266 + $0x408] sm:$0xff] %vm2802, %v4479
          %4736 = vst.msk [vmem:[%s266 + $0x410] sm:$0xff] %vm2802, %v4480
          %4737 = vst.msk [vmem:[%s266 + $0x418] sm:$0xff] %vm2802, %v4481
          %4738 = vst.msk [vmem:[%s266 + $0x420] sm:$0xff] %vm2802, %v4482
          %4739 = vst.msk [vmem:[%s266 + $0x428] sm:$0xff] %vm2802, %v4483
          %4740 = vst.msk [vmem:[%s266 + $0x430] sm:$0xff] %vm2802, %v4484
          %4741 = vst.msk [vmem:[%s266 + $0x438] sm:$0xff] %vm2802, %v4485
          %4742 = vst.msk [vmem:[%s266 + $0x440] sm:$0xff] %vm2802, %v4486
          %4743 = vst.msk [vmem:[%s266 + $0x448] sm:$0xff] %vm2802, %v4487
          %4744 = vst.msk [vmem:[%s266 + $0x450] sm:$0xff] %vm2802, %v4488
          %4745 = vst.msk [vmem:[%s266 + $0x458] sm:$0xff] %vm2802, %v4489
          %4746 = vst.msk [vmem:[%s266 + $0x460] sm:$0xff] %vm2802, %v4490
          %4747 = vst.msk [vmem:[%s266 + $0x468] sm:$0xff] %vm2802, %v4491
          %4748 = vst.msk [vmem:[%s266 + $0x470] sm:$0xff] %vm2802, %v4492
          %4749 = vst.msk [vmem:[%s266 + $0x478] sm:$0xff] %vm2802, %v4493
          %4750 = vst.msk [vmem:[%s266 + $0x480] sm:$0xff] %vm2802, %v4494
          %4751 = vst.msk [vmem:[%s266 + $0x488] sm:$0xff] %vm2802, %v4495
          %4752 = vst.msk [vmem:[%s266 + $0x490] sm:$0xff] %vm2802, %v4496
          %4753 = vst.msk [vmem:[%s266 + $0x498] sm:$0xff] %vm2802, %v4497
          %4754 = vst.msk [vmem:[%s266 + $0x4a0] sm:$0xff] %vm2802, %v4498
          %4755 = vst.msk [vmem:[%s266 + $0x4a8] sm:$0xff] %vm2802, %v4499
          %4756 = vst.msk [vmem:[%s266 + $0x4b0] sm:$0xff] %vm2802, %v4500
          %4757 = vst.msk [vmem:[%s266 + $0x4b8] sm:$0xff] %vm2802, %v4501
          %4758 = vst.msk [vmem:[%s266 + $0x4c0] sm:$0xff] %vm2802, %v4502
          %4759 = vst.msk [vmem:[%s266 + $0x4c8] sm:$0xff] %vm2802, %v4503
          %4760 = vst.msk [vmem:[%s266 + $0x4d0] sm:$0xff] %vm2802, %v4504
          %4761 = vst.msk [vmem:[%s266 + $0x4d8] sm:$0xff] %vm2802, %v4505
          %4762 = vst.msk [vmem:[%s266 + $0x4e0] sm:$0xff] %vm2802, %v4506
          %4763 = vst.msk [vmem:[%s266 + $0x4e8] sm:$0xff] %vm2802, %v4507
          %4764 = vst.msk [vmem:[%s266 + $0x4f0] sm:$0xff] %vm2802, %v4508
          %4765 = vst.msk [vmem:[%s266 + $0x4f8] sm:$0xff] %vm2802, %v4509
          %4766 = vst.msk [vmem:[%s266 + $0x500] sm:$0xff] %vm2802, %v4510
          %4767 = vst.msk [vmem:[%s266 + $0x508] sm:$0xff] %vm2802, %v4511
          %4768 = vst.msk [vmem:[%s266 + $0x510] sm:$0xff] %vm2802, %v4512
          %4769 = vst.msk [vmem:[%s266 + $0x518] sm:$0xff] %vm2802, %v4513
          %4770 = vst.msk [vmem:[%s266 + $0x520] sm:$0xff] %vm2802, %v4514
          %4771 = vst.msk [vmem:[%s266 + $0x528] sm:$0xff] %vm2802, %v4515
          %4772 = vst.msk [vmem:[%s266 + $0x530] sm:$0xff] %vm2802, %v4516
          %4773 = vst.msk [vmem:[%s266 + $0x538] sm:$0xff] %vm2802, %v4517
          %4774 = vst.msk [vmem:[%s266 + $0x540] sm:$0xff] %vm2802, %v4518
          %4775 = vst.msk [vmem:[%s266 + $0x548] sm:$0xff] %vm2802, %v4519
          %4776 = vst.msk [vmem:[%s266 + $0x550] sm:$0xff] %vm2802, %v4520
          %4777 = vst.msk [vmem:[%s266 + $0x558] sm:$0xff] %vm2802, %v4521
          %4778 = vst.msk [vmem:[%s266 + $0x560] sm:$0xff] %vm2802, %v4522
          %4779 = vst.msk [vmem:[%s266 + $0x568] sm:$0xff] %vm2802, %v4523
          %4780 = vst.msk [vmem:[%s266 + $0x570] sm:$0xff] %vm2802, %v4524
          %4781 = vst.msk [vmem:[%s266 + $0x578] sm:$0xff] %vm2802, %v4525
          %4782 = vst.msk [vmem:[%s266 + $0x580] sm:$0xff] %vm2802, %v4526
          %4783 = vst.msk [vmem:[%s266 + $0x588] sm:$0xff] %vm2802, %v4527
          %4784 = vst.msk [vmem:[%s266 + $0x590] sm:$0xff] %vm2802, %v4528
          %4785 = vst.msk [vmem:[%s266 + $0x598] sm:$0xff] %vm2802, %v4529
          %4786 = vst.msk [vmem:[%s266 + $0x5a0] sm:$0xff] %vm2802, %v4530
          %4787 = vst.msk [vmem:[%s266 + $0x5a8] sm:$0xff] %vm2802, %v4531
          %4788 = vst.msk [vmem:[%s266 + $0x5b0] sm:$0xff] %vm2802, %v4532
          %4789 = vst.msk [vmem:[%s266 + $0x5b8] sm:$0xff] %vm2802, %v4533
          %4790 = vst.msk [vmem:[%s266 + $0x5c0] sm:$0xff] %vm2802, %v4534
          %4791 = vst.msk [vmem:[%s266 + $0x5c8] sm:$0xff] %vm2802, %v4535
          %4792 = vst.msk [vmem:[%s266 + $0x5d0] sm:$0xff] %vm2802, %v4536
          %4793 = vst.msk [vmem:[%s266 + $0x5d8] sm:$0xff] %vm2802, %v4537
          %4794 = vst.msk [vmem:[%s266 + $0x5e0] sm:$0xff] %vm2802, %v4538
          %4795 = vst.msk [vmem:[%s266 + $0x5e8] sm:$0xff] %vm2802, %v4539
          %4796 = vst.msk [vmem:[%s266 + $0x5f0] sm:$0xff] %vm2802, %v4540
          %4797 = vst.msk [vmem:[%s266 + $0x5f8] sm:$0xff] %vm2802, %v4541
          %4798 = vst.msk [vmem:[%s266 + $0x600] sm:$0xff] %vm2802, %v4542
          %4799 = vst.msk [vmem:[%s266 + $0x608] sm:$0xff] %vm2802, %v4543
          %4800 = vst.msk [vmem:[%s266 + $0x610] sm:$0xff] %vm2802, %v4544
          %4801 = vst.msk [vmem:[%s266 + $0x618] sm:$0xff] %vm2802, %v4545
          %4802 = vst.msk [vmem:[%s266 + $0x620] sm:$0xff] %vm2802, %v4546
          %4803 = vst.msk [vmem:[%s266 + $0x628] sm:$0xff] %vm2802, %v4547
          %4804 = vst.msk [vmem:[%s266 + $0x630] sm:$0xff] %vm2802, %v4548
          %4805 = vst.msk [vmem:[%s266 + $0x638] sm:$0xff] %vm2802, %v4549
          %4806 = vst.msk [vmem:[%s266 + $0x640] sm:$0xff] %vm2802, %v4550
          %4807 = vst.msk [vmem:[%s266 + $0x648] sm:$0xff] %vm2802, %v4551
          %4808 = vst.msk [vmem:[%s266 + $0x650] sm:$0xff] %vm2802, %v4552
          %4809 = vst.msk [vmem:[%s266 + $0x658] sm:$0xff] %vm2802, %v4553
          %4810 = vst.msk [vmem:[%s266 + $0x660] sm:$0xff] %vm2802, %v4554
          %4811 = vst.msk [vmem:[%s266 + $0x668] sm:$0xff] %vm2802, %v4555
          %4812 = vst.msk [vmem:[%s266 + $0x670] sm:$0xff] %vm2802, %v4556
          %4813 = vst.msk [vmem:[%s266 + $0x678] sm:$0xff] %vm2802, %v4557
          %4814 = vst.msk [vmem:[%s266 + $0x680] sm:$0xff] %vm2802, %v4558
          %4815 = vst.msk [vmem:[%s266 + $0x688] sm:$0xff] %vm2802, %v4559
          %4816 = vst.msk [vmem:[%s266 + $0x690] sm:$0xff] %vm2802, %v4560
          %4817 = vst.msk [vmem:[%s266 + $0x698] sm:$0xff] %vm2802, %v4561
          %4818 = vst.msk [vmem:[%s266 + $0x6a0] sm:$0xff] %vm2802, %v4562
          %4819 = vst.msk [vmem:[%s266 + $0x6a8] sm:$0xff] %vm2802, %v4563
          %4820 = vst.msk [vmem:[%s266 + $0x6b0] sm:$0xff] %vm2802, %v4564
          %4821 = vst.msk [vmem:[%s266 + $0x6b8] sm:$0xff] %vm2802, %v4565
          %4822 = vst.msk [vmem:[%s266 + $0x6c0] sm:$0xff] %vm2802, %v4566
          %4823 = vst.msk [vmem:[%s266 + $0x6c8] sm:$0xff] %vm2802, %v4567
          %4824 = vst.msk [vmem:[%s266 + $0x6d0] sm:$0xff] %vm2802, %v4568
          %4825 = vst.msk [vmem:[%s266 + $0x6d8] sm:$0xff] %vm2802, %v4569
          %4826 = vst.msk [vmem:[%s266 + $0x6e0] sm:$0xff] %vm2802, %v4570
          %4827 = vst.msk [vmem:[%s266 + $0x6e8] sm:$0xff] %vm2802, %v4571
          %4828 = vst.msk [vmem:[%s266 + $0x6f0] sm:$0xff] %vm2802, %v4572
          %4829 = vst.msk [vmem:[%s266 + $0x6f8] sm:$0xff] %vm2802, %v4573
          %4830 = vst.msk [vmem:[%s266 + $0x700] sm:$0xff] %vm2802, %v4574
          %4831 = vst.msk [vmem:[%s266 + $0x708] sm:$0xff] %vm2802, %v4575
          %4832 = vst.msk [vmem:[%s266 + $0x710] sm:$0xff] %vm2802, %v4576
          %4833 = vst.msk [vmem:[%s266 + $0x718] sm:$0xff] %vm2802, %v4577
          %4834 = vst.msk [vmem:[%s266 + $0x720] sm:$0xff] %vm2802, %v4578
          %4835 = vst.msk [vmem:[%s266 + $0x728] sm:$0xff] %vm2802, %v4579
          %4836 = vst.msk [vmem:[%s266 + $0x730] sm:$0xff] %vm2802, %v4580
          %4837 = vst.msk [vmem:[%s266 + $0x738] sm:$0xff] %vm2802, %v4581
          %4838 = vst.msk [vmem:[%s266 + $0x740] sm:$0xff] %vm2802, %v4582
          %4839 = vst.msk [vmem:[%s266 + $0x748] sm:$0xff] %vm2802, %v4583
          %4840 = vst.msk [vmem:[%s266 + $0x750] sm:$0xff] %vm2802, %v4584
          %4841 = vst.msk [vmem:[%s266 + $0x758] sm:$0xff] %vm2802, %v4585
          %4842 = vst.msk [vmem:[%s266 + $0x760] sm:$0xff] %vm2802, %v4586
          %4843 = vst.msk [vmem:[%s266 + $0x768] sm:$0xff] %vm2802, %v4587
          %4844 = vst.msk [vmem:[%s266 + $0x770] sm:$0xff] %vm2802, %v4588
          %4845 = vst.msk [vmem:[%s266 + $0x778] sm:$0xff] %vm2802, %v4589
          %4846 = vst.msk [vmem:[%s266 + $0x780] sm:$0xff] %vm2802, %v4590
          %4847 = vst.msk [vmem:[%s266 + $0x788] sm:$0xff] %vm2802, %v4591
          %4848 = vst.msk [vmem:[%s266 + $0x790] sm:$0xff] %vm2802, %v4592
          %4849 = vst.msk [vmem:[%s266 + $0x798] sm:$0xff] %vm2802, %v4593
          %4850 = vst.msk [vmem:[%s266 + $0x7a0] sm:$0xff] %vm2802, %v4594
          %4851 = vst.msk [vmem:[%s266 + $0x7a8] sm:$0xff] %vm2802, %v4595
          %4852 = vst.msk [vmem:[%s266 + $0x7b0] sm:$0xff] %vm2802, %v4596
          %4853 = vst.msk [vmem:[%s266 + $0x7b8] sm:$0xff] %vm2802, %v4597
          %4854 = vst.msk [vmem:[%s266 + $0x7c0] sm:$0xff] %vm2802, %v4598
          %4855 = vst.msk [vmem:[%s266 + $0x7c8] sm:$0xff] %vm2802, %v4599
          %4856 = vst.msk [vmem:[%s266 + $0x7d0] sm:$0xff] %vm2802, %v4600
          %4857 = vst.msk [vmem:[%s266 + $0x7d8] sm:$0xff] %vm2802, %v4601
          %4858 = vst.msk [vmem:[%s266 + $0x7e0] sm:$0xff] %vm2802, %v4602
          %4859 = vst.msk [vmem:[%s266 + $0x7e8] sm:$0xff] %vm2802, %v4603
          %4860 = vst.msk [vmem:[%s266 + $0x7f0] sm:$0xff] %vm2802, %v4604
          %4861 = vst.msk [vmem:[%s266 + $0x7f8] sm:$0xff] %vm2802, %v4605
        $region44: #{conv3d.1} parent=35 // pred_fallthru
          _
        %s4862 = sand.u32 %s155, 1
        %s4863 = scalar_lea.sflag [#allocation4], %s4862
        %s4864 = sand.u32 %s155, 1
        %s4865 = smul.addr %s4864, 2048
        %s4866 = scalar_lea.vmem [#allocation3], %s4865
        // Predicated region
        $region45: #{conv3d.1} parent=35 // pred_check
          %p4867 = pneg %p165
        $region46: #{conv3d.1} parent=35 // pred_check_branch
          %4869 = sbr.rel (%p4867) target = $region48
        $region47: #{conv3d.1} parent=35 // pred_region
          %s4870 = smul.u32 256, %s23
          %4872 = vsyncadd %s4863, 0
          %s4873 = sadd.s32 %s24, %s4870
          %s4874 = smul.addr %s4873, 8
          %s4875 = scalar_lea.hbm %s4, %s4874
          %s4876 = sshll.u32 %s4866, 4
          %s4877 = int_to_ptr.vmem [resolvable:$true] %s4876
          %s4878 = sshll.u32 %s4875, 4
          %s4879 = int_to_ptr.hbm [resolvable:$true] %s4878
          %4884 = dma.vmem_to_hbm [thread:$0]  %s4877, 32768, %s4879, %s4863, 128, 128, 8
        $region48: #{conv3d.1} parent=35 // pred_fallthru
          _
      $region36: #{conv3d.1} parent=5 // pred_fallthru
        _
      %p4885 = scmp.le.s32.totalorder 2, %s13
      // Predicated region
      $region49: #{conv3d.1} parent=5 // pred_check
        %p4886 = pneg %p4885
      $region50: #{conv3d.1} parent=5 // pred_check_branch
        %4888 = sbr.rel (%p4886) target = $region52
      $region51: #{conv3d.1} parent=5 // pred_region
        %s4889 = ssub.s32 %s13, 2
        // Predicated region
        $region53: #{conv3d.1} parent=51 // pred_check
          %p4890 = pneg %p171
        $region54: #{conv3d.1} parent=51 // pred_check_branch
          %4892 = sbr.rel (%p4890) target = $region56
        $region55: #{conv3d.1} parent=51 // pred_region
          %s4893 = sand.u32 %s156, 1
          %s4894 = scalar_lea.sflag [#allocation4], %s4893
          %s4895 = sand.u32 %s156, 1
          %s4896 = smul.addr %s4895, 2048
          %s4897 = scalar_lea.vmem [#allocation3], %s4896
          %4899 = dma.done %s4894, 32768
        $region56: #{conv3d.1} parent=51 // pred_fallthru
          _
      $region52: #{conv3d.1} parent=5 // pred_fallthru
        _
    $region6: #{conv3d.1} parent=1 // loop_footer
      %s17 = sadd.s32 1, %s13
    $region7: #{conv3d.1} parent=1 // loop_footer_branch
      %12 = sbr.rel target = $region3
    $region8: #{conv3d.1} parent=1 // loop_exit
      _
    %4900 = vsyncpa [#allocation4], 1
    %s4901 = scalar_lea.sflag [#allocation4], 1
    %4902 = vsyncpa %s4901, 1

</llo_original>
